<compile_context>
chip_gen: v7x
topology: tpu7x:2x2x1
jax: 0.10.0
libtpu: 0.0.40
codegen_flags: <defaults>
</compile_context>

<pallas_src>
import functools

import numpy as np
import jax
import jax.numpy as jnp
from jax.experimental import pallas as pl
from jax.experimental.pallas import tpu as pltpu

LN_EPS = 1e-6


def _round_up(x, m):
    return (x + m - 1) // m * m


def _layernorm(x, gamma, beta):
    # biased variance + eps inside sqrt, matches torch.nn.LayerNorm(eps=1e-6)
    mu = jnp.mean(x, axis=-1, keepdims=True)
    var = jnp.mean(jnp.square(x - mu), axis=-1, keepdims=True)
    return (x - mu) * jax.lax.rsqrt(var + LN_EPS) * gamma + beta


# ----------------------------------------------------------------------------
# Fused decoder-stack kernel (one grid step == one batch element)
# ----------------------------------------------------------------------------

def decoder_stack_kernel(
        x_ref, pos_ref, mask_ref, enc_ref, encmask_ref, hsel_s_ref, hsel_c_ref,
        g0_ref, b0_ref,
        swqkv_ref, swo_ref, sg_ref, sb_ref,
        cwq_ref, cwkv_ref, cwo_ref, cg_ref, cb_ref,
        w1_ref, b1_ref, w2_ref, b2_ref, fg_ref, fb_ref,
        out_ref, *, n_layers, n_head, d_k):
    d_model = n_head * d_k
    inv_temp = 1.0 / float(d_k) ** 0.5

    # positional add + initial LayerNorm (dropout == identity)
    x = x_ref[0] + pos_ref[...]                       # (Lq, D) f32
    x = _layernorm(x, g0_ref[...], b0_ref[...])

    enc = enc_ref[0]                                  # (Sk, D) f32
    enc_bf = enc.astype(jnp.bfloat16)                 # reused by every cross-attn

    # block-diagonal head selectors (precomputed wrapper-side, DMA'd once)
    hsel_s = hsel_s_ref[...]                          # (H*Lq, D) f32 0/1
    hsel_c = hsel_c_ref[...]                          # (H*Sk, D) f32 0/1
    hsel_s_bf = hsel_s.astype(jnp.bfloat16)
    hsel_c_bf = hsel_c.astype(jnp.bfloat16)

    # additive masks (0 keep / -1e9 drop); self mask tiled per head along lanes
    slf_add = jnp.tile(mask_ref[0], (1, n_head))      # (Lq, H*Lq) f32
    enc_add = encmask_ref[...]                        # (1, H*Sk)  f32

    def attn_core(q, k, v, hsel, hsel_bf, add_mask):
        # block-diagonal head layout -> all heads in single 2-D matmuls
        k_rows = (jnp.concatenate([k] * n_head, axis=0) * hsel).astype(jnp.bfloat16)
        v_rows = (jnp.concatenate([v] * n_head, axis=0) * hsel).astype(jnp.bfloat16)
        s = jax.lax.dot_general(q.astype(jnp.bfloat16), k_rows,
                                (((1,), (1,)), ((), ())),
                                preferred_element_type=jnp.float32)   # (Lq, H*Lk)
        s = s + add_mask
        s = s - jnp.max(s, axis=-1, keepdims=True)
        e = jnp.exp(s).astype(jnp.bfloat16)
        # unnormalized per-head output and per-head denominator (broadcast to the
        # head's d_k output columns) in one matmul each — no (H*Lk)^2 constant.
        o_un = jnp.dot(e, v_rows, preferred_element_type=jnp.float32)    # (Lq, D)
        den = jnp.dot(e, hsel_bf, preferred_element_type=jnp.float32)    # (Lq, D)
        den = jnp.maximum(den, 1e-20)        # guard: underflowed head -> 0, not NaN
        return o_un * pl.reciprocal(den, approx=True)

    def self_attn(xi, li):
        qkv = jnp.dot(xi.astype(jnp.bfloat16), swqkv_ref[li],
                      preferred_element_type=jnp.float32)                # (Lq, 3D)
        q = qkv[:, :d_model] * inv_temp
        k = qkv[:, d_model:2 * d_model]
        v = qkv[:, 2 * d_model:]
        o = attn_core(q, k, v, hsel_s, hsel_s_bf, slf_add)
        o = jnp.dot(o.astype(jnp.bfloat16), swo_ref[li],
                    preferred_element_type=jnp.float32)
        return _layernorm(o + xi, sg_ref[li], sb_ref[li])

    def cross_attn(xi, li):
        q = jnp.dot(xi.astype(jnp.bfloat16), cwq_ref[li],
                    preferred_element_type=jnp.float32) * inv_temp       # (Lq, D)
        kv = jnp.dot(enc_bf, cwkv_ref[li],
                     preferred_element_type=jnp.float32)                 # (Sk, 2D)
        k = kv[:, :d_model]
        v = kv[:, d_model:]
        o = attn_core(q, k, v, hsel_c, hsel_c_bf, enc_add)
        o = jnp.dot(o.astype(jnp.bfloat16), cwo_ref[li],
                    preferred_element_type=jnp.float32)
        return _layernorm(o + xi, cg_ref[li], cb_ref[li])

    def ffn(xi, li):
        h = jnp.dot(xi.astype(jnp.bfloat16), w1_ref[li],
                    preferred_element_type=jnp.float32) + b1_ref[li]
        h = jnp.maximum(h, 0.0)
        y = jnp.dot(h.astype(jnp.bfloat16), w2_ref[li],
                    preferred_element_type=jnp.float32) + b2_ref[li]
        return _layernorm(y + xi, fg_ref[li], fb_ref[li])

    for li in range(n_layers):
        x = self_attn(x, li)
        x = cross_attn(x, li)
        x = ffn(x, li)

    out_ref[0] = x


# ----------------------------------------------------------------------------
# Wrapper: padding, glue ops, pallas_call
# ----------------------------------------------------------------------------

def _decoder_forward_impl(params, trg_seq, trg_mask, enc_output, n_head):
    B, T = trg_seq.shape
    D = params["emb"].shape[1]
    L = T + 1
    Lpad = _round_up(L, 8)
    S = enc_output.shape[1]
    Spad = _round_up(S, 8)
    NL = params["slf_wqkv"].shape[0]
    DI = params["ffn_w1"].shape[2]
    d_k = D // n_head
    assert Lpad <= params["pos_table"].shape[0]

    # glue (outside kernel): embedding gather, zero-row concat, sublane padding
    token_embed = params["emb"][trg_seq]                             # (B, T, D)
    x = jnp.concatenate([jnp.zeros((B, 1, D), jnp.float32), token_embed], axis=1)
    x = jnp.pad(x, ((0, 0), (0, Lpad - L), (0, 0)))                  # (B, Lpad, D)
    pos = params["pos_table"][:Lpad]                                 # (Lpad, D)
    enc = jnp.pad(enc_output, ((0, 0), (0, Spad - S), (0, 0)))       # (B, Spad, D)

    # additive masks (0 keep / -1e9 drop), built once wrapper-side
    keep = jnp.pad(trg_mask.astype(jnp.float32),
                   ((0, 0), (0, Lpad - L), (0, Lpad - L)))           # pad rows/cols -> drop
    mask_add = (keep - 1.0) * 1e9                                    # (B, Lpad, Lpad)
    # cross-attention: src_mask is None in the reference module, so only the
    # wrapper-side key padding needs masking; already tiled per head along lanes.
    kv_ok = (jnp.arange(Spad) < S).astype(jnp.float32)[None, :]
    enc_add = jnp.tile((kv_ok - 1.0) * 1e9, (1, n_head))             # (1, H*Spad)

    # block-diagonal head selectors (static constants)
    def head_select(lk):
        r = np.arange(n_head * lk)[:, None] // lk
        c = np.arange(D)[None, :] // d_k
        return jnp.asarray((r == c).astype(np.float32))
    hsel_s = head_select(Lpad)                                       # (H*Lpad, D)
    hsel_c = head_select(Spad)                                       # (H*Spad, D)

    kernel = functools.partial(decoder_stack_kernel, n_layers=NL,
                               n_head=n_head, d_k=d_k)

    one = pl.Buffered(1)      # constant-index inputs: fetched once, single-buffered

    def rep2(shape):
        return pl.BlockSpec(shape, lambda b: (0, 0), pipeline_mode=one)

    def rep3(shape):
        return pl.BlockSpec(shape, lambda b: (0, 0, 0), pipeline_mode=one)

    out = pl.pallas_call(
        kernel,
        out_shape=jax.ShapeDtypeStruct((B, Lpad, D), jnp.float32),
        grid=(B,),
        in_specs=[
            pl.BlockSpec((1, Lpad, D), lambda b: (b, 0, 0)),         # x
            rep2((Lpad, D)),                                         # pos table
            pl.BlockSpec((1, Lpad, Lpad), lambda b: (b, 0, 0)),      # additive slf mask
            pl.BlockSpec((1, Spad, D), lambda b: (b, 0, 0)),         # enc output
            rep2((1, n_head * Spad)),                                # additive enc key mask
            rep2((n_head * Lpad, D)),                                # hsel (self)
            rep2((n_head * Spad, D)),                                # hsel (cross)
            rep2((1, D)), rep2((1, D)),                              # ln0 g/b
            rep3((NL, D, 3 * D)), rep3((NL, D, D)),                  # slf fused qkv, wo
            rep3((NL, 1, D)), rep3((NL, 1, D)),                      # slf ln g/b
            rep3((NL, D, D)), rep3((NL, D, 2 * D)),                  # enc wq, fused kv
            rep3((NL, D, D)),                                        # enc wo
            rep3((NL, 1, D)), rep3((NL, 1, D)),                      # enc ln g/b
            rep3((NL, D, DI)), rep3((NL, 1, DI)),                    # ffn w1, b1
            rep3((NL, DI, D)), rep3((NL, 1, D)),                     # ffn w2, b2
            rep3((NL, 1, D)), rep3((NL, 1, D)),                      # ffn ln g/b
        ],
        out_specs=pl.BlockSpec((1, Lpad, D), lambda b: (b, 0, 0)),
        input_output_aliases={0: 0},                                 # x is dead after
        compiler_params=pltpu.CompilerParams(
            dimension_semantics=("parallel",)),
    )(x, pos, mask_add, enc, enc_add, hsel_s, hsel_c,
      params["ln0_g"], params["ln0_b"],
      params["slf_wqkv"], params["slf_wo"], params["slf_ln_g"], params["slf_ln_b"],
      params["enc_wq"], params["enc_wkv"], params["enc_wo"],
      params["enc_ln_g"], params["enc_ln_b"],
      params["ffn_w1"], params["ffn_b1"], params["ffn_w2"], params["ffn_b2"],
      params["ffn_ln_g"], params["ffn_ln_b"])

    return out[:, :L, :]


decoder_forward = jax.jit(_decoder_forward_impl, static_argnums=(4,))


# ----------------------------------------------------------------------------
# Parameter construction (deterministic, synthetic)
# ----------------------------------------------------------------------------

def sinusoid_pos_table(n_position, d_hid):
    pos = np.arange(n_position)[:, None].astype(np.float64)
    hid = np.arange(d_hid)[None, :]
    angle = pos / np.power(10000, 2 * (hid // 2) / d_hid)
    table = np.array(angle)
    table[:, 0::2] = np.sin(table[:, 0::2])
    table[:, 1::2] = np.cos(table[:, 1::2])
    return jnp.asarray(table, dtype=jnp.float32)                     # (n_position, d_hid)


def init_params(key, n_trg_vocab, d_model, d_inner, n_layers, n_position):
    def dense(k, fi, fo):
        return jax.random.normal(k, (fi, fo), jnp.float32) / jnp.sqrt(float(fi))

    keys = jax.random.split(key, 1 + n_layers)
    params = {
        "emb": jax.random.normal(keys[0], (n_trg_vocab, d_model), jnp.float32) * 0.02,
        "pos_table": sinusoid_pos_table(n_position, d_model),
        "ln0_g": jnp.ones((1, d_model), jnp.float32),
        "ln0_b": jnp.zeros((1, d_model), jnp.float32),
    }

    names = ["slf_wqkv", "slf_wo", "slf_ln_g", "slf_ln_b",
             "enc_wq", "enc_wkv", "enc_wo", "enc_ln_g", "enc_ln_b",
             "ffn_w1", "ffn_b1", "ffn_w2", "ffn_b2", "ffn_ln_g", "ffn_ln_b"]
    acc = {n: [] for n in names}
    for li in range(n_layers):
        lk = jax.random.split(keys[1 + li], 10)
        # self-attention: fused (D, 3D) Q|K|V projection + output projection
        acc["slf_wqkv"].append(jnp.concatenate(
            [dense(lk[0], d_model, d_model), dense(lk[1], d_model, d_model),
             dense(lk[2], d_model, d_model)], axis=1))
        acc["slf_wo"].append(dense(lk[3], d_model, d_model))
        acc["slf_ln_g"].append(jnp.ones((1, d_model), jnp.float32))
        acc["slf_ln_b"].append(jnp.zeros((1, d_model), jnp.float32))
        # cross-attention: Q from decoder activation, fused (D, 2D) K|V from encoder
        acc["enc_wq"].append(dense(lk[4], d_model, d_model))
        acc["enc_wkv"].append(jnp.concatenate(
            [dense(lk[5], d_model, d_model), dense(lk[6], d_model, d_model)], axis=1))
        acc["enc_wo"].append(dense(lk[7], d_model, d_model))
        acc["enc_ln_g"].append(jnp.ones((1, d_model), jnp.float32))
        acc["enc_ln_b"].append(jnp.zeros((1, d_model), jnp.float32))
        # FFN
        acc["ffn_w1"].append(dense(lk[8], d_model, d_inner))
        acc["ffn_b1"].append(jnp.zeros((1, d_inner), jnp.float32))
        acc["ffn_w2"].append(dense(lk[9], d_inner, d_model))
        acc["ffn_b2"].append(jnp.zeros((1, d_model), jnp.float32))
        acc["ffn_ln_g"].append(jnp.ones((1, d_model), jnp.float32))
        acc["ffn_ln_b"].append(jnp.zeros((1, d_model), jnp.float32))

    mxu_weights = {"slf_wqkv", "slf_wo", "enc_wq", "enc_wkv", "enc_wo",
                   "ffn_w1", "ffn_w2"}
    for name, lst in acc.items():
        stacked = jnp.stack(lst, axis=0)                             # (NL, ...)
        if name in mxu_weights:
            stacked = stacked.astype(jnp.bfloat16)                   # bf16 MXU operands
        params[name] = stacked
    return params


# ----------------------------------------------------------------------------
if __name__ == "__main__":
    B, T, S = 2, 8, 10
    n_trg_vocab, d_model, d_inner = 50, 32, 64
    n_layers, n_head, n_position = 2, 4, 200

    key = jax.random.PRNGKey(0)
    kp, ks, ke = jax.random.split(key, 3)

    params = init_params(kp, n_trg_vocab, d_model, d_inner, n_layers, n_position)

    trg_seq = jax.random.randint(ks, (B, T), 0, n_trg_vocab, dtype=jnp.int32)
    enc_output = jax.random.normal(ke, (B, S, d_model), jnp.float32)
    # causal self-attention mask over the length-(T+1) decoder sequence
    trg_mask = jnp.broadcast_to(
        jnp.tril(jnp.ones((T + 1, T + 1), jnp.float32)), (B, T + 1, T + 1)
    )

    out = decoder_forward(params, trg_seq, trg_mask, enc_output, n_head)
    out = jax.block_until_ready(out)
    assert out.shape == (B, T + 1, d_model)
    assert bool(jnp.all(jnp.isfinite(out)))
    print("KERNEL_OK")
</pallas_src>

<mosaic_0001>
module attributes {stable_mosaic.version = 11 : i64} {
  func.func @decoder_stack_kernel(%arg0: i32, %arg1: memref<1x16x32xf32, #tpu.memory_space<vmem>>, %arg2: memref<16x32xf32, #tpu.memory_space<vmem>>, %arg3: memref<1x16x16xf32, #tpu.memory_space<vmem>>, %arg4: memref<1x16x32xf32, #tpu.memory_space<vmem>>, %arg5: memref<1x64xf32, #tpu.memory_space<vmem>>, %arg6: memref<64x32xf32, #tpu.memory_space<vmem>>, %arg7: memref<64x32xf32, #tpu.memory_space<vmem>>, %arg8: memref<1x32xf32, #tpu.memory_space<vmem>>, %arg9: memref<1x32xf32, #tpu.memory_space<vmem>>, %arg10: memref<2x32x96xbf16, #tpu.memory_space<vmem>>, %arg11: memref<2x32x32xbf16, #tpu.memory_space<vmem>>, %arg12: memref<2x1x32xf32, #tpu.memory_space<vmem>>, %arg13: memref<2x1x32xf32, #tpu.memory_space<vmem>>, %arg14: memref<2x32x32xbf16, #tpu.memory_space<vmem>>, %arg15: memref<2x32x64xbf16, #tpu.memory_space<vmem>>, %arg16: memref<2x32x32xbf16, #tpu.memory_space<vmem>>, %arg17: memref<2x1x32xf32, #tpu.memory_space<vmem>>, %arg18: memref<2x1x32xf32, #tpu.memory_space<vmem>>, %arg19: memref<2x32x64xbf16, #tpu.memory_space<vmem>>, %arg20: memref<2x1x64xf32, #tpu.memory_space<vmem>>, %arg21: memref<2x64x32xbf16, #tpu.memory_space<vmem>>, %arg22: memref<2x1x32xf32, #tpu.memory_space<vmem>>, %arg23: memref<2x1x32xf32, #tpu.memory_space<vmem>>, %arg24: memref<2x1x32xf32, #tpu.memory_space<vmem>>, %arg25: memref<1x16x32xf32, #tpu.memory_space<vmem>>) attributes {dimension_semantics = [#tpu.dimension_semantics<parallel>], iteration_bounds = array<i64: 2>, scalar_prefetch = 0 : i64, scratch_operands = 0 : i64, tpu.core_type = #tpu.core_type<tc>, window_params = [{transform_indices = @transform_0, window_bounds = array<i64: 1, 16, 32>}, {pipeline_mode = #tpu.pipeline_mode<synchronous>, transform_indices = @transform_1, window_bounds = array<i64: 16, 32>}, {transform_indices = @transform_2, window_bounds = array<i64: 1, 16, 16>}, {transform_indices = @transform_3, window_bounds = array<i64: 1, 16, 32>}, {pipeline_mode = #tpu.pipeline_mode<synchronous>, transform_indices = @transform_4, window_bounds = array<i64: 1, 64>}, {pipeline_mode = #tpu.pipeline_mode<synchronous>, transform_indices = @transform_5, window_bounds = array<i64: 64, 32>}, {pipeline_mode = #tpu.pipeline_mode<synchronous>, transform_indices = @transform_6, window_bounds = array<i64: 64, 32>}, {pipeline_mode = #tpu.pipeline_mode<synchronous>, transform_indices = @transform_7, window_bounds = array<i64: 1, 32>}, {pipeline_mode = #tpu.pipeline_mode<synchronous>, transform_indices = @transform_8, window_bounds = array<i64: 1, 32>}, {pipeline_mode = #tpu.pipeline_mode<synchronous>, transform_indices = @transform_9, window_bounds = array<i64: 2, 32, 96>}, {pipeline_mode = #tpu.pipeline_mode<synchronous>, transform_indices = @transform_10, window_bounds = array<i64: 2, 32, 32>}, {pipeline_mode = #tpu.pipeline_mode<synchronous>, transform_indices = @transform_11, window_bounds = array<i64: 2, 1, 32>}, {pipeline_mode = #tpu.pipeline_mode<synchronous>, transform_indices = @transform_12, window_bounds = array<i64: 2, 1, 32>}, {pipeline_mode = #tpu.pipeline_mode<synchronous>, transform_indices = @transform_13, window_bounds = array<i64: 2, 32, 32>}, {pipeline_mode = #tpu.pipeline_mode<synchronous>, transform_indices = @transform_14, window_bounds = array<i64: 2, 32, 64>}, {pipeline_mode = #tpu.pipeline_mode<synchronous>, transform_indices = @transform_15, window_bounds = array<i64: 2, 32, 32>}, {pipeline_mode = #tpu.pipeline_mode<synchronous>, transform_indices = @transform_16, window_bounds = array<i64: 2, 1, 32>}, {pipeline_mode = #tpu.pipeline_mode<synchronous>, transform_indices = @transform_17, window_bounds = array<i64: 2, 1, 32>}, {pipeline_mode = #tpu.pipeline_mode<synchronous>, transform_indices = @transform_18, window_bounds = array<i64: 2, 32, 64>}, {pipeline_mode = #tpu.pipeline_mode<synchronous>, transform_indices = @transform_19, window_bounds = array<i64: 2, 1, 64>}, {pipeline_mode = #tpu.pipeline_mode<synchronous>, transform_indices = @transform_20, window_bounds = array<i64: 2, 64, 32>}, {pipeline_mode = #tpu.pipeline_mode<synchronous>, transform_indices = @transform_21, window_bounds = array<i64: 2, 1, 32>}, {pipeline_mode = #tpu.pipeline_mode<synchronous>, transform_indices = @transform_22, window_bounds = array<i64: 2, 1, 32>}, {pipeline_mode = #tpu.pipeline_mode<synchronous>, transform_indices = @transform_23, window_bounds = array<i64: 2, 1, 32>}, {transform_indices = @transform_24, window_bounds = array<i64: 1, 16, 32>}]} {
    %c0 = arith.constant 0 : index
    %c0_0 = arith.constant 0 : index
    %c0_1 = arith.constant 0 : index
    %0 = vector.load %arg1[%c0, %c0_0, %c0_1] : memref<1x16x32xf32, #tpu.memory_space<vmem>>, vector<1x16x32xf32>
    %1 = vector.shape_cast %0 : vector<1x16x32xf32> to vector<16x32xf32>
    %c0_2 = arith.constant 0 : index
    %c0_3 = arith.constant 0 : index
    %2 = vector.load %arg2[%c0_2, %c0_3] : memref<16x32xf32, #tpu.memory_space<vmem>>, vector<16x32xf32>
    %3 = arith.addf %1, %2 : vector<16x32xf32>
    %c0_4 = arith.constant 0 : index
    %c0_5 = arith.constant 0 : index
    %4 = vector.load %arg8[%c0_4, %c0_5] : memref<1x32xf32, #tpu.memory_space<vmem>>, vector<1x32xf32>
    %c0_6 = arith.constant 0 : index
    %c0_7 = arith.constant 0 : index
    %5 = vector.load %arg9[%c0_6, %c0_7] : memref<1x32xf32, #tpu.memory_space<vmem>>, vector<1x32xf32>
    %cst = arith.constant dense<0.000000e+00> : vector<16xf32>
    %6 = vector.multi_reduction <add>, %3, %cst [1] : vector<16x32xf32> to vector<16xf32>
    %7 = vector.shape_cast %6 : vector<16xf32> to vector<16x1xf32>
    %cst_8 = arith.constant 3.200000e+01 : f32
    %8 = vector.broadcast %cst_8 : f32 to vector<16x1xf32>
    %9 = arith.divf %7, %8 : vector<16x1xf32>
    %10 = vector.broadcast %9 : vector<16x1xf32> to vector<16x32xf32>
    %11 = arith.subf %3, %10 : vector<16x32xf32>
    %12 = arith.mulf %11, %11 : vector<16x32xf32>
    %cst_9 = arith.constant dense<0.000000e+00> : vector<16xf32>
    %13 = vector.multi_reduction <add>, %12, %cst_9 [1] : vector<16x32xf32> to vector<16xf32>
    %14 = vector.shape_cast %13 : vector<16xf32> to vector<16x1xf32>
    %cst_10 = arith.constant 3.200000e+01 : f32
    %15 = vector.broadcast %cst_10 : f32 to vector<16x1xf32>
    %16 = arith.divf %14, %15 : vector<16x1xf32>
    %17 = vector.broadcast %9 : vector<16x1xf32> to vector<16x32xf32>
    %18 = arith.subf %3, %17 : vector<16x32xf32>
    %cst_11 = arith.constant 9.99999997E-7 : f32
    %19 = vector.broadcast %cst_11 : f32 to vector<16x1xf32>
    %20 = arith.addf %16, %19 : vector<16x1xf32>
    %21 = math.rsqrt %20 : vector<16x1xf32>
    %22 = vector.broadcast %21 : vector<16x1xf32> to vector<16x32xf32>
    %23 = arith.mulf %18, %22 : vector<16x32xf32>
    %24 = vector.broadcast %4 : vector<1x32xf32> to vector<16x32xf32>
    %25 = arith.mulf %23, %24 : vector<16x32xf32>
    %26 = vector.broadcast %5 : vector<1x32xf32> to vector<16x32xf32>
    %27 = arith.addf %25, %26 : vector<16x32xf32>
    %c0_12 = arith.constant 0 : index
    %c0_13 = arith.constant 0 : index
    %c0_14 = arith.constant 0 : index
    %28 = vector.load %arg4[%c0_12, %c0_13, %c0_14] : memref<1x16x32xf32, #tpu.memory_space<vmem>>, vector<1x16x32xf32>
    %29 = vector.shape_cast %28 : vector<1x16x32xf32> to vector<16x32xf32>
    %30 = arith.truncf %29 : vector<16x32xf32> to vector<16x32xbf16>
    %c0_15 = arith.constant 0 : index
    %c0_16 = arith.constant 0 : index
    %31 = vector.load %arg6[%c0_15, %c0_16] : memref<64x32xf32, #tpu.memory_space<vmem>>, vector<64x32xf32>
    %c0_17 = arith.constant 0 : index
    %c0_18 = arith.constant 0 : index
    %32 = vector.load %arg7[%c0_17, %c0_18] : memref<64x32xf32, #tpu.memory_space<vmem>>, vector<64x32xf32>
    %33 = arith.truncf %31 : vector<64x32xf32> to vector<64x32xbf16>
    %34 = arith.truncf %32 : vector<64x32xf32> to vector<64x32xbf16>
    %c0_19 = arith.constant 0 : index
    %c0_20 = arith.constant 0 : index
    %c0_21 = arith.constant 0 : index
    %35 = vector.load %arg3[%c0_19, %c0_20, %c0_21] : memref<1x16x16xf32, #tpu.memory_space<vmem>>, vector<1x16x16xf32>
    %36 = vector.shape_cast %35 : vector<1x16x16xf32> to vector<16x16xf32>
    %37 = tpu.concatenate %36, %36, %36, %36 in 1 : vector<16x16xf32>, vector<16x16xf32>, vector<16x16xf32>, vector<16x16xf32> -> vector<16x64xf32>
    %c0_22 = arith.constant 0 : index
    %c0_23 = arith.constant 0 : index
    %38 = vector.load %arg5[%c0_22, %c0_23] : memref<1x64xf32, #tpu.memory_space<vmem>>, vector<1x64xf32>
    %39 = arith.truncf %27 : vector<16x32xf32> to vector<16x32xbf16>
    %c0_24 = arith.constant 0 : index
    %c0_25 = arith.constant 0 : index
    %c0_26 = arith.constant 0 : index
    %40 = vector.load %arg10[%c0_24, %c0_25, %c0_26] : memref<2x32x96xbf16, #tpu.memory_space<vmem>>, vector<1x32x96xbf16>
    %41 = vector.shape_cast %40 : vector<1x32x96xbf16> to vector<32x96xbf16>
    %cst_27 = arith.constant dense<0.000000e+00> : vector<16x96xf32>
    %42 = tpu.matmul %39, %41, %cst_27 {dimension_numbers = #tpu.dot_dimension_numbers<[1], [0], [0], [1], [0, 0, 1, 1], [], []>} : vector<16x32xbf16>, vector<32x96xbf16>, vector<16x96xf32> -> vector<16x96xf32>
    %43 = vector.extract_strided_slice %42 {offsets = [0, 0], sizes = [16, 32], strides = [1, 1]} : vector<16x96xf32> to vector<16x32xf32>
    %cst_28 = arith.constant 0.353553385 : f32
    %44 = vector.broadcast %cst_28 : f32 to vector<16x32xf32>
    %45 = arith.mulf %43, %44 : vector<16x32xf32>
    %46 = vector.extract_strided_slice %42 {offsets = [0, 32], sizes = [16, 32], strides = [1, 1]} : vector<16x96xf32> to vector<16x32xf32>
    %47 = vector.extract_strided_slice %42 {offsets = [0, 64], sizes = [16, 32], strides = [1, 1]} : vector<16x96xf32> to vector<16x32xf32>
    %48 = tpu.concatenate %46, %46, %46, %46 in 0 : vector<16x32xf32>, vector<16x32xf32>, vector<16x32xf32>, vector<16x32xf32> -> vector<64x32xf32>
    %49 = arith.mulf %48, %31 : vector<64x32xf32>
    %50 = arith.truncf %49 : vector<64x32xf32> to vector<64x32xbf16>
    %51 = tpu.concatenate %47, %47, %47, %47 in 0 : vector<16x32xf32>, vector<16x32xf32>, vector<16x32xf32>, vector<16x32xf32> -> vector<64x32xf32>
    %52 = arith.mulf %51, %31 : vector<64x32xf32>
    %53 = arith.truncf %52 : vector<64x32xf32> to vector<64x32xbf16>
    %54 = arith.truncf %45 : vector<16x32xf32> to vector<16x32xbf16>
    %cst_29 = arith.constant dense<0.000000e+00> : vector<16x64xf32>
    %55 = tpu.matmul %54, %50, %cst_29 {dimension_numbers = #tpu.dot_dimension_numbers<[1], [1], [0], [0], [0, 0, 1, 0], [], []>} : vector<16x32xbf16>, vector<64x32xbf16>, vector<16x64xf32> -> vector<16x64xf32>
    %56 = arith.addf %55, %37 : vector<16x64xf32>
    %cst_30 = arith.constant dense<0xFF800000> : vector<16xf32>
    %57 = vector.multi_reduction <maximumf>, %56, %cst_30 [1] : vector<16x64xf32> to vector<16xf32>
    %58 = vector.shape_cast %57 : vector<16xf32> to vector<16x1xf32>
    %59 = vector.broadcast %58 : vector<16x1xf32> to vector<16x64xf32>
    %60 = arith.subf %56, %59 : vector<16x64xf32>
    %61 = math.exp %60 : vector<16x64xf32>
    %62 = arith.truncf %61 : vector<16x64xf32> to vector<16x64xbf16>
    %cst_31 = arith.constant dense<0.000000e+00> : vector<16x32xf32>
    %63 = tpu.matmul %62, %53, %cst_31 {dimension_numbers = #tpu.dot_dimension_numbers<[1], [0], [0], [1], [0, 0, 1, 1], [], []>} : vector<16x64xbf16>, vector<64x32xbf16>, vector<16x32xf32> -> vector<16x32xf32>
    %cst_32 = arith.constant dense<0.000000e+00> : vector<16x32xf32>
    %64 = tpu.matmul %62, %33, %cst_32 {dimension_numbers = #tpu.dot_dimension_numbers<[1], [0], [0], [1], [0, 0, 1, 1], [], []>} : vector<16x64xbf16>, vector<64x32xbf16>, vector<16x32xf32> -> vector<16x32xf32>
    %cst_33 = arith.constant 9.99999968E-21 : f32
    %65 = vector.broadcast %cst_33 : f32 to vector<16x32xf32>
    %66 = arith.maximumf %64, %65 : vector<16x32xf32>
    %67 = tpu.reciprocal %66 {approx = true} : vector<16x32xf32> -> vector<16x32xf32>
    %68 = arith.mulf %63, %67 : vector<16x32xf32>
    %69 = arith.truncf %68 : vector<16x32xf32> to vector<16x32xbf16>
    %c0_34 = arith.constant 0 : index
    %c0_35 = arith.constant 0 : index
    %c0_36 = arith.constant 0 : index
    %70 = vector.load %arg11[%c0_34, %c0_35, %c0_36] : memref<2x32x32xbf16, #tpu.memory_space<vmem>>, vector<1x32x32xbf16>
    %71 = vector.shape_cast %70 : vector<1x32x32xbf16> to vector<32x32xbf16>
    %cst_37 = arith.constant dense<0.000000e+00> : vector<16x32xf32>
    %72 = tpu.matmul %69, %71, %cst_37 {dimension_numbers = #tpu.dot_dimension_numbers<[1], [0], [0], [1], [0, 0, 1, 1], [], []>} : vector<16x32xbf16>, vector<32x32xbf16>, vector<16x32xf32> -> vector<16x32xf32>
    %73 = arith.addf %72, %27 : vector<16x32xf32>
    %c0_38 = arith.constant 0 : index
    %c0_39 = arith.constant 0 : index
    %c0_40 = arith.constant 0 : index
    %74 = vector.load %arg12[%c0_38, %c0_39, %c0_40] : memref<2x1x32xf32, #tpu.memory_space<vmem>>, vector<1x1x32xf32>
    %75 = vector.shape_cast %74 : vector<1x1x32xf32> to vector<1x32xf32>
    %c0_41 = arith.constant 0 : index
    %c0_42 = arith.constant 0 : index
    %c0_43 = arith.constant 0 : index
    %76 = vector.load %arg13[%c0_41, %c0_42, %c0_43] : memref<2x1x32xf32, #tpu.memory_space<vmem>>, vector<1x1x32xf32>
    %77 = vector.shape_cast %76 : vector<1x1x32xf32> to vector<1x32xf32>
    %cst_44 = arith.constant dense<0.000000e+00> : vector<16xf32>
    %78 = vector.multi_reduction <add>, %73, %cst_44 [1] : vector<16x32xf32> to vector<16xf32>
    %79 = vector.shape_cast %78 : vector<16xf32> to vector<16x1xf32>
    %cst_45 = arith.constant 3.200000e+01 : f32
    %80 = vector.broadcast %cst_45 : f32 to vector<16x1xf32>
    %81 = arith.divf %79, %80 : vector<16x1xf32>
    %82 = vector.broadcast %81 : vector<16x1xf32> to vector<16x32xf32>
    %83 = arith.subf %73, %82 : vector<16x32xf32>
    %84 = arith.mulf %83, %83 : vector<16x32xf32>
    %cst_46 = arith.constant dense<0.000000e+00> : vector<16xf32>
    %85 = vector.multi_reduction <add>, %84, %cst_46 [1] : vector<16x32xf32> to vector<16xf32>
    %86 = vector.shape_cast %85 : vector<16xf32> to vector<16x1xf32>
    %cst_47 = arith.constant 3.200000e+01 : f32
    %87 = vector.broadcast %cst_47 : f32 to vector<16x1xf32>
    %88 = arith.divf %86, %87 : vector<16x1xf32>
    %89 = vector.broadcast %81 : vector<16x1xf32> to vector<16x32xf32>
    %90 = arith.subf %73, %89 : vector<16x32xf32>
    %cst_48 = arith.constant 9.99999997E-7 : f32
    %91 = vector.broadcast %cst_48 : f32 to vector<16x1xf32>
    %92 = arith.addf %88, %91 : vector<16x1xf32>
    %93 = math.rsqrt %92 : vector<16x1xf32>
    %94 = vector.broadcast %93 : vector<16x1xf32> to vector<16x32xf32>
    %95 = arith.mulf %90, %94 : vector<16x32xf32>
    %96 = vector.broadcast %75 : vector<1x32xf32> to vector<16x32xf32>
    %97 = arith.mulf %95, %96 : vector<16x32xf32>
    %98 = vector.broadcast %77 : vector<1x32xf32> to vector<16x32xf32>
    %99 = arith.addf %97, %98 : vector<16x32xf32>
    %100 = arith.truncf %99 : vector<16x32xf32> to vector<16x32xbf16>
    %c0_49 = arith.constant 0 : index
    %c0_50 = arith.constant 0 : index
    %c0_51 = arith.constant 0 : index
    %101 = vector.load %arg14[%c0_49, %c0_50, %c0_51] : memref<2x32x32xbf16, #tpu.memory_space<vmem>>, vector<1x32x32xbf16>
    %102 = vector.shape_cast %101 : vector<1x32x32xbf16> to vector<32x32xbf16>
    %cst_52 = arith.constant dense<0.000000e+00> : vector<16x32xf32>
    %103 = tpu.matmul %100, %102, %cst_52 {dimension_numbers = #tpu.dot_dimension_numbers<[1], [0], [0], [1], [0, 0, 1, 1], [], []>} : vector<16x32xbf16>, vector<32x32xbf16>, vector<16x32xf32> -> vector<16x32xf32>
    %cst_53 = arith.constant 0.353553385 : f32
    %104 = vector.broadcast %cst_53 : f32 to vector<16x32xf32>
    %105 = arith.mulf %103, %104 : vector<16x32xf32>
    %c0_54 = arith.constant 0 : index
    %c0_55 = arith.constant 0 : index
    %c0_56 = arith.constant 0 : index
    %106 = vector.load %arg15[%c0_54, %c0_55, %c0_56] : memref<2x32x64xbf16, #tpu.memory_space<vmem>>, vector<1x32x64xbf16>
    %107 = vector.shape_cast %106 : vector<1x32x64xbf16> to vector<32x64xbf16>
    %cst_57 = arith.constant dense<0.000000e+00> : vector<16x64xf32>
    %108 = tpu.matmul %30, %107, %cst_57 {dimension_numbers = #tpu.dot_dimension_numbers<[1], [0], [0], [1], [0, 0, 1, 1], [], []>} : vector<16x32xbf16>, vector<32x64xbf16>, vector<16x64xf32> -> vector<16x64xf32>
    %109 = vector.extract_strided_slice %108 {offsets = [0, 0], sizes = [16, 32], strides = [1, 1]} : vector<16x64xf32> to vector<16x32xf32>
    %110 = vector.extract_strided_slice %108 {offsets = [0, 32], sizes = [16, 32], strides = [1, 1]} : vector<16x64xf32> to vector<16x32xf32>
    %111 = tpu.concatenate %109, %109, %109, %109 in 0 : vector<16x32xf32>, vector<16x32xf32>, vector<16x32xf32>, vector<16x32xf32> -> vector<64x32xf32>
    %112 = arith.mulf %111, %32 : vector<64x32xf32>
    %113 = arith.truncf %112 : vector<64x32xf32> to vector<64x32xbf16>
    %114 = tpu.concatenate %110, %110, %110, %110 in 0 : vector<16x32xf32>, vector<16x32xf32>, vector<16x32xf32>, vector<16x32xf32> -> vector<64x32xf32>
    %115 = arith.mulf %114, %32 : vector<64x32xf32>
    %116 = arith.truncf %115 : vector<64x32xf32> to vector<64x32xbf16>
    %117 = arith.truncf %105 : vector<16x32xf32> to vector<16x32xbf16>
    %cst_58 = arith.constant dense<0.000000e+00> : vector<16x64xf32>
    %118 = tpu.matmul %117, %113, %cst_58 {dimension_numbers = #tpu.dot_dimension_numbers<[1], [1], [0], [0], [0, 0, 1, 0], [], []>} : vector<16x32xbf16>, vector<64x32xbf16>, vector<16x64xf32> -> vector<16x64xf32>
    %119 = vector.broadcast %38 : vector<1x64xf32> to vector<16x64xf32>
    %120 = arith.addf %118, %119 : vector<16x64xf32>
    %cst_59 = arith.constant dense<0xFF800000> : vector<16xf32>
    %121 = vector.multi_reduction <maximumf>, %120, %cst_59 [1] : vector<16x64xf32> to vector<16xf32>
    %122 = vector.shape_cast %121 : vector<16xf32> to vector<16x1xf32>
    %123 = vector.broadcast %122 : vector<16x1xf32> to vector<16x64xf32>
    %124 = arith.subf %120, %123 : vector<16x64xf32>
    %125 = math.exp %124 : vector<16x64xf32>
    %126 = arith.truncf %125 : vector<16x64xf32> to vector<16x64xbf16>
    %cst_60 = arith.constant dense<0.000000e+00> : vector<16x32xf32>
    %127 = tpu.matmul %126, %116, %cst_60 {dimension_numbers = #tpu.dot_dimension_numbers<[1], [0], [0], [1], [0, 0, 1, 1], [], []>} : vector<16x64xbf16>, vector<64x32xbf16>, vector<16x32xf32> -> vector<16x32xf32>
    %cst_61 = arith.constant dense<0.000000e+00> : vector<16x32xf32>
    %128 = tpu.matmul %126, %34, %cst_61 {dimension_numbers = #tpu.dot_dimension_numbers<[1], [0], [0], [1], [0, 0, 1, 1], [], []>} : vector<16x64xbf16>, vector<64x32xbf16>, vector<16x32xf32> -> vector<16x32xf32>
    %cst_62 = arith.constant 9.99999968E-21 : f32
    %129 = vector.broadcast %cst_62 : f32 to vector<16x32xf32>
    %130 = arith.maximumf %128, %129 : vector<16x32xf32>
    %131 = tpu.reciprocal %130 {approx = true} : vector<16x32xf32> -> vector<16x32xf32>
    %132 = arith.mulf %127, %131 : vector<16x32xf32>
    %133 = arith.truncf %132 : vector<16x32xf32> to vector<16x32xbf16>
    %c0_63 = arith.constant 0 : index
    %c0_64 = arith.constant 0 : index
    %c0_65 = arith.constant 0 : index
    %134 = vector.load %arg16[%c0_63, %c0_64, %c0_65] : memref<2x32x32xbf16, #tpu.memory_space<vmem>>, vector<1x32x32xbf16>
    %135 = vector.shape_cast %134 : vector<1x32x32xbf16> to vector<32x32xbf16>
    %cst_66 = arith.constant dense<0.000000e+00> : vector<16x32xf32>
    %136 = tpu.matmul %133, %135, %cst_66 {dimension_numbers = #tpu.dot_dimension_numbers<[1], [0], [0], [1], [0, 0, 1, 1], [], []>} : vector<16x32xbf16>, vector<32x32xbf16>, vector<16x32xf32> -> vector<16x32xf32>
    %137 = arith.addf %136, %99 : vector<16x32xf32>
    %c0_67 = arith.constant 0 : index
    %c0_68 = arith.constant 0 : index
    %c0_69 = arith.constant 0 : index
    %138 = vector.load %arg17[%c0_67, %c0_68, %c0_69] : memref<2x1x32xf32, #tpu.memory_space<vmem>>, vector<1x1x32xf32>
    %139 = vector.shape_cast %138 : vector<1x1x32xf32> to vector<1x32xf32>
    %c0_70 = arith.constant 0 : index
    %c0_71 = arith.constant 0 : index
    %c0_72 = arith.constant 0 : index
    %140 = vector.load %arg18[%c0_70, %c0_71, %c0_72] : memref<2x1x32xf32, #tpu.memory_space<vmem>>, vector<1x1x32xf32>
    %141 = vector.shape_cast %140 : vector<1x1x32xf32> to vector<1x32xf32>
    %cst_73 = arith.constant dense<0.000000e+00> : vector<16xf32>
    %142 = vector.multi_reduction <add>, %137, %cst_73 [1] : vector<16x32xf32> to vector<16xf32>
    %143 = vector.shape_cast %142 : vector<16xf32> to vector<16x1xf32>
    %cst_74 = arith.constant 3.200000e+01 : f32
    %144 = vector.broadcast %cst_74 : f32 to vector<16x1xf32>
    %145 = arith.divf %143, %144 : vector<16x1xf32>
    %146 = vector.broadcast %145 : vector<16x1xf32> to vector<16x32xf32>
    %147 = arith.subf %137, %146 : vector<16x32xf32>
    %148 = arith.mulf %147, %147 : vector<16x32xf32>
    %cst_75 = arith.constant dense<0.000000e+00> : vector<16xf32>
    %149 = vector.multi_reduction <add>, %148, %cst_75 [1] : vector<16x32xf32> to vector<16xf32>
    %150 = vector.shape_cast %149 : vector<16xf32> to vector<16x1xf32>
    %cst_76 = arith.constant 3.200000e+01 : f32
    %151 = vector.broadcast %cst_76 : f32 to vector<16x1xf32>
    %152 = arith.divf %150, %151 : vector<16x1xf32>
    %153 = vector.broadcast %145 : vector<16x1xf32> to vector<16x32xf32>
    %154 = arith.subf %137, %153 : vector<16x32xf32>
    %cst_77 = arith.constant 9.99999997E-7 : f32
    %155 = vector.broadcast %cst_77 : f32 to vector<16x1xf32>
    %156 = arith.addf %152, %155 : vector<16x1xf32>
    %157 = math.rsqrt %156 : vector<16x1xf32>
    %158 = vector.broadcast %157 : vector<16x1xf32> to vector<16x32xf32>
    %159 = arith.mulf %154, %158 : vector<16x32xf32>
    %160 = vector.broadcast %139 : vector<1x32xf32> to vector<16x32xf32>
    %161 = arith.mulf %159, %160 : vector<16x32xf32>
    %162 = vector.broadcast %141 : vector<1x32xf32> to vector<16x32xf32>
    %163 = arith.addf %161, %162 : vector<16x32xf32>
    %164 = arith.truncf %163 : vector<16x32xf32> to vector<16x32xbf16>
    %c0_78 = arith.constant 0 : index
    %c0_79 = arith.constant 0 : index
    %c0_80 = arith.constant 0 : index
    %165 = vector.load %arg19[%c0_78, %c0_79, %c0_80] : memref<2x32x64xbf16, #tpu.memory_space<vmem>>, vector<1x32x64xbf16>
    %166 = vector.shape_cast %165 : vector<1x32x64xbf16> to vector<32x64xbf16>
    %cst_81 = arith.constant dense<0.000000e+00> : vector<16x64xf32>
    %167 = tpu.matmul %164, %166, %cst_81 {dimension_numbers = #tpu.dot_dimension_numbers<[1], [0], [0], [1], [0, 0, 1, 1], [], []>} : vector<16x32xbf16>, vector<32x64xbf16>, vector<16x64xf32> -> vector<16x64xf32>
    %c0_82 = arith.constant 0 : index
    %c0_83 = arith.constant 0 : index
    %c0_84 = arith.constant 0 : index
    %168 = vector.load %arg20[%c0_82, %c0_83, %c0_84] : memref<2x1x64xf32, #tpu.memory_space<vmem>>, vector<1x1x64xf32>
    %169 = vector.shape_cast %168 : vector<1x1x64xf32> to vector<1x64xf32>
    %170 = vector.broadcast %169 : vector<1x64xf32> to vector<16x64xf32>
    %171 = arith.addf %167, %170 : vector<16x64xf32>
    %cst_85 = arith.constant 0.000000e+00 : f32
    %172 = vector.broadcast %cst_85 : f32 to vector<16x64xf32>
    %173 = arith.maximumf %171, %172 : vector<16x64xf32>
    %174 = arith.truncf %173 : vector<16x64xf32> to vector<16x64xbf16>
    %c0_86 = arith.constant 0 : index
    %c0_87 = arith.constant 0 : index
    %c0_88 = arith.constant 0 : index
    %175 = vector.load %arg21[%c0_86, %c0_87, %c0_88] : memref<2x64x32xbf16, #tpu.memory_space<vmem>>, vector<1x64x32xbf16>
    %176 = vector.shape_cast %175 : vector<1x64x32xbf16> to vector<64x32xbf16>
    %cst_89 = arith.constant dense<0.000000e+00> : vector<16x32xf32>
    %177 = tpu.matmul %174, %176, %cst_89 {dimension_numbers = #tpu.dot_dimension_numbers<[1], [0], [0], [1], [0, 0, 1, 1], [], []>} : vector<16x64xbf16>, vector<64x32xbf16>, vector<16x32xf32> -> vector<16x32xf32>
    %c0_90 = arith.constant 0 : index
    %c0_91 = arith.constant 0 : index
    %c0_92 = arith.constant 0 : index
    %178 = vector.load %arg22[%c0_90, %c0_91, %c0_92] : memref<2x1x32xf32, #tpu.memory_space<vmem>>, vector<1x1x32xf32>
    %179 = vector.shape_cast %178 : vector<1x1x32xf32> to vector<1x32xf32>
    %180 = vector.broadcast %179 : vector<1x32xf32> to vector<16x32xf32>
    %181 = arith.addf %177, %180 : vector<16x32xf32>
    %182 = arith.addf %181, %163 : vector<16x32xf32>
    %c0_93 = arith.constant 0 : index
    %c0_94 = arith.constant 0 : index
    %c0_95 = arith.constant 0 : index
    %183 = vector.load %arg23[%c0_93, %c0_94, %c0_95] : memref<2x1x32xf32, #tpu.memory_space<vmem>>, vector<1x1x32xf32>
    %184 = vector.shape_cast %183 : vector<1x1x32xf32> to vector<1x32xf32>
    %c0_96 = arith.constant 0 : index
    %c0_97 = arith.constant 0 : index
    %c0_98 = arith.constant 0 : index
    %185 = vector.load %arg24[%c0_96, %c0_97, %c0_98] : memref<2x1x32xf32, #tpu.memory_space<vmem>>, vector<1x1x32xf32>
    %186 = vector.shape_cast %185 : vector<1x1x32xf32> to vector<1x32xf32>
    %cst_99 = arith.constant dense<0.000000e+00> : vector<16xf32>
    %187 = vector.multi_reduction <add>, %182, %cst_99 [1] : vector<16x32xf32> to vector<16xf32>
    %188 = vector.shape_cast %187 : vector<16xf32> to vector<16x1xf32>
    %cst_100 = arith.constant 3.200000e+01 : f32
    %189 = vector.broadcast %cst_100 : f32 to vector<16x1xf32>
    %190 = arith.divf %188, %189 : vector<16x1xf32>
    %191 = vector.broadcast %190 : vector<16x1xf32> to vector<16x32xf32>
    %192 = arith.subf %182, %191 : vector<16x32xf32>
    %193 = arith.mulf %192, %192 : vector<16x32xf32>
    %cst_101 = arith.constant dense<0.000000e+00> : vector<16xf32>
    %194 = vector.multi_reduction <add>, %193, %cst_101 [1] : vector<16x32xf32> to vector<16xf32>
    %195 = vector.shape_cast %194 : vector<16xf32> to vector<16x1xf32>
    %cst_102 = arith.constant 3.200000e+01 : f32
    %196 = vector.broadcast %cst_102 : f32 to vector<16x1xf32>
    %197 = arith.divf %195, %196 : vector<16x1xf32>
    %198 = vector.broadcast %190 : vector<16x1xf32> to vector<16x32xf32>
    %199 = arith.subf %182, %198 : vector<16x32xf32>
    %cst_103 = arith.constant 9.99999997E-7 : f32
    %200 = vector.broadcast %cst_103 : f32 to vector<16x1xf32>
    %201 = arith.addf %197, %200 : vector<16x1xf32>
    %202 = math.rsqrt %201 : vector<16x1xf32>
    %203 = vector.broadcast %202 : vector<16x1xf32> to vector<16x32xf32>
    %204 = arith.mulf %199, %203 : vector<16x32xf32>
    %205 = vector.broadcast %184 : vector<1x32xf32> to vector<16x32xf32>
    %206 = arith.mulf %204, %205 : vector<16x32xf32>
    %207 = vector.broadcast %186 : vector<1x32xf32> to vector<16x32xf32>
    %208 = arith.addf %206, %207 : vector<16x32xf32>
    %209 = arith.truncf %208 : vector<16x32xf32> to vector<16x32xbf16>
    %c1 = arith.constant 1 : index
    %c0_104 = arith.constant 0 : index
    %c0_105 = arith.constant 0 : index
    %210 = vector.load %arg10[%c1, %c0_104, %c0_105] : memref<2x32x96xbf16, #tpu.memory_space<vmem>>, vector<1x32x96xbf16>
    %211 = vector.shape_cast %210 : vector<1x32x96xbf16> to vector<32x96xbf16>
    %cst_106 = arith.constant dense<0.000000e+00> : vector<16x96xf32>
    %212 = tpu.matmul %209, %211, %cst_106 {dimension_numbers = #tpu.dot_dimension_numbers<[1], [0], [0], [1], [0, 0, 1, 1], [], []>} : vector<16x32xbf16>, vector<32x96xbf16>, vector<16x96xf32> -> vector<16x96xf32>
    %213 = vector.extract_strided_slice %212 {offsets = [0, 0], sizes = [16, 32], strides = [1, 1]} : vector<16x96xf32> to vector<16x32xf32>
    %cst_107 = arith.constant 0.353553385 : f32
    %214 = vector.broadcast %cst_107 : f32 to vector<16x32xf32>
    %215 = arith.mulf %213, %214 : vector<16x32xf32>
    %216 = vector.extract_strided_slice %212 {offsets = [0, 32], sizes = [16, 32], strides = [1, 1]} : vector<16x96xf32> to vector<16x32xf32>
    %217 = vector.extract_strided_slice %212 {offsets = [0, 64], sizes = [16, 32], strides = [1, 1]} : vector<16x96xf32> to vector<16x32xf32>
    %218 = tpu.concatenate %216, %216, %216, %216 in 0 : vector<16x32xf32>, vector<16x32xf32>, vector<16x32xf32>, vector<16x32xf32> -> vector<64x32xf32>
    %219 = arith.mulf %218, %31 : vector<64x32xf32>
    %220 = arith.truncf %219 : vector<64x32xf32> to vector<64x32xbf16>
    %221 = tpu.concatenate %217, %217, %217, %217 in 0 : vector<16x32xf32>, vector<16x32xf32>, vector<16x32xf32>, vector<16x32xf32> -> vector<64x32xf32>
    %222 = arith.mulf %221, %31 : vector<64x32xf32>
    %223 = arith.truncf %222 : vector<64x32xf32> to vector<64x32xbf16>
    %224 = arith.truncf %215 : vector<16x32xf32> to vector<16x32xbf16>
    %cst_108 = arith.constant dense<0.000000e+00> : vector<16x64xf32>
    %225 = tpu.matmul %224, %220, %cst_108 {dimension_numbers = #tpu.dot_dimension_numbers<[1], [1], [0], [0], [0, 0, 1, 0], [], []>} : vector<16x32xbf16>, vector<64x32xbf16>, vector<16x64xf32> -> vector<16x64xf32>
    %226 = arith.addf %225, %37 : vector<16x64xf32>
    %cst_109 = arith.constant dense<0xFF800000> : vector<16xf32>
    %227 = vector.multi_reduction <maximumf>, %226, %cst_109 [1] : vector<16x64xf32> to vector<16xf32>
    %228 = vector.shape_cast %227 : vector<16xf32> to vector<16x1xf32>
    %229 = vector.broadcast %228 : vector<16x1xf32> to vector<16x64xf32>
    %230 = arith.subf %226, %229 : vector<16x64xf32>
    %231 = math.exp %230 : vector<16x64xf32>
    %232 = arith.truncf %231 : vector<16x64xf32> to vector<16x64xbf16>
    %cst_110 = arith.constant dense<0.000000e+00> : vector<16x32xf32>
    %233 = tpu.matmul %232, %223, %cst_110 {dimension_numbers = #tpu.dot_dimension_numbers<[1], [0], [0], [1], [0, 0, 1, 1], [], []>} : vector<16x64xbf16>, vector<64x32xbf16>, vector<16x32xf32> -> vector<16x32xf32>
    %cst_111 = arith.constant dense<0.000000e+00> : vector<16x32xf32>
    %234 = tpu.matmul %232, %33, %cst_111 {dimension_numbers = #tpu.dot_dimension_numbers<[1], [0], [0], [1], [0, 0, 1, 1], [], []>} : vector<16x64xbf16>, vector<64x32xbf16>, vector<16x32xf32> -> vector<16x32xf32>
    %cst_112 = arith.constant 9.99999968E-21 : f32
    %235 = vector.broadcast %cst_112 : f32 to vector<16x32xf32>
    %236 = arith.maximumf %234, %235 : vector<16x32xf32>
    %237 = tpu.reciprocal %236 {approx = true} : vector<16x32xf32> -> vector<16x32xf32>
    %238 = arith.mulf %233, %237 : vector<16x32xf32>
    %239 = arith.truncf %238 : vector<16x32xf32> to vector<16x32xbf16>
    %c1_113 = arith.constant 1 : index
    %c0_114 = arith.constant 0 : index
    %c0_115 = arith.constant 0 : index
    %240 = vector.load %arg11[%c1_113, %c0_114, %c0_115] : memref<2x32x32xbf16, #tpu.memory_space<vmem>>, vector<1x32x32xbf16>
    %241 = vector.shape_cast %240 : vector<1x32x32xbf16> to vector<32x32xbf16>
    %cst_116 = arith.constant dense<0.000000e+00> : vector<16x32xf32>
    %242 = tpu.matmul %239, %241, %cst_116 {dimension_numbers = #tpu.dot_dimension_numbers<[1], [0], [0], [1], [0, 0, 1, 1], [], []>} : vector<16x32xbf16>, vector<32x32xbf16>, vector<16x32xf32> -> vector<16x32xf32>
    %243 = arith.addf %242, %208 : vector<16x32xf32>
    %c1_117 = arith.constant 1 : index
    %c0_118 = arith.constant 0 : index
    %c0_119 = arith.constant 0 : index
    %244 = vector.load %arg12[%c1_117, %c0_118, %c0_119] : memref<2x1x32xf32, #tpu.memory_space<vmem>>, vector<1x1x32xf32>
    %245 = vector.shape_cast %244 : vector<1x1x32xf32> to vector<1x32xf32>
    %c1_120 = arith.constant 1 : index
    %c0_121 = arith.constant 0 : index
    %c0_122 = arith.constant 0 : index
    %246 = vector.load %arg13[%c1_120, %c0_121, %c0_122] : memref<2x1x32xf32, #tpu.memory_space<vmem>>, vector<1x1x32xf32>
    %247 = vector.shape_cast %246 : vector<1x1x32xf32> to vector<1x32xf32>
    %cst_123 = arith.constant dense<0.000000e+00> : vector<16xf32>
    %248 = vector.multi_reduction <add>, %243, %cst_123 [1] : vector<16x32xf32> to vector<16xf32>
    %249 = vector.shape_cast %248 : vector<16xf32> to vector<16x1xf32>
    %cst_124 = arith.constant 3.200000e+01 : f32
    %250 = vector.broadcast %cst_124 : f32 to vector<16x1xf32>
    %251 = arith.divf %249, %250 : vector<16x1xf32>
    %252 = vector.broadcast %251 : vector<16x1xf32> to vector<16x32xf32>
    %253 = arith.subf %243, %252 : vector<16x32xf32>
    %254 = arith.mulf %253, %253 : vector<16x32xf32>
    %cst_125 = arith.constant dense<0.000000e+00> : vector<16xf32>
    %255 = vector.multi_reduction <add>, %254, %cst_125 [1] : vector<16x32xf32> to vector<16xf32>
    %256 = vector.shape_cast %255 : vector<16xf32> to vector<16x1xf32>
    %cst_126 = arith.constant 3.200000e+01 : f32
    %257 = vector.broadcast %cst_126 : f32 to vector<16x1xf32>
    %258 = arith.divf %256, %257 : vector<16x1xf32>
    %259 = vector.broadcast %251 : vector<16x1xf32> to vector<16x32xf32>
    %260 = arith.subf %243, %259 : vector<16x32xf32>
    %cst_127 = arith.constant 9.99999997E-7 : f32
    %261 = vector.broadcast %cst_127 : f32 to vector<16x1xf32>
    %262 = arith.addf %258, %261 : vector<16x1xf32>
    %263 = math.rsqrt %262 : vector<16x1xf32>
    %264 = vector.broadcast %263 : vector<16x1xf32> to vector<16x32xf32>
    %265 = arith.mulf %260, %264 : vector<16x32xf32>
    %266 = vector.broadcast %245 : vector<1x32xf32> to vector<16x32xf32>
    %267 = arith.mulf %265, %266 : vector<16x32xf32>
    %268 = vector.broadcast %247 : vector<1x32xf32> to vector<16x32xf32>
    %269 = arith.addf %267, %268 : vector<16x32xf32>
    %270 = arith.truncf %269 : vector<16x32xf32> to vector<16x32xbf16>
    %c1_128 = arith.constant 1 : index
    %c0_129 = arith.constant 0 : index
    %c0_130 = arith.constant 0 : index
    %271 = vector.load %arg14[%c1_128, %c0_129, %c0_130] : memref<2x32x32xbf16, #tpu.memory_space<vmem>>, vector<1x32x32xbf16>
    %272 = vector.shape_cast %271 : vector<1x32x32xbf16> to vector<32x32xbf16>
    %cst_131 = arith.constant dense<0.000000e+00> : vector<16x32xf32>
    %273 = tpu.matmul %270, %272, %cst_131 {dimension_numbers = #tpu.dot_dimension_numbers<[1], [0], [0], [1], [0, 0, 1, 1], [], []>} : vector<16x32xbf16>, vector<32x32xbf16>, vector<16x32xf32> -> vector<16x32xf32>
    %cst_132 = arith.constant 0.353553385 : f32
    %274 = vector.broadcast %cst_132 : f32 to vector<16x32xf32>
    %275 = arith.mulf %273, %274 : vector<16x32xf32>
    %c1_133 = arith.constant 1 : index
    %c0_134 = arith.constant 0 : index
    %c0_135 = arith.constant 0 : index
    %276 = vector.load %arg15[%c1_133, %c0_134, %c0_135] : memref<2x32x64xbf16, #tpu.memory_space<vmem>>, vector<1x32x64xbf16>
    %277 = vector.shape_cast %276 : vector<1x32x64xbf16> to vector<32x64xbf16>
    %cst_136 = arith.constant dense<0.000000e+00> : vector<16x64xf32>
    %278 = tpu.matmul %30, %277, %cst_136 {dimension_numbers = #tpu.dot_dimension_numbers<[1], [0], [0], [1], [0, 0, 1, 1], [], []>} : vector<16x32xbf16>, vector<32x64xbf16>, vector<16x64xf32> -> vector<16x64xf32>
    %279 = vector.extract_strided_slice %278 {offsets = [0, 0], sizes = [16, 32], strides = [1, 1]} : vector<16x64xf32> to vector<16x32xf32>
    %280 = vector.extract_strided_slice %278 {offsets = [0, 32], sizes = [16, 32], strides = [1, 1]} : vector<16x64xf32> to vector<16x32xf32>
    %281 = tpu.concatenate %279, %279, %279, %279 in 0 : vector<16x32xf32>, vector<16x32xf32>, vector<16x32xf32>, vector<16x32xf32> -> vector<64x32xf32>
    %282 = arith.mulf %281, %32 : vector<64x32xf32>
    %283 = arith.truncf %282 : vector<64x32xf32> to vector<64x32xbf16>
    %284 = tpu.concatenate %280, %280, %280, %280 in 0 : vector<16x32xf32>, vector<16x32xf32>, vector<16x32xf32>, vector<16x32xf32> -> vector<64x32xf32>
    %285 = arith.mulf %284, %32 : vector<64x32xf32>
    %286 = arith.truncf %285 : vector<64x32xf32> to vector<64x32xbf16>
    %287 = arith.truncf %275 : vector<16x32xf32> to vector<16x32xbf16>
    %cst_137 = arith.constant dense<0.000000e+00> : vector<16x64xf32>
    %288 = tpu.matmul %287, %283, %cst_137 {dimension_numbers = #tpu.dot_dimension_numbers<[1], [1], [0], [0], [0, 0, 1, 0], [], []>} : vector<16x32xbf16>, vector<64x32xbf16>, vector<16x64xf32> -> vector<16x64xf32>
    %289 = vector.broadcast %38 : vector<1x64xf32> to vector<16x64xf32>
    %290 = arith.addf %288, %289 : vector<16x64xf32>
    %cst_138 = arith.constant dense<0xFF800000> : vector<16xf32>
    %291 = vector.multi_reduction <maximumf>, %290, %cst_138 [1] : vector<16x64xf32> to vector<16xf32>
    %292 = vector.shape_cast %291 : vector<16xf32> to vector<16x1xf32>
    %293 = vector.broadcast %292 : vector<16x1xf32> to vector<16x64xf32>
    %294 = arith.subf %290, %293 : vector<16x64xf32>
    %295 = math.exp %294 : vector<16x64xf32>
    %296 = arith.truncf %295 : vector<16x64xf32> to vector<16x64xbf16>
    %cst_139 = arith.constant dense<0.000000e+00> : vector<16x32xf32>
    %297 = tpu.matmul %296, %286, %cst_139 {dimension_numbers = #tpu.dot_dimension_numbers<[1], [0], [0], [1], [0, 0, 1, 1], [], []>} : vector<16x64xbf16>, vector<64x32xbf16>, vector<16x32xf32> -> vector<16x32xf32>
    %cst_140 = arith.constant dense<0.000000e+00> : vector<16x32xf32>
    %298 = tpu.matmul %296, %34, %cst_140 {dimension_numbers = #tpu.dot_dimension_numbers<[1], [0], [0], [1], [0, 0, 1, 1], [], []>} : vector<16x64xbf16>, vector<64x32xbf16>, vector<16x32xf32> -> vector<16x32xf32>
    %cst_141 = arith.constant 9.99999968E-21 : f32
    %299 = vector.broadcast %cst_141 : f32 to vector<16x32xf32>
    %300 = arith.maximumf %298, %299 : vector<16x32xf32>
    %301 = tpu.reciprocal %300 {approx = true} : vector<16x32xf32> -> vector<16x32xf32>
    %302 = arith.mulf %297, %301 : vector<16x32xf32>
    %303 = arith.truncf %302 : vector<16x32xf32> to vector<16x32xbf16>
    %c1_142 = arith.constant 1 : index
    %c0_143 = arith.constant 0 : index
    %c0_144 = arith.constant 0 : index
    %304 = vector.load %arg16[%c1_142, %c0_143, %c0_144] : memref<2x32x32xbf16, #tpu.memory_space<vmem>>, vector<1x32x32xbf16>
    %305 = vector.shape_cast %304 : vector<1x32x32xbf16> to vector<32x32xbf16>
    %cst_145 = arith.constant dense<0.000000e+00> : vector<16x32xf32>
    %306 = tpu.matmul %303, %305, %cst_145 {dimension_numbers = #tpu.dot_dimension_numbers<[1], [0], [0], [1], [0, 0, 1, 1], [], []>} : vector<16x32xbf16>, vector<32x32xbf16>, vector<16x32xf32> -> vector<16x32xf32>
    %307 = arith.addf %306, %269 : vector<16x32xf32>
    %c1_146 = arith.constant 1 : index
    %c0_147 = arith.constant 0 : index
    %c0_148 = arith.constant 0 : index
    %308 = vector.load %arg17[%c1_146, %c0_147, %c0_148] : memref<2x1x32xf32, #tpu.memory_space<vmem>>, vector<1x1x32xf32>
    %309 = vector.shape_cast %308 : vector<1x1x32xf32> to vector<1x32xf32>
    %c1_149 = arith.constant 1 : index
    %c0_150 = arith.constant 0 : index
    %c0_151 = arith.constant 0 : index
    %310 = vector.load %arg18[%c1_149, %c0_150, %c0_151] : memref<2x1x32xf32, #tpu.memory_space<vmem>>, vector<1x1x32xf32>
    %311 = vector.shape_cast %310 : vector<1x1x32xf32> to vector<1x32xf32>
    %cst_152 = arith.constant dense<0.000000e+00> : vector<16xf32>
    %312 = vector.multi_reduction <add>, %307, %cst_152 [1] : vector<16x32xf32> to vector<16xf32>
    %313 = vector.shape_cast %312 : vector<16xf32> to vector<16x1xf32>
    %cst_153 = arith.constant 3.200000e+01 : f32
    %314 = vector.broadcast %cst_153 : f32 to vector<16x1xf32>
    %315 = arith.divf %313, %314 : vector<16x1xf32>
    %316 = vector.broadcast %315 : vector<16x1xf32> to vector<16x32xf32>
    %317 = arith.subf %307, %316 : vector<16x32xf32>
    %318 = arith.mulf %317, %317 : vector<16x32xf32>
    %cst_154 = arith.constant dense<0.000000e+00> : vector<16xf32>
    %319 = vector.multi_reduction <add>, %318, %cst_154 [1] : vector<16x32xf32> to vector<16xf32>
    %320 = vector.shape_cast %319 : vector<16xf32> to vector<16x1xf32>
    %cst_155 = arith.constant 3.200000e+01 : f32
    %321 = vector.broadcast %cst_155 : f32 to vector<16x1xf32>
    %322 = arith.divf %320, %321 : vector<16x1xf32>
    %323 = vector.broadcast %315 : vector<16x1xf32> to vector<16x32xf32>
    %324 = arith.subf %307, %323 : vector<16x32xf32>
    %cst_156 = arith.constant 9.99999997E-7 : f32
    %325 = vector.broadcast %cst_156 : f32 to vector<16x1xf32>
    %326 = arith.addf %322, %325 : vector<16x1xf32>
    %327 = math.rsqrt %326 : vector<16x1xf32>
    %328 = vector.broadcast %327 : vector<16x1xf32> to vector<16x32xf32>
    %329 = arith.mulf %324, %328 : vector<16x32xf32>
    %330 = vector.broadcast %309 : vector<1x32xf32> to vector<16x32xf32>
    %331 = arith.mulf %329, %330 : vector<16x32xf32>
    %332 = vector.broadcast %311 : vector<1x32xf32> to vector<16x32xf32>
    %333 = arith.addf %331, %332 : vector<16x32xf32>
    %334 = arith.truncf %333 : vector<16x32xf32> to vector<16x32xbf16>
    %c1_157 = arith.constant 1 : index
    %c0_158 = arith.constant 0 : index
    %c0_159 = arith.constant 0 : index
    %335 = vector.load %arg19[%c1_157, %c0_158, %c0_159] : memref<2x32x64xbf16, #tpu.memory_space<vmem>>, vector<1x32x64xbf16>
    %336 = vector.shape_cast %335 : vector<1x32x64xbf16> to vector<32x64xbf16>
    %cst_160 = arith.constant dense<0.000000e+00> : vector<16x64xf32>
    %337 = tpu.matmul %334, %336, %cst_160 {dimension_numbers = #tpu.dot_dimension_numbers<[1], [0], [0], [1], [0, 0, 1, 1], [], []>} : vector<16x32xbf16>, vector<32x64xbf16>, vector<16x64xf32> -> vector<16x64xf32>
    %c1_161 = arith.constant 1 : index
    %c0_162 = arith.constant 0 : index
    %c0_163 = arith.constant 0 : index
    %338 = vector.load %arg20[%c1_161, %c0_162, %c0_163] : memref<2x1x64xf32, #tpu.memory_space<vmem>>, vector<1x1x64xf32>
    %339 = vector.shape_cast %338 : vector<1x1x64xf32> to vector<1x64xf32>
    %340 = vector.broadcast %339 : vector<1x64xf32> to vector<16x64xf32>
    %341 = arith.addf %337, %340 : vector<16x64xf32>
    %cst_164 = arith.constant 0.000000e+00 : f32
    %342 = vector.broadcast %cst_164 : f32 to vector<16x64xf32>
    %343 = arith.maximumf %341, %342 : vector<16x64xf32>
    %344 = arith.truncf %343 : vector<16x64xf32> to vector<16x64xbf16>
    %c1_165 = arith.constant 1 : index
    %c0_166 = arith.constant 0 : index
    %c0_167 = arith.constant 0 : index
    %345 = vector.load %arg21[%c1_165, %c0_166, %c0_167] : memref<2x64x32xbf16, #tpu.memory_space<vmem>>, vector<1x64x32xbf16>
    %346 = vector.shape_cast %345 : vector<1x64x32xbf16> to vector<64x32xbf16>
    %cst_168 = arith.constant dense<0.000000e+00> : vector<16x32xf32>
    %347 = tpu.matmul %344, %346, %cst_168 {dimension_numbers = #tpu.dot_dimension_numbers<[1], [0], [0], [1], [0, 0, 1, 1], [], []>} : vector<16x64xbf16>, vector<64x32xbf16>, vector<16x32xf32> -> vector<16x32xf32>
    %c1_169 = arith.constant 1 : index
    %c0_170 = arith.constant 0 : index
    %c0_171 = arith.constant 0 : index
    %348 = vector.load %arg22[%c1_169, %c0_170, %c0_171] : memref<2x1x32xf32, #tpu.memory_space<vmem>>, vector<1x1x32xf32>
    %349 = vector.shape_cast %348 : vector<1x1x32xf32> to vector<1x32xf32>
    %350 = vector.broadcast %349 : vector<1x32xf32> to vector<16x32xf32>
    %351 = arith.addf %347, %350 : vector<16x32xf32>
    %352 = arith.addf %351, %333 : vector<16x32xf32>
    %c1_172 = arith.constant 1 : index
    %c0_173 = arith.constant 0 : index
    %c0_174 = arith.constant 0 : index
    %353 = vector.load %arg23[%c1_172, %c0_173, %c0_174] : memref<2x1x32xf32, #tpu.memory_space<vmem>>, vector<1x1x32xf32>
    %354 = vector.shape_cast %353 : vector<1x1x32xf32> to vector<1x32xf32>
    %c1_175 = arith.constant 1 : index
    %c0_176 = arith.constant 0 : index
    %c0_177 = arith.constant 0 : index
    %355 = vector.load %arg24[%c1_175, %c0_176, %c0_177] : memref<2x1x32xf32, #tpu.memory_space<vmem>>, vector<1x1x32xf32>
    %356 = vector.shape_cast %355 : vector<1x1x32xf32> to vector<1x32xf32>
    %cst_178 = arith.constant dense<0.000000e+00> : vector<16xf32>
    %357 = vector.multi_reduction <add>, %352, %cst_178 [1] : vector<16x32xf32> to vector<16xf32>
    %358 = vector.shape_cast %357 : vector<16xf32> to vector<16x1xf32>
    %cst_179 = arith.constant 3.200000e+01 : f32
    %359 = vector.broadcast %cst_179 : f32 to vector<16x1xf32>
    %360 = arith.divf %358, %359 : vector<16x1xf32>
    %361 = vector.broadcast %360 : vector<16x1xf32> to vector<16x32xf32>
    %362 = arith.subf %352, %361 : vector<16x32xf32>
    %363 = arith.mulf %362, %362 : vector<16x32xf32>
    %cst_180 = arith.constant dense<0.000000e+00> : vector<16xf32>
    %364 = vector.multi_reduction <add>, %363, %cst_180 [1] : vector<16x32xf32> to vector<16xf32>
    %365 = vector.shape_cast %364 : vector<16xf32> to vector<16x1xf32>
    %cst_181 = arith.constant 3.200000e+01 : f32
    %366 = vector.broadcast %cst_181 : f32 to vector<16x1xf32>
    %367 = arith.divf %365, %366 : vector<16x1xf32>
    %368 = vector.broadcast %360 : vector<16x1xf32> to vector<16x32xf32>
    %369 = arith.subf %352, %368 : vector<16x32xf32>
    %cst_182 = arith.constant 9.99999997E-7 : f32
    %370 = vector.broadcast %cst_182 : f32 to vector<16x1xf32>
    %371 = arith.addf %367, %370 : vector<16x1xf32>
    %372 = math.rsqrt %371 : vector<16x1xf32>
    %373 = vector.broadcast %372 : vector<16x1xf32> to vector<16x32xf32>
    %374 = arith.mulf %369, %373 : vector<16x32xf32>
    %375 = vector.broadcast %354 : vector<1x32xf32> to vector<16x32xf32>
    %376 = arith.mulf %374, %375 : vector<16x32xf32>
    %377 = vector.broadcast %356 : vector<1x32xf32> to vector<16x32xf32>
    %378 = arith.addf %376, %377 : vector<16x32xf32>
    %c0_183 = arith.constant 0 : index
    %c0_184 = arith.constant 0 : index
    %c0_185 = arith.constant 0 : index
    %379 = vector.load %arg25[%c0_183, %c0_184, %c0_185] : memref<1x16x32xf32, #tpu.memory_space<vmem>>, vector<1x16x32xf32>
    %380 = vector.shape_cast %379 : vector<1x16x32xf32> to vector<16x32xf32>
    %381 = vector.shape_cast %378 : vector<16x32xf32> to vector<1x16x32xf32>
    tpu.vector_store %arg25[%c0_183, %c0_184, %c0_185], %381 {strides = array<i32>} : memref<1x16x32xf32, #tpu.memory_space<vmem>>, vector<1x16x32xf32>,
    return
  }
  func.func @transform_0(%arg0: i32) -> (i32, i32, i32) {
    %c0_i32 = arith.constant 0 : i32
    %c0_i32_0 = arith.constant 0 : i32
    %c0_i32_1 = arith.constant 0 : i32
    return %arg0, %c0_i32, %c0_i32_0 : i32, i32, i32
  }
  func.func @transform_1(%arg0: i32) -> (i32, i32) {
    %c0_i32 = arith.constant 0 : i32
    %c0_i32_0 = arith.constant 0 : i32
    %c0_i32_1 = arith.constant 0 : i32
    return %c0_i32, %c0_i32_0 : i32, i32
  }
  func.func @transform_2(%arg0: i32) -> (i32, i32, i32) {
    %c0_i32 = arith.constant 0 : i32
    %c0_i32_0 = arith.constant 0 : i32
    %c0_i32_1 = arith.constant 0 : i32
    return %arg0, %c0_i32, %c0_i32_0 : i32, i32, i32
  }
  func.func @transform_3(%arg0: i32) -> (i32, i32, i32) {
    %c0_i32 = arith.constant 0 : i32
    %c0_i32_0 = arith.constant 0 : i32
    %c0_i32_1 = arith.constant 0 : i32
    return %arg0, %c0_i32, %c0_i32_0 : i32, i32, i32
  }
  func.func @transform_4(%arg0: i32) -> (i32, i32) {
    %c0_i32 = arith.constant 0 : i32
    %c0_i32_0 = arith.constant 0 : i32
    %c0_i32_1 = arith.constant 0 : i32
    return %c0_i32, %c0_i32_0 : i32, i32
  }
  func.func @transform_5(%arg0: i32) -> (i32, i32) {
    %c0_i32 = arith.constant 0 : i32
    %c0_i32_0 = arith.constant 0 : i32
    %c0_i32_1 = arith.constant 0 : i32
    return %c0_i32, %c0_i32_0 : i32, i32
  }
  func.func @transform_6(%arg0: i32) -> (i32, i32) {
    %c0_i32 = arith.constant 0 : i32
    %c0_i32_0 = arith.constant 0 : i32
    %c0_i32_1 = arith.constant 0 : i32
    return %c0_i32, %c0_i32_0 : i32, i32
  }
  func.func @transform_7(%arg0: i32) -> (i32, i32) {
    %c0_i32 = arith.constant 0 : i32
    %c0_i32_0 = arith.constant 0 : i32
    %c0_i32_1 = arith.constant 0 : i32
    return %c0_i32, %c0_i32_0 : i32, i32
  }
  func.func @transform_8(%arg0: i32) -> (i32, i32) {
    %c0_i32 = arith.constant 0 : i32
    %c0_i32_0 = arith.constant 0 : i32
    %c0_i32_1 = arith.constant 0 : i32
    return %c0_i32, %c0_i32_0 : i32, i32
  }
  func.func @transform_9(%arg0: i32) -> (i32, i32, i32) {
    %c0_i32 = arith.constant 0 : i32
    %c0_i32_0 = arith.constant 0 : i32
    %c0_i32_1 = arith.constant 0 : i32
    %c0_i32_2 = arith.constant 0 : i32
    return %c0_i32, %c0_i32_0, %c0_i32_1 : i32, i32, i32
  }
  func.func @transform_10(%arg0: i32) -> (i32, i32, i32) {
    %c0_i32 = arith.constant 0 : i32
    %c0_i32_0 = arith.constant 0 : i32
    %c0_i32_1 = arith.constant 0 : i32
    %c0_i32_2 = arith.constant 0 : i32
    return %c0_i32, %c0_i32_0, %c0_i32_1 : i32, i32, i32
  }
  func.func @transform_11(%arg0: i32) -> (i32, i32, i32) {
    %c0_i32 = arith.constant 0 : i32
    %c0_i32_0 = arith.constant 0 : i32
    %c0_i32_1 = arith.constant 0 : i32
    %c0_i32_2 = arith.constant 0 : i32
    return %c0_i32, %c0_i32_0, %c0_i32_1 : i32, i32, i32
  }
  func.func @transform_12(%arg0: i32) -> (i32, i32, i32) {
    %c0_i32 = arith.constant 0 : i32
    %c0_i32_0 = arith.constant 0 : i32
    %c0_i32_1 = arith.constant 0 : i32
    %c0_i32_2 = arith.constant 0 : i32
    return %c0_i32, %c0_i32_0, %c0_i32_1 : i32, i32, i32
  }
  func.func @transform_13(%arg0: i32) -> (i32, i32, i32) {
    %c0_i32 = arith.constant 0 : i32
    %c0_i32_0 = arith.constant 0 : i32
    %c0_i32_1 = arith.constant 0 : i32
    %c0_i32_2 = arith.constant 0 : i32
    return %c0_i32, %c0_i32_0, %c0_i32_1 : i32, i32, i32
  }
  func.func @transform_14(%arg0: i32) -> (i32, i32, i32) {
    %c0_i32 = arith.constant 0 : i32
    %c0_i32_0 = arith.constant 0 : i32
    %c0_i32_1 = arith.constant 0 : i32
    %c0_i32_2 = arith.constant 0 : i32
    return %c0_i32, %c0_i32_0, %c0_i32_1 : i32, i32, i32
  }
  func.func @transform_15(%arg0: i32) -> (i32, i32, i32) {
    %c0_i32 = arith.constant 0 : i32
    %c0_i32_0 = arith.constant 0 : i32
    %c0_i32_1 = arith.constant 0 : i32
    %c0_i32_2 = arith.constant 0 : i32
    return %c0_i32, %c0_i32_0, %c0_i32_1 : i32, i32, i32
  }
  func.func @transform_16(%arg0: i32) -> (i32, i32, i32) {
    %c0_i32 = arith.constant 0 : i32
    %c0_i32_0 = arith.constant 0 : i32
    %c0_i32_1 = arith.constant 0 : i32
    %c0_i32_2 = arith.constant 0 : i32
    return %c0_i32, %c0_i32_0, %c0_i32_1 : i32, i32, i32
  }
  func.func @transform_17(%arg0: i32) -> (i32, i32, i32) {
    %c0_i32 = arith.constant 0 : i32
    %c0_i32_0 = arith.constant 0 : i32
    %c0_i32_1 = arith.constant 0 : i32
    %c0_i32_2 = arith.constant 0 : i32
    return %c0_i32, %c0_i32_0, %c0_i32_1 : i32, i32, i32
  }
  func.func @transform_18(%arg0: i32) -> (i32, i32, i32) {
    %c0_i32 = arith.constant 0 : i32
    %c0_i32_0 = arith.constant 0 : i32
    %c0_i32_1 = arith.constant 0 : i32
    %c0_i32_2 = arith.constant 0 : i32
    return %c0_i32, %c0_i32_0, %c0_i32_1 : i32, i32, i32
  }
  func.func @transform_19(%arg0: i32) -> (i32, i32, i32) {
    %c0_i32 = arith.constant 0 : i32
    %c0_i32_0 = arith.constant 0 : i32
    %c0_i32_1 = arith.constant 0 : i32
    %c0_i32_2 = arith.constant 0 : i32
    return %c0_i32, %c0_i32_0, %c0_i32_1 : i32, i32, i32
  }
  func.func @transform_20(%arg0: i32) -> (i32, i32, i32) {
    %c0_i32 = arith.constant 0 : i32
    %c0_i32_0 = arith.constant 0 : i32
    %c0_i32_1 = arith.constant 0 : i32
    %c0_i32_2 = arith.constant 0 : i32
    return %c0_i32, %c0_i32_0, %c0_i32_1 : i32, i32, i32
  }
  func.func @transform_21(%arg0: i32) -> (i32, i32, i32) {
    %c0_i32 = arith.constant 0 : i32
    %c0_i32_0 = arith.constant 0 : i32
    %c0_i32_1 = arith.constant 0 : i32
    %c0_i32_2 = arith.constant 0 : i32
    return %c0_i32, %c0_i32_0, %c0_i32_1 : i32, i32, i32
  }
  func.func @transform_22(%arg0: i32) -> (i32, i32, i32) {
    %c0_i32 = arith.constant 0 : i32
    %c0_i32_0 = arith.constant 0 : i32
    %c0_i32_1 = arith.constant 0 : i32
    %c0_i32_2 = arith.constant 0 : i32
    return %c0_i32, %c0_i32_0, %c0_i32_1 : i32, i32, i32
  }
  func.func @transform_23(%arg0: i32) -> (i32, i32, i32) {
    %c0_i32 = arith.constant 0 : i32
    %c0_i32_0 = arith.constant 0 : i32
    %c0_i32_1 = arith.constant 0 : i32
    %c0_i32_2 = arith.constant 0 : i32
    return %c0_i32, %c0_i32_0, %c0_i32_1 : i32, i32, i32
  }
  func.func @transform_24(%arg0: i32) -> (i32, i32, i32) {
    %c0_i32 = arith.constant 0 : i32
    %c0_i32_0 = arith.constant 0 : i32
    %c0_i32_1 = arith.constant 0 : i32
    return %arg0, %c0_i32, %c0_i32_0 : i32, i32, i32
  }
}

</mosaic_0001>

<llo_original>
// kernel: _decoder_forward_impl.1
$region0: #{_decoder_forward_impl.1}
  #allocation0 [shape = 'u32[]', space=smem, size = 0x4, offset = 0x4, fixed_abs, tag = 'smem constant byte address 0x4 - core index']
  #allocation1 [shape = 'u32[144,128]{1,0:T(1,128)}', space=vmem, size = 0x12000, scoped, tag = 'internal scratch']
  %s0 = inlined_call_operand.vmem [shape: f32[2,16,32], index: 0, kind: input, shape index: {}, may-alias: {0,24}]
  %s1 = inlined_call_operand.vmem [shape: f32[16,32], index: 1, kind: input, shape index: {}]
  %s2 = inlined_call_operand.vmem [shape: f32[2,16,16], index: 2, kind: input, shape index: {}]
  %s3 = inlined_call_operand.vmem [shape: f32[2,16,32], index: 3, kind: input, shape index: {}]
  %s4 = inlined_call_operand.vmem [shape: f32[1,64], index: 4, kind: input, shape index: {}]
  %s5 = inlined_call_operand.vmem [shape: f32[64,32], index: 5, kind: input, shape index: {}, may-alias: {5,6}]
  %s6 = inlined_call_operand.vmem [shape: f32[64,32], index: 6, kind: input, shape index: {}, may-alias: {5,6}]
  %s7 = inlined_call_operand.vmem [shape: f32[1,32], index: 7, kind: input, shape index: {}]
  %s8 = inlined_call_operand.vmem [shape: f32[1,32], index: 8, kind: input, shape index: {}]
  %s9 = inlined_call_operand.vmem [shape: bf16[2,32,96], index: 9, kind: input, shape index: {}]
  %s10 = inlined_call_operand.vmem [shape: bf16[2,32,32], index: 10, kind: input, shape index: {}]
  %s11 = inlined_call_operand.vmem [shape: f32[2,1,32], index: 11, kind: input, shape index: {}]
  %s12 = inlined_call_operand.vmem [shape: f32[2,1,32], index: 12, kind: input, shape index: {}]
  %s13 = inlined_call_operand.vmem [shape: bf16[2,32,32], index: 13, kind: input, shape index: {}]
  %s14 = inlined_call_operand.vmem [shape: bf16[2,32,64], index: 14, kind: input, shape index: {}]
  %s15 = inlined_call_operand.vmem [shape: bf16[2,32,32], index: 15, kind: input, shape index: {}]
  %s16 = inlined_call_operand.vmem [shape: f32[2,1,32], index: 16, kind: input, shape index: {}]
  %s17 = inlined_call_operand.vmem [shape: f32[2,1,32], index: 17, kind: input, shape index: {}]
  %s18 = inlined_call_operand.vmem [shape: bf16[2,32,64], index: 18, kind: input, shape index: {}]
  %s19 = inlined_call_operand.vmem [shape: f32[2,1,64], index: 19, kind: input, shape index: {}]
  %s20 = inlined_call_operand.vmem [shape: bf16[2,64,32], index: 20, kind: input, shape index: {}]
  %s21 = inlined_call_operand.vmem [shape: f32[2,1,32], index: 21, kind: input, shape index: {}]
  %s22 = inlined_call_operand.vmem [shape: f32[2,1,32], index: 22, kind: input, shape index: {}]
  %s23 = inlined_call_operand.vmem [shape: f32[2,1,32], index: 23, kind: input, shape index: {}]
  %s24 = inlined_call_operand.vmem [shape: f32[2,16,32], index: 24, kind: output, shape index: {}, may-alias: {0,24}]
  %s25 = sld [smem:[#allocation0]]
  $region129: #{_decoder_forward_impl.1} parent=0
    _
  %s27 = ssub.s32 1, %s25
  %s28 = scalar_select 0, %s27, %s25
  loop: start=0, step=1, limit=4
  $region2: #{_decoder_forward_impl.1} parent=0 // loop_pre_header
    _
  $region3: #{_decoder_forward_impl.1} parent=0 // loop_header
    %s30 = sphi 0, %s34
    %p31 = scmp.ge.s32.totalorder %s30, 4
    %s40 = sphi 0, %s42
    %s43 = sphi 0, %s40
    %s44 = sphi 0, %s43
    %s60 = sphi 0, %s44
    %s64 = sphi 0, %s64
    %s66 = sphi 0, %s64
    %s67 = sphi 0, %s66
    %s81 = sphi 0, %s67
    %s87 = sphi 0, %s89
    %s90 = sphi 0, %s87
    %s91 = sphi 0, %s90
    %s107 = sphi 0, %s91
    %s113 = sphi 0, %s115
    %s116 = sphi 0, %s113
    %s117 = sphi 0, %s116
    %s133 = sphi 0, %s117
    %s137 = sphi 0, %s137
    %s139 = sphi 0, %s137
    %s140 = sphi 0, %s139
    %s154 = sphi 0, %s140
    %s158 = sphi 0, %s158
    %s160 = sphi 0, %s158
    %s161 = sphi 0, %s160
    %s175 = sphi 0, %s161
    %s179 = sphi 0, %s179
    %s181 = sphi 0, %s179
    %s182 = sphi 0, %s181
    %s196 = sphi 0, %s182
    %s200 = sphi 0, %s200
    %s202 = sphi 0, %s200
    %s203 = sphi 0, %s202
    %s217 = sphi 0, %s203
    %s221 = sphi 0, %s221
    %s223 = sphi 0, %s221
    %s224 = sphi 0, %s223
    %s238 = sphi 0, %s224
    %s242 = sphi 0, %s242
    %s244 = sphi 0, %s242
    %s245 = sphi 0, %s244
    %s259 = sphi 0, %s245
    %s263 = sphi 0, %s263
    %s265 = sphi 0, %s263
    %s266 = sphi 0, %s265
    %s280 = sphi 0, %s266
    %s284 = sphi 0, %s284
    %s286 = sphi 0, %s284
    %s287 = sphi 0, %s286
    %s301 = sphi 0, %s287
    %s305 = sphi 0, %s305
    %s307 = sphi 0, %s305
    %s308 = sphi 0, %s307
    %s322 = sphi 0, %s308
    %s326 = sphi 0, %s326
    %s328 = sphi 0, %s326
    %s329 = sphi 0, %s328
    %s343 = sphi 0, %s329
    %s347 = sphi 0, %s347
    %s349 = sphi 0, %s347
    %s350 = sphi 0, %s349
    %s364 = sphi 0, %s350
    %s368 = sphi 0, %s368
    %s370 = sphi 0, %s368
    %s371 = sphi 0, %s370
    %s385 = sphi 0, %s371
    %s389 = sphi 0, %s389
    %s391 = sphi 0, %s389
    %s392 = sphi 0, %s391
    %s406 = sphi 0, %s392
    %s410 = sphi 0, %s410
    %s412 = sphi 0, %s410
    %s413 = sphi 0, %s412
    %s427 = sphi 0, %s413
    %s431 = sphi 0, %s431
    %s433 = sphi 0, %s431
    %s434 = sphi 0, %s433
    %s448 = sphi 0, %s434
    %s452 = sphi 0, %s452
    %s454 = sphi 0, %s452
    %s455 = sphi 0, %s454
    %s469 = sphi 0, %s455
    %s473 = sphi 0, %s473
    %s475 = sphi 0, %s473
    %s476 = sphi 0, %s475
    %s490 = sphi 0, %s476
    %s494 = sphi 0, %s494
    %s496 = sphi 0, %s494
    %s497 = sphi 0, %s496
    %s511 = sphi 0, %s497
    %s515 = sphi 0, %s515
    %s517 = sphi 0, %s515
    %s518 = sphi 0, %s517
    %s532 = sphi 0, %s518
    %s536 = sphi 0, %s536
    %s538 = sphi 0, %s536
    %s539 = sphi 0, %s538
    %s553 = sphi 0, %s539
    %s559 = sphi 0, %s561
    %s562 = sphi 0, %s559
    %s563 = sphi 0, %s562
    %s579 = sphi 0, %s563
  $region4: #{_decoder_forward_impl.1} parent=0 // loop_header_branch
    %33 = sbr.rel (%p31) target = $region8
  $region5: #{_decoder_forward_impl.1} parent=0 // loop_body
    %s35 = ssub.s32 %s30, 1
    %s36 = ssub.s32 %s30, 2
    %s37 = sadd.s32 %s30, 1
    %s38 = ssub.s32 %s30, %s37
    %p39 = scmp.eq.s32.totalorder %s38, 0
    %s41 = sadd.s32 %s40, 1
    %s42 = scalar_select %p39, %s40, %s41
    %p45 = pneg %p39
    %p46 = scmp.eq.s32.totalorder %s30, 1
    %p47 = por %p45, %p46
    %p48 = scmp.ne.s32.totalorder %s40, %s43
    %p49 = scmp.eq.s32.totalorder %s30, 0
    %p50 = por %p48, %p49
    %p51 = scmp.ne.s32.totalorder %s40, %s43
    %p52 = scmp.eq.s32.totalorder %s35, 1
    %p53 = por %p51, %p52
    %p54 = scmp.ne.s32.totalorder %s43, %s44
    %p55 = scmp.eq.s32.totalorder %s35, 0
    %p56 = por %p54, %p55
    %p57 = scmp.ne.s32.totalorder %s43, %s44
    %p58 = scmp.eq.s32.totalorder %s36, 1
    %p59 = por %p57, %p58
    %p61 = scmp.ne.s32.totalorder %s44, %s60
    %p62 = scmp.eq.s32.totalorder %s36, 0
    %p63 = por %p61, %p62
    %s65 = sadd.s32 %s64, 1
    %p68 = scmp.eq.s32.totalorder %s30, 1
    %p69 = scmp.ne.s32.totalorder %s64, %s66
    %p70 = scmp.eq.s32.totalorder %s30, 0
    %p71 = por %p69, %p70
    %p72 = scmp.ne.s32.totalorder %s64, %s66
    %p73 = scmp.eq.s32.totalorder %s35, 1
    %p74 = por %p72, %p73
    %p75 = scmp.ne.s32.totalorder %s66, %s67
    %p76 = scmp.eq.s32.totalorder %s35, 0
    %p77 = por %p75, %p76
    %p78 = scmp.ne.s32.totalorder %s66, %s67
    %p79 = scmp.eq.s32.totalorder %s36, 1
    %p80 = por %p78, %p79
    %p82 = scmp.ne.s32.totalorder %s67, %s81
    %p83 = scmp.eq.s32.totalorder %s36, 0
    %p84 = por %p82, %p83
    %s85 = ssub.s32 %s30, %s37
    %p86 = scmp.eq.s32.totalorder %s85, 0
    %s88 = sadd.s32 %s87, 1
    %s89 = scalar_select %p86, %s87, %s88
    %p92 = pneg %p86
    %p93 = scmp.eq.s32.totalorder %s30, 1
    %p94 = por %p92, %p93
    %p95 = scmp.ne.s32.totalorder %s87, %s90
    %p96 = scmp.eq.s32.totalorder %s30, 0
    %p97 = por %p95, %p96
    %p98 = scmp.ne.s32.totalorder %s87, %s90
    %p99 = scmp.eq.s32.totalorder %s35, 1
    %p100 = por %p98, %p99
    %p101 = scmp.ne.s32.totalorder %s90, %s91
    %p102 = scmp.eq.s32.totalorder %s35, 0
    %p103 = por %p101, %p102
    %p104 = scmp.ne.s32.totalorder %s90, %s91
    %p105 = scmp.eq.s32.totalorder %s36, 1
    %p106 = por %p104, %p105
    %p108 = scmp.ne.s32.totalorder %s91, %s107
    %p109 = scmp.eq.s32.totalorder %s36, 0
    %p110 = por %p108, %p109
    %s111 = ssub.s32 %s30, %s37
    %p112 = scmp.eq.s32.totalorder %s111, 0
    %s114 = sadd.s32 %s113, 1
    %s115 = scalar_select %p112, %s113, %s114
    %p118 = pneg %p112
    %p119 = scmp.eq.s32.totalorder %s30, 1
    %p120 = por %p118, %p119
    %p121 = scmp.ne.s32.totalorder %s113, %s116
    %p122 = scmp.eq.s32.totalorder %s30, 0
    %p123 = por %p121, %p122
    %p124 = scmp.ne.s32.totalorder %s113, %s116
    %p125 = scmp.eq.s32.totalorder %s35, 1
    %p126 = por %p124, %p125
    %p127 = scmp.ne.s32.totalorder %s116, %s117
    %p128 = scmp.eq.s32.totalorder %s35, 0
    %p129 = por %p127, %p128
    %p130 = scmp.ne.s32.totalorder %s116, %s117
    %p131 = scmp.eq.s32.totalorder %s36, 1
    %p132 = por %p130, %p131
    %p134 = scmp.ne.s32.totalorder %s117, %s133
    %p135 = scmp.eq.s32.totalorder %s36, 0
    %p136 = por %p134, %p135
    %s138 = sadd.s32 %s137, 1
    %p141 = scmp.eq.s32.totalorder %s30, 1
    %p142 = scmp.ne.s32.totalorder %s137, %s139
    %p143 = scmp.eq.s32.totalorder %s30, 0
    %p144 = por %p142, %p143
    %p145 = scmp.ne.s32.totalorder %s137, %s139
    %p146 = scmp.eq.s32.totalorder %s35, 1
    %p147 = por %p145, %p146
    %p148 = scmp.ne.s32.totalorder %s139, %s140
    %p149 = scmp.eq.s32.totalorder %s35, 0
    %p150 = por %p148, %p149
    %p151 = scmp.ne.s32.totalorder %s139, %s140
    %p152 = scmp.eq.s32.totalorder %s36, 1
    %p153 = por %p151, %p152
    %p155 = scmp.ne.s32.totalorder %s140, %s154
    %p156 = scmp.eq.s32.totalorder %s36, 0
    %p157 = por %p155, %p156
    %s159 = sadd.s32 %s158, 1
    %p162 = scmp.eq.s32.totalorder %s30, 1
    %p163 = scmp.ne.s32.totalorder %s158, %s160
    %p164 = scmp.eq.s32.totalorder %s30, 0
    %p165 = por %p163, %p164
    %p166 = scmp.ne.s32.totalorder %s158, %s160
    %p167 = scmp.eq.s32.totalorder %s35, 1
    %p168 = por %p166, %p167
    %p169 = scmp.ne.s32.totalorder %s160, %s161
    %p170 = scmp.eq.s32.totalorder %s35, 0
    %p171 = por %p169, %p170
    %p172 = scmp.ne.s32.totalorder %s160, %s161
    %p173 = scmp.eq.s32.totalorder %s36, 1
    %p174 = por %p172, %p173
    %p176 = scmp.ne.s32.totalorder %s161, %s175
    %p177 = scmp.eq.s32.totalorder %s36, 0
    %p178 = por %p176, %p177
    %s180 = sadd.s32 %s179, 1
    %p183 = scmp.eq.s32.totalorder %s30, 1
    %p184 = scmp.ne.s32.totalorder %s179, %s181
    %p185 = scmp.eq.s32.totalorder %s30, 0
    %p186 = por %p184, %p185
    %p187 = scmp.ne.s32.totalorder %s179, %s181
    %p188 = scmp.eq.s32.totalorder %s35, 1
    %p189 = por %p187, %p188
    %p190 = scmp.ne.s32.totalorder %s181, %s182
    %p191 = scmp.eq.s32.totalorder %s35, 0
    %p192 = por %p190, %p191
    %p193 = scmp.ne.s32.totalorder %s181, %s182
    %p194 = scmp.eq.s32.totalorder %s36, 1
    %p195 = por %p193, %p194
    %p197 = scmp.ne.s32.totalorder %s182, %s196
    %p198 = scmp.eq.s32.totalorder %s36, 0
    %p199 = por %p197, %p198
    %s201 = sadd.s32 %s200, 1
    %p204 = scmp.eq.s32.totalorder %s30, 1
    %p205 = scmp.ne.s32.totalorder %s200, %s202
    %p206 = scmp.eq.s32.totalorder %s30, 0
    %p207 = por %p205, %p206
    %p208 = scmp.ne.s32.totalorder %s200, %s202
    %p209 = scmp.eq.s32.totalorder %s35, 1
    %p210 = por %p208, %p209
    %p211 = scmp.ne.s32.totalorder %s202, %s203
    %p212 = scmp.eq.s32.totalorder %s35, 0
    %p213 = por %p211, %p212
    %p214 = scmp.ne.s32.totalorder %s202, %s203
    %p215 = scmp.eq.s32.totalorder %s36, 1
    %p216 = por %p214, %p215
    %p218 = scmp.ne.s32.totalorder %s203, %s217
    %p219 = scmp.eq.s32.totalorder %s36, 0
    %p220 = por %p218, %p219
    %s222 = sadd.s32 %s221, 1
    %p225 = scmp.eq.s32.totalorder %s30, 1
    %p226 = scmp.ne.s32.totalorder %s221, %s223
    %p227 = scmp.eq.s32.totalorder %s30, 0
    %p228 = por %p226, %p227
    %p229 = scmp.ne.s32.totalorder %s221, %s223
    %p230 = scmp.eq.s32.totalorder %s35, 1
    %p231 = por %p229, %p230
    %p232 = scmp.ne.s32.totalorder %s223, %s224
    %p233 = scmp.eq.s32.totalorder %s35, 0
    %p234 = por %p232, %p233
    %p235 = scmp.ne.s32.totalorder %s223, %s224
    %p236 = scmp.eq.s32.totalorder %s36, 1
    %p237 = por %p235, %p236
    %p239 = scmp.ne.s32.totalorder %s224, %s238
    %p240 = scmp.eq.s32.totalorder %s36, 0
    %p241 = por %p239, %p240
    %s243 = sadd.s32 %s242, 1
    %p246 = scmp.eq.s32.totalorder %s30, 1
    %p247 = scmp.ne.s32.totalorder %s242, %s244
    %p248 = scmp.eq.s32.totalorder %s30, 0
    %p249 = por %p247, %p248
    %p250 = scmp.ne.s32.totalorder %s242, %s244
    %p251 = scmp.eq.s32.totalorder %s35, 1
    %p252 = por %p250, %p251
    %p253 = scmp.ne.s32.totalorder %s244, %s245
    %p254 = scmp.eq.s32.totalorder %s35, 0
    %p255 = por %p253, %p254
    %p256 = scmp.ne.s32.totalorder %s244, %s245
    %p257 = scmp.eq.s32.totalorder %s36, 1
    %p258 = por %p256, %p257
    %p260 = scmp.ne.s32.totalorder %s245, %s259
    %p261 = scmp.eq.s32.totalorder %s36, 0
    %p262 = por %p260, %p261
    %s264 = sadd.s32 %s263, 1
    %p267 = scmp.eq.s32.totalorder %s30, 1
    %p268 = scmp.ne.s32.totalorder %s263, %s265
    %p269 = scmp.eq.s32.totalorder %s30, 0
    %p270 = por %p268, %p269
    %p271 = scmp.ne.s32.totalorder %s263, %s265
    %p272 = scmp.eq.s32.totalorder %s35, 1
    %p273 = por %p271, %p272
    %p274 = scmp.ne.s32.totalorder %s265, %s266
    %p275 = scmp.eq.s32.totalorder %s35, 0
    %p276 = por %p274, %p275
    %p277 = scmp.ne.s32.totalorder %s265, %s266
    %p278 = scmp.eq.s32.totalorder %s36, 1
    %p279 = por %p277, %p278
    %p281 = scmp.ne.s32.totalorder %s266, %s280
    %p282 = scmp.eq.s32.totalorder %s36, 0
    %p283 = por %p281, %p282
    %s285 = sadd.s32 %s284, 1
    %p288 = scmp.eq.s32.totalorder %s30, 1
    %p289 = scmp.ne.s32.totalorder %s284, %s286
    %p290 = scmp.eq.s32.totalorder %s30, 0
    %p291 = por %p289, %p290
    %p292 = scmp.ne.s32.totalorder %s284, %s286
    %p293 = scmp.eq.s32.totalorder %s35, 1
    %p294 = por %p292, %p293
    %p295 = scmp.ne.s32.totalorder %s286, %s287
    %p296 = scmp.eq.s32.totalorder %s35, 0
    %p297 = por %p295, %p296
    %p298 = scmp.ne.s32.totalorder %s286, %s287
    %p299 = scmp.eq.s32.totalorder %s36, 1
    %p300 = por %p298, %p299
    %p302 = scmp.ne.s32.totalorder %s287, %s301
    %p303 = scmp.eq.s32.totalorder %s36, 0
    %p304 = por %p302, %p303
    %s306 = sadd.s32 %s305, 1
    %p309 = scmp.eq.s32.totalorder %s30, 1
    %p310 = scmp.ne.s32.totalorder %s305, %s307
    %p311 = scmp.eq.s32.totalorder %s30, 0
    %p312 = por %p310, %p311
    %p313 = scmp.ne.s32.totalorder %s305, %s307
    %p314 = scmp.eq.s32.totalorder %s35, 1
    %p315 = por %p313, %p314
    %p316 = scmp.ne.s32.totalorder %s307, %s308
    %p317 = scmp.eq.s32.totalorder %s35, 0
    %p318 = por %p316, %p317
    %p319 = scmp.ne.s32.totalorder %s307, %s308
    %p320 = scmp.eq.s32.totalorder %s36, 1
    %p321 = por %p319, %p320
    %p323 = scmp.ne.s32.totalorder %s308, %s322
    %p324 = scmp.eq.s32.totalorder %s36, 0
    %p325 = por %p323, %p324
    %s327 = sadd.s32 %s326, 1
    %p330 = scmp.eq.s32.totalorder %s30, 1
    %p331 = scmp.ne.s32.totalorder %s326, %s328
    %p332 = scmp.eq.s32.totalorder %s30, 0
    %p333 = por %p331, %p332
    %p334 = scmp.ne.s32.totalorder %s326, %s328
    %p335 = scmp.eq.s32.totalorder %s35, 1
    %p336 = por %p334, %p335
    %p337 = scmp.ne.s32.totalorder %s328, %s329
    %p338 = scmp.eq.s32.totalorder %s35, 0
    %p339 = por %p337, %p338
    %p340 = scmp.ne.s32.totalorder %s328, %s329
    %p341 = scmp.eq.s32.totalorder %s36, 1
    %p342 = por %p340, %p341
    %p344 = scmp.ne.s32.totalorder %s329, %s343
    %p345 = scmp.eq.s32.totalorder %s36, 0
    %p346 = por %p344, %p345
    %s348 = sadd.s32 %s347, 1
    %p351 = scmp.eq.s32.totalorder %s30, 1
    %p352 = scmp.ne.s32.totalorder %s347, %s349
    %p353 = scmp.eq.s32.totalorder %s30, 0
    %p354 = por %p352, %p353
    %p355 = scmp.ne.s32.totalorder %s347, %s349
    %p356 = scmp.eq.s32.totalorder %s35, 1
    %p357 = por %p355, %p356
    %p358 = scmp.ne.s32.totalorder %s349, %s350
    %p359 = scmp.eq.s32.totalorder %s35, 0
    %p360 = por %p358, %p359
    %p361 = scmp.ne.s32.totalorder %s349, %s350
    %p362 = scmp.eq.s32.totalorder %s36, 1
    %p363 = por %p361, %p362
    %p365 = scmp.ne.s32.totalorder %s350, %s364
    %p366 = scmp.eq.s32.totalorder %s36, 0
    %p367 = por %p365, %p366
    %s369 = sadd.s32 %s368, 1
    %p372 = scmp.eq.s32.totalorder %s30, 1
    %p373 = scmp.ne.s32.totalorder %s368, %s370
    %p374 = scmp.eq.s32.totalorder %s30, 0
    %p375 = por %p373, %p374
    %p376 = scmp.ne.s32.totalorder %s368, %s370
    %p377 = scmp.eq.s32.totalorder %s35, 1
    %p378 = por %p376, %p377
    %p379 = scmp.ne.s32.totalorder %s370, %s371
    %p380 = scmp.eq.s32.totalorder %s35, 0
    %p381 = por %p379, %p380
    %p382 = scmp.ne.s32.totalorder %s370, %s371
    %p383 = scmp.eq.s32.totalorder %s36, 1
    %p384 = por %p382, %p383
    %p386 = scmp.ne.s32.totalorder %s371, %s385
    %p387 = scmp.eq.s32.totalorder %s36, 0
    %p388 = por %p386, %p387
    %s390 = sadd.s32 %s389, 1
    %p393 = scmp.eq.s32.totalorder %s30, 1
    %p394 = scmp.ne.s32.totalorder %s389, %s391
    %p395 = scmp.eq.s32.totalorder %s30, 0
    %p396 = por %p394, %p395
    %p397 = scmp.ne.s32.totalorder %s389, %s391
    %p398 = scmp.eq.s32.totalorder %s35, 1
    %p399 = por %p397, %p398
    %p400 = scmp.ne.s32.totalorder %s391, %s392
    %p401 = scmp.eq.s32.totalorder %s35, 0
    %p402 = por %p400, %p401
    %p403 = scmp.ne.s32.totalorder %s391, %s392
    %p404 = scmp.eq.s32.totalorder %s36, 1
    %p405 = por %p403, %p404
    %p407 = scmp.ne.s32.totalorder %s392, %s406
    %p408 = scmp.eq.s32.totalorder %s36, 0
    %p409 = por %p407, %p408
    %s411 = sadd.s32 %s410, 1
    %p414 = scmp.eq.s32.totalorder %s30, 1
    %p415 = scmp.ne.s32.totalorder %s410, %s412
    %p416 = scmp.eq.s32.totalorder %s30, 0
    %p417 = por %p415, %p416
    %p418 = scmp.ne.s32.totalorder %s410, %s412
    %p419 = scmp.eq.s32.totalorder %s35, 1
    %p420 = por %p418, %p419
    %p421 = scmp.ne.s32.totalorder %s412, %s413
    %p422 = scmp.eq.s32.totalorder %s35, 0
    %p423 = por %p421, %p422
    %p424 = scmp.ne.s32.totalorder %s412, %s413
    %p425 = scmp.eq.s32.totalorder %s36, 1
    %p426 = por %p424, %p425
    %p428 = scmp.ne.s32.totalorder %s413, %s427
    %p429 = scmp.eq.s32.totalorder %s36, 0
    %p430 = por %p428, %p429
    %s432 = sadd.s32 %s431, 1
    %p435 = scmp.eq.s32.totalorder %s30, 1
    %p436 = scmp.ne.s32.totalorder %s431, %s433
    %p437 = scmp.eq.s32.totalorder %s30, 0
    %p438 = por %p436, %p437
    %p439 = scmp.ne.s32.totalorder %s431, %s433
    %p440 = scmp.eq.s32.totalorder %s35, 1
    %p441 = por %p439, %p440
    %p442 = scmp.ne.s32.totalorder %s433, %s434
    %p443 = scmp.eq.s32.totalorder %s35, 0
    %p444 = por %p442, %p443
    %p445 = scmp.ne.s32.totalorder %s433, %s434
    %p446 = scmp.eq.s32.totalorder %s36, 1
    %p447 = por %p445, %p446
    %p449 = scmp.ne.s32.totalorder %s434, %s448
    %p450 = scmp.eq.s32.totalorder %s36, 0
    %p451 = por %p449, %p450
    %s453 = sadd.s32 %s452, 1
    %p456 = scmp.eq.s32.totalorder %s30, 1
    %p457 = scmp.ne.s32.totalorder %s452, %s454
    %p458 = scmp.eq.s32.totalorder %s30, 0
    %p459 = por %p457, %p458
    %p460 = scmp.ne.s32.totalorder %s452, %s454
    %p461 = scmp.eq.s32.totalorder %s35, 1
    %p462 = por %p460, %p461
    %p463 = scmp.ne.s32.totalorder %s454, %s455
    %p464 = scmp.eq.s32.totalorder %s35, 0
    %p465 = por %p463, %p464
    %p466 = scmp.ne.s32.totalorder %s454, %s455
    %p467 = scmp.eq.s32.totalorder %s36, 1
    %p468 = por %p466, %p467
    %p470 = scmp.ne.s32.totalorder %s455, %s469
    %p471 = scmp.eq.s32.totalorder %s36, 0
    %p472 = por %p470, %p471
    %s474 = sadd.s32 %s473, 1
    %p477 = scmp.eq.s32.totalorder %s30, 1
    %p478 = scmp.ne.s32.totalorder %s473, %s475
    %p479 = scmp.eq.s32.totalorder %s30, 0
    %p480 = por %p478, %p479
    %p481 = scmp.ne.s32.totalorder %s473, %s475
    %p482 = scmp.eq.s32.totalorder %s35, 1
    %p483 = por %p481, %p482
    %p484 = scmp.ne.s32.totalorder %s475, %s476
    %p485 = scmp.eq.s32.totalorder %s35, 0
    %p486 = por %p484, %p485
    %p487 = scmp.ne.s32.totalorder %s475, %s476
    %p488 = scmp.eq.s32.totalorder %s36, 1
    %p489 = por %p487, %p488
    %p491 = scmp.ne.s32.totalorder %s476, %s490
    %p492 = scmp.eq.s32.totalorder %s36, 0
    %p493 = por %p491, %p492
    %s495 = sadd.s32 %s494, 1
    %p498 = scmp.eq.s32.totalorder %s30, 1
    %p499 = scmp.ne.s32.totalorder %s494, %s496
    %p500 = scmp.eq.s32.totalorder %s30, 0
    %p501 = por %p499, %p500
    %p502 = scmp.ne.s32.totalorder %s494, %s496
    %p503 = scmp.eq.s32.totalorder %s35, 1
    %p504 = por %p502, %p503
    %p505 = scmp.ne.s32.totalorder %s496, %s497
    %p506 = scmp.eq.s32.totalorder %s35, 0
    %p507 = por %p505, %p506
    %p508 = scmp.ne.s32.totalorder %s496, %s497
    %p509 = scmp.eq.s32.totalorder %s36, 1
    %p510 = por %p508, %p509
    %p512 = scmp.ne.s32.totalorder %s497, %s511
    %p513 = scmp.eq.s32.totalorder %s36, 0
    %p514 = por %p512, %p513
    %s516 = sadd.s32 %s515, 1
    %p519 = scmp.eq.s32.totalorder %s30, 1
    %p520 = scmp.ne.s32.totalorder %s515, %s517
    %p521 = scmp.eq.s32.totalorder %s30, 0
    %p522 = por %p520, %p521
    %p523 = scmp.ne.s32.totalorder %s515, %s517
    %p524 = scmp.eq.s32.totalorder %s35, 1
    %p525 = por %p523, %p524
    %p526 = scmp.ne.s32.totalorder %s517, %s518
    %p527 = scmp.eq.s32.totalorder %s35, 0
    %p528 = por %p526, %p527
    %p529 = scmp.ne.s32.totalorder %s517, %s518
    %p530 = scmp.eq.s32.totalorder %s36, 1
    %p531 = por %p529, %p530
    %p533 = scmp.ne.s32.totalorder %s518, %s532
    %p534 = scmp.eq.s32.totalorder %s36, 0
    %p535 = por %p533, %p534
    %s537 = sadd.s32 %s536, 1
    %p540 = scmp.eq.s32.totalorder %s30, 1
    %p541 = scmp.ne.s32.totalorder %s536, %s538
    %p542 = scmp.eq.s32.totalorder %s30, 0
    %p543 = por %p541, %p542
    %p544 = scmp.ne.s32.totalorder %s536, %s538
    %p545 = scmp.eq.s32.totalorder %s35, 1
    %p546 = por %p544, %p545
    %p547 = scmp.ne.s32.totalorder %s538, %s539
    %p548 = scmp.eq.s32.totalorder %s35, 0
    %p549 = por %p547, %p548
    %p550 = scmp.ne.s32.totalorder %s538, %s539
    %p551 = scmp.eq.s32.totalorder %s36, 1
    %p552 = por %p550, %p551
    %p554 = scmp.ne.s32.totalorder %s539, %s553
    %p555 = scmp.eq.s32.totalorder %s36, 0
    %p556 = por %p554, %p555
    %s557 = ssub.s32 %s30, %s37
    %p558 = scmp.eq.s32.totalorder %s557, 0
    %s560 = sadd.s32 %s559, 1
    %s561 = scalar_select %p558, %s559, %s560
    %p564 = pneg %p558
    %p565 = scmp.eq.s32.totalorder %s30, 1
    %p566 = por %p564, %p565
    %p567 = scmp.ne.s32.totalorder %s559, %s562
    %p568 = scmp.eq.s32.totalorder %s30, 0
    %p569 = por %p567, %p568
    %p570 = scmp.ne.s32.totalorder %s559, %s562
    %p571 = scmp.eq.s32.totalorder %s35, 1
    %p572 = por %p570, %p571
    %p573 = scmp.ne.s32.totalorder %s562, %s563
    %p574 = scmp.eq.s32.totalorder %s35, 0
    %p575 = por %p573, %p574
    %p576 = scmp.ne.s32.totalorder %s562, %s563
    %p577 = scmp.eq.s32.totalorder %s36, 1
    %p578 = por %p576, %p577
    %p580 = scmp.ne.s32.totalorder %s563, %s579
    %p581 = scmp.eq.s32.totalorder %s36, 0
    %p582 = por %p580, %p581
    %p583 = scmp.le.s32.totalorder 1, %s30
    %p584 = scmp.lt.s32.totalorder %s30, 3
    %p585 = pnand %p583, %p584
    %p586 = pneg %p585
    // Predicated region
    $region9: #{_decoder_forward_impl.1} parent=5 // pred_check
      _
    $region10: #{_decoder_forward_impl.1} parent=5 // pred_check_branch
      %588 = sbr.rel (%p585) target = $region12
    $region11: #{_decoder_forward_impl.1} parent=5 // pred_region
      %s589 = ssub.s32 %s30, 1
      // Predicated region
      $region13: #{_decoder_forward_impl.1} parent=11 // pred_check
        %p590 = pneg %p77
      $region14: #{_decoder_forward_impl.1} parent=11 // pred_check_branch
        %592 = sbr.rel (%p590) target = $region16
      $region15: #{_decoder_forward_impl.1} parent=11 // pred_region
        _
      $region16: #{_decoder_forward_impl.1} parent=11 // pred_fallthru
        _
      // Predicated region
      $region17: #{_decoder_forward_impl.1} parent=11 // pred_check
        %p593 = pneg %p150
      $region18: #{_decoder_forward_impl.1} parent=11 // pred_check_branch
        %595 = sbr.rel (%p593) target = $region20
      $region19: #{_decoder_forward_impl.1} parent=11 // pred_region
        _
      $region20: #{_decoder_forward_impl.1} parent=11 // pred_fallthru
        _
      // Predicated region
      $region21: #{_decoder_forward_impl.1} parent=11 // pred_check
        %p596 = pneg %p171
      $region22: #{_decoder_forward_impl.1} parent=11 // pred_check_branch
        %598 = sbr.rel (%p596) target = $region24
      $region23: #{_decoder_forward_impl.1} parent=11 // pred_region
        _
      $region24: #{_decoder_forward_impl.1} parent=11 // pred_fallthru
        _
      // Predicated region
      $region25: #{_decoder_forward_impl.1} parent=11 // pred_check
        %p599 = pneg %p192
      $region26: #{_decoder_forward_impl.1} parent=11 // pred_check_branch
        %601 = sbr.rel (%p599) target = $region28
      $region27: #{_decoder_forward_impl.1} parent=11 // pred_region
        _
      $region28: #{_decoder_forward_impl.1} parent=11 // pred_fallthru
        _
      // Predicated region
      $region29: #{_decoder_forward_impl.1} parent=11 // pred_check
        %p602 = pneg %p213
      $region30: #{_decoder_forward_impl.1} parent=11 // pred_check_branch
        %604 = sbr.rel (%p602) target = $region32
      $region31: #{_decoder_forward_impl.1} parent=11 // pred_region
        _
      $region32: #{_decoder_forward_impl.1} parent=11 // pred_fallthru
        _
      // Predicated region
      $region33: #{_decoder_forward_impl.1} parent=11 // pred_check
        %p605 = pneg %p234
      $region34: #{_decoder_forward_impl.1} parent=11 // pred_check_branch
        %607 = sbr.rel (%p605) target = $region36
      $region35: #{_decoder_forward_impl.1} parent=11 // pred_region
        _
      $region36: #{_decoder_forward_impl.1} parent=11 // pred_fallthru
        _
      // Predicated region
      $region37: #{_decoder_forward_impl.1} parent=11 // pred_check
        %p608 = pneg %p255
      $region38: #{_decoder_forward_impl.1} parent=11 // pred_check_branch
        %610 = sbr.rel (%p608) target = $region40
      $region39: #{_decoder_forward_impl.1} parent=11 // pred_region
        _
      $region40: #{_decoder_forward_impl.1} parent=11 // pred_fallthru
        _
      // Predicated region
      $region41: #{_decoder_forward_impl.1} parent=11 // pred_check
        %p611 = pneg %p276
      $region42: #{_decoder_forward_impl.1} parent=11 // pred_check_branch
        %613 = sbr.rel (%p611) target = $region44
      $region43: #{_decoder_forward_impl.1} parent=11 // pred_region
        _
      $region44: #{_decoder_forward_impl.1} parent=11 // pred_fallthru
        _
      // Predicated region
      $region45: #{_decoder_forward_impl.1} parent=11 // pred_check
        %p614 = pneg %p297
      $region46: #{_decoder_forward_impl.1} parent=11 // pred_check_branch
        %616 = sbr.rel (%p614) target = $region48
      $region47: #{_decoder_forward_impl.1} parent=11 // pred_region
        _
      $region48: #{_decoder_forward_impl.1} parent=11 // pred_fallthru
        _
      // Predicated region
      $region49: #{_decoder_forward_impl.1} parent=11 // pred_check
        %p617 = pneg %p318
      $region50: #{_decoder_forward_impl.1} parent=11 // pred_check_branch
        %619 = sbr.rel (%p617) target = $region52
      $region51: #{_decoder_forward_impl.1} parent=11 // pred_region
        _
      $region52: #{_decoder_forward_impl.1} parent=11 // pred_fallthru
        _
      // Predicated region
      $region53: #{_decoder_forward_impl.1} parent=11 // pred_check
        %p620 = pneg %p339
      $region54: #{_decoder_forward_impl.1} parent=11 // pred_check_branch
        %622 = sbr.rel (%p620) target = $region56
      $region55: #{_decoder_forward_impl.1} parent=11 // pred_region
        _
      $region56: #{_decoder_forward_impl.1} parent=11 // pred_fallthru
        _
      // Predicated region
      $region57: #{_decoder_forward_impl.1} parent=11 // pred_check
        %p623 = pneg %p360
      $region58: #{_decoder_forward_impl.1} parent=11 // pred_check_branch
        %625 = sbr.rel (%p623) target = $region60
      $region59: #{_decoder_forward_impl.1} parent=11 // pred_region
        _
      $region60: #{_decoder_forward_impl.1} parent=11 // pred_fallthru
        _
      // Predicated region
      $region61: #{_decoder_forward_impl.1} parent=11 // pred_check
        %p626 = pneg %p381
      $region62: #{_decoder_forward_impl.1} parent=11 // pred_check_branch
        %628 = sbr.rel (%p626) target = $region64
      $region63: #{_decoder_forward_impl.1} parent=11 // pred_region
        _
      $region64: #{_decoder_forward_impl.1} parent=11 // pred_fallthru
        _
      // Predicated region
      $region65: #{_decoder_forward_impl.1} parent=11 // pred_check
        %p629 = pneg %p402
      $region66: #{_decoder_forward_impl.1} parent=11 // pred_check_branch
        %631 = sbr.rel (%p629) target = $region68
      $region67: #{_decoder_forward_impl.1} parent=11 // pred_region
        _
      $region68: #{_decoder_forward_impl.1} parent=11 // pred_fallthru
        _
      // Predicated region
      $region69: #{_decoder_forward_impl.1} parent=11 // pred_check
        %p632 = pneg %p423
      $region70: #{_decoder_forward_impl.1} parent=11 // pred_check_branch
        %634 = sbr.rel (%p632) target = $region72
      $region71: #{_decoder_forward_impl.1} parent=11 // pred_region
        _
      $region72: #{_decoder_forward_impl.1} parent=11 // pred_fallthru
        _
      // Predicated region
      $region73: #{_decoder_forward_impl.1} parent=11 // pred_check
        %p635 = pneg %p444
      $region74: #{_decoder_forward_impl.1} parent=11 // pred_check_branch
        %637 = sbr.rel (%p635) target = $region76
      $region75: #{_decoder_forward_impl.1} parent=11 // pred_region
        _
      $region76: #{_decoder_forward_impl.1} parent=11 // pred_fallthru
        _
      // Predicated region
      $region77: #{_decoder_forward_impl.1} parent=11 // pred_check
        %p638 = pneg %p465
      $region78: #{_decoder_forward_impl.1} parent=11 // pred_check_branch
        %640 = sbr.rel (%p638) target = $region80
      $region79: #{_decoder_forward_impl.1} parent=11 // pred_region
        _
      $region80: #{_decoder_forward_impl.1} parent=11 // pred_fallthru
        _
      // Predicated region
      $region81: #{_decoder_forward_impl.1} parent=11 // pred_check
        %p641 = pneg %p486
      $region82: #{_decoder_forward_impl.1} parent=11 // pred_check_branch
        %643 = sbr.rel (%p641) target = $region84
      $region83: #{_decoder_forward_impl.1} parent=11 // pred_region
        _
      $region84: #{_decoder_forward_impl.1} parent=11 // pred_fallthru
        _
      // Predicated region
      $region85: #{_decoder_forward_impl.1} parent=11 // pred_check
        %p644 = pneg %p507
      $region86: #{_decoder_forward_impl.1} parent=11 // pred_check_branch
        %646 = sbr.rel (%p644) target = $region88
      $region87: #{_decoder_forward_impl.1} parent=11 // pred_region
        _
      $region88: #{_decoder_forward_impl.1} parent=11 // pred_fallthru
        _
      // Predicated region
      $region89: #{_decoder_forward_impl.1} parent=11 // pred_check
        %p647 = pneg %p528
      $region90: #{_decoder_forward_impl.1} parent=11 // pred_check_branch
        %649 = sbr.rel (%p647) target = $region92
      $region91: #{_decoder_forward_impl.1} parent=11 // pred_region
        _
      $region92: #{_decoder_forward_impl.1} parent=11 // pred_fallthru
        _
      // Predicated region
      $region93: #{_decoder_forward_impl.1} parent=11 // pred_check
        %p650 = pneg %p549
      $region94: #{_decoder_forward_impl.1} parent=11 // pred_check_branch
        %652 = sbr.rel (%p650) target = $region96
      $region95: #{_decoder_forward_impl.1} parent=11 // pred_region
        _
      $region96: #{_decoder_forward_impl.1} parent=11 // pred_fallthru
        _
    $region12: #{_decoder_forward_impl.1} parent=5 // pred_fallthru
      _
    %p653 = scmp.lt.s32.totalorder %s30, 2
    // Predicated region
    $region97: #{_decoder_forward_impl.1} parent=5 // pred_check
      %p654 = pneg %p653
    $region98: #{_decoder_forward_impl.1} parent=5 // pred_check_branch
      %656 = sbr.rel (%p654) target = $region100
    $region99: #{_decoder_forward_impl.1} parent=5 // pred_region
      // Predicated region
      $region101: #{_decoder_forward_impl.1} parent=99 // pred_check
        %p657 = pneg %p50
      $region102: #{_decoder_forward_impl.1} parent=99 // pred_check_branch
        %659 = sbr.rel (%p657) target = $region104
      $region103: #{_decoder_forward_impl.1} parent=99 // pred_region
        %p660 = scmp.lt.s32.totalorder %s30, 1
        %s661 = scalar_select %p660, %s30, 1
        %s662 = smul.addr %s661, 2
        %s663 = smul.addr %s662, 8
        %s664 = scalar_lea.vmem %s0, %s663
      $region104: #{_decoder_forward_impl.1} parent=99 // pred_fallthru
        _
      // Predicated region
      $region105: #{_decoder_forward_impl.1} parent=99 // pred_check
        %p665 = pneg %p97
      $region106: #{_decoder_forward_impl.1} parent=99 // pred_check_branch
        %667 = sbr.rel (%p665) target = $region108
      $region107: #{_decoder_forward_impl.1} parent=99 // pred_region
        %p668 = scmp.lt.s32.totalorder %s30, 1
        %s669 = scalar_select %p668, %s30, 1
        %s670 = smul.addr %s669, 2
        %s671 = smul.addr %s670, 8
        %s672 = scalar_lea.vmem %s2, %s671
      $region108: #{_decoder_forward_impl.1} parent=99 // pred_fallthru
        _
      // Predicated region
      $region109: #{_decoder_forward_impl.1} parent=99 // pred_check
        %p673 = pneg %p123
      $region110: #{_decoder_forward_impl.1} parent=99 // pred_check_branch
        %675 = sbr.rel (%p673) target = $region112
      $region111: #{_decoder_forward_impl.1} parent=99 // pred_region
        %p676 = scmp.lt.s32.totalorder %s30, 1
        %s677 = scalar_select %p676, %s30, 1
        %s678 = smul.addr %s677, 2
        %s679 = smul.addr %s678, 8
        %s680 = scalar_lea.vmem %s3, %s679
      $region112: #{_decoder_forward_impl.1} parent=99 // pred_fallthru
        _
    $region100: #{_decoder_forward_impl.1} parent=5 // pred_fallthru
      _
    %p681 = scmp.le.s32.totalorder 1, %s30
    %p682 = scmp.lt.s32.totalorder %s30, 3
    %p683 = pnand %p681, %p682
    %p684 = pneg %p683
    // Predicated region
    $region113: #{_decoder_forward_impl.1} parent=5 // pred_check
      _
    $region114: #{_decoder_forward_impl.1} parent=5 // pred_check_branch
      %686 = sbr.rel (%p683) target = $region116
    $region115: #{_decoder_forward_impl.1} parent=5 // pred_region
      %s687 = ssub.s32 %s30, 1
      %p688 = scmp.lt.s32.totalorder %s35, 1
      %s689 = scalar_select %p688, %s35, 1
      %s690 = smul.addr %s689, 2
      %s691 = smul.addr %s690, 8
      %s692 = scalar_lea.vmem %s0, %s691
      %p693 = pneg %p56
      %p694 = pneg %p53
      %p695 = pneg %p77
      %p696 = pneg %p74
      %p697 = scmp.lt.s32.totalorder %s35, 1
      %s698 = scalar_select %p697, %s35, 1
      %s699 = smul.addr %s698, 2
      %s700 = smul.addr %s699, 8
      %s701 = scalar_lea.vmem %s2, %s700
      %p702 = pneg %p103
      %p703 = pneg %p100
      %p704 = scmp.lt.s32.totalorder %s35, 1
      %s705 = scalar_select %p704, %s35, 1
      %s706 = smul.addr %s705, 2
      %s707 = smul.addr %s706, 8
      %s708 = scalar_lea.vmem %s3, %s707
      %p709 = pneg %p129
      %p710 = pneg %p126
      %p711 = pneg %p150
      %p712 = pneg %p147
      %p713 = pneg %p171
      %p714 = pneg %p168
      %p715 = pneg %p192
      %p716 = pneg %p189
      %p717 = pneg %p213
      %p718 = pneg %p210
      %p719 = pneg %p234
      %p720 = pneg %p231
      %p721 = pneg %p255
      %p722 = pneg %p252
      %p723 = pneg %p276
      %p724 = pneg %p273
      %p725 = pneg %p297
      %p726 = pneg %p294
      %p727 = pneg %p318
      %p728 = pneg %p315
      %p729 = pneg %p339
      %p730 = pneg %p336
      %p731 = pneg %p360
      %p732 = pneg %p357
      %p733 = pneg %p381
      %p734 = pneg %p378
      %p735 = pneg %p402
      %p736 = pneg %p399
      %p737 = pneg %p423
      %p738 = pneg %p420
      %p739 = pneg %p444
      %p740 = pneg %p441
      %p741 = pneg %p465
      %p742 = pneg %p462
      %p743 = pneg %p486
      %p744 = pneg %p483
      %p745 = pneg %p507
      %p746 = pneg %p504
      %p747 = pneg %p528
      %p748 = pneg %p525
      %p749 = pneg %p549
      %p750 = pneg %p546
      %p751 = pneg %p575
      %p752 = pneg %p572
      %p753 = scmp.lt.s32.totalorder %s35, 1
      %s754 = scalar_select %p753, %s35, 1
      %s755 = smul.addr %s754, 2
      %s756 = smul.addr %s755, 8
      %s757 = scalar_lea.vmem %s24, %s756
      %p758 = scmp.lt.s32.totalorder %s35, 1
      %s759 = scalar_select %p758, %s35, 1
      %s760 = smul.addr %s759, 2
      %s761 = smul.addr %s760, 8
      %s762 = scalar_lea.vmem %s0, %s761
      %p763 = scmp.lt.s32.totalorder %s35, 1
      %s764 = scalar_select %p763, %s35, 1
      %s765 = smul.addr %s764, 2
      %s766 = smul.addr %s765, 8
      %s767 = scalar_lea.vmem %s2, %s766
      %p768 = scmp.lt.s32.totalorder %s35, 1
      %s769 = scalar_select %p768, %s35, 1
      %s770 = smul.addr %s769, 2
      %s771 = smul.addr %s770, 8
      %s772 = scalar_lea.vmem %s3, %s771
      %p773 = scmp.lt.s32.totalorder %s35, 1
      %s774 = scalar_select %p773, %s35, 1
      %s775 = smul.addr %s774, 2
      %s776 = smul.addr %s775, 8
      %s777 = scalar_lea.vmem %s24, %s776
      %v779 = vld [vmem:[%s762] sm:$0xff]
      %v780 = vld [vmem:[%s762 + $0x8] sm:$0xff]
      %v781 = vld [vmem:[%s1] sm:$0xff]
      %v782 = vld [vmem:[%s1 + $0x8] sm:$0xff]
      %v783 = vadd.f32 %v779, %v781
      %v784 = vadd.f32 %v780, %v782
      %v785 = vld [vmem:[%s7] sm:$0x1]
      %v786 = vld [vmem:[%s8] sm:$0x1]
      %vm787 = vcmask 261120
      %v788 = vsel %vm787, %v783, 0.0
      %789 = vadd.xlane.f32.xlu0 %v788
      %v790 = vpop.xlane.xlu0 %789
      %v791 = vsel %vm787, %v784, 0.0
      %792 = vadd.xlane.f32.xlu0 %v791
      %v793 = vpop.xlane.xlu0 %792
      %v794 = vrcp.pop 32.0
      %v795 = vmul.f32 %v790, %v794
      %v796 = vmul.f32 %v793, %v794
      %v797 = vsub.f32 %v783, %v795
      %v798 = vsub.f32 %v784, %v796
      %v799 = vmul.f32 %v797, %v797
      %v800 = vmul.f32 %v798, %v798
      %v801 = vsel %vm787, %v799, 0.0
      %802 = vadd.xlane.f32.xlu0 %v801
      %v803 = vpop.xlane.xlu0 %802
      %v804 = vsel %vm787, %v800, 0.0
      %805 = vadd.xlane.f32.xlu0 %v804
      %v806 = vpop.xlane.xlu0 %805
      %v807 = vmul.f32 %v803, %v794
      %v808 = vmul.f32 %v806, %v794
      %v809 = vadd.f32 %v807, 1e-06
      %v810 = vadd.f32 %v808, 1e-06
      %v811 = vrsqrt.pop %v809
      %v812 = vrsqrt.pop %v810
      %v813 = vmul.f32 %v797, %v811
      %v814 = vmul.f32 %v798, %v812
      %v816 = vlaneseq
      %v817 = vshrl.u32 %v816, 7
      %v818 = vsub.s32 0, %v817
      %v819 = vrot.slane %v785, %v818
      %v821 = vmul.f32 %v813, %v819
      %v822 = vmul.f32 %v814, %v819
      %v824 = vlaneseq
      %v825 = vshrl.u32 %v824, 7
      %v826 = vsub.s32 0, %v825
      %v827 = vrot.slane %v786, %v826
      %v829 = vadd.f32 %v821, %v827
      %v830 = vadd.f32 %v822, %v827
      %v831 = vld [vmem:[%s772] sm:$0xff]
      %v832 = vld [vmem:[%s772 + $0x8] sm:$0xff]
      %v833 = vpack.c.bf16 %v832, %v831
      %v834 = vld [vmem:[%s5] sm:$0xff]
      %v835 = vld [vmem:[%s5 + $0x8] sm:$0xff]
      %v836 = vld [vmem:[%s5 + $0x10] sm:$0xff]
      %v837 = vld [vmem:[%s5 + $0x18] sm:$0xff]
      %v838 = vld [vmem:[%s5 + $0x20] sm:$0xff]
      %v839 = vld [vmem:[%s5 + $0x28] sm:$0xff]
      %v840 = vld [vmem:[%s5 + $0x30] sm:$0xff]
      %v841 = vld [vmem:[%s5 + $0x38] sm:$0xff]
      %v842 = vld [vmem:[%s6] sm:$0xff]
      %v843 = vld [vmem:[%s6 + $0x8] sm:$0xff]
      %v844 = vld [vmem:[%s6 + $0x10] sm:$0xff]
      %v845 = vld [vmem:[%s6 + $0x18] sm:$0xff]
      %v846 = vld [vmem:[%s6 + $0x20] sm:$0xff]
      %v847 = vld [vmem:[%s6 + $0x28] sm:$0xff]
      %v848 = vld [vmem:[%s6 + $0x30] sm:$0xff]
      %v849 = vld [vmem:[%s6 + $0x38] sm:$0xff]
      %v850 = vpack.c.bf16 %v835, %v834
      %v851 = vpack.c.bf16 %v837, %v836
      %v852 = vpack.c.bf16 %v839, %v838
      %v853 = vpack.c.bf16 %v841, %v840
      %v854 = vpack.c.bf16 %v843, %v842
      %v855 = vpack.c.bf16 %v845, %v844
      %v856 = vpack.c.bf16 %v847, %v846
      %v857 = vpack.c.bf16 %v849, %v848
      %v858 = vld [vmem:[%s767] sm:$0xff]
      %v859 = vld [vmem:[%s767 + $0x8] sm:$0xff]
      %862 = vrot.lane.b32.xlu0 %v858, 16
      %v863 = vpop.permute.xlu0 %862
      %864 = vrot.lane.b32.xlu0 %v859, 16
      %v865 = vpop.permute.xlu0 %864
      %868 = vrot.lane.b32.xlu0 %v858, 32
      %v869 = vpop.permute.xlu0 %868
      %870 = vrot.lane.b32.xlu0 %v859, 32
      %v871 = vpop.permute.xlu0 %870
      %874 = vrot.lane.b32.xlu0 %v858, 48
      %v875 = vpop.permute.xlu0 %874
      %876 = vrot.lane.b32.xlu0 %v859, 48
      %v877 = vpop.permute.xlu0 %876
      %vm880 = vcmask 130048
      %v881 = vsel %vm880, %v858, %v863
      %v882 = vsel %vm880, %v859, %v865
      %v883 = vsel %vm787, %v881, %v869
      %v884 = vsel %vm787, %v882, %v871
      %vm885 = vcmask 392192
      %v886 = vsel %vm885, %v883, %v875
      %v887 = vsel %vm885, %v884, %v877
      %v888 = vld [vmem:[%s4] sm:$0x1]
      %v889 = vpack.c.bf16 %v830, %v829
      %v890 = vld [vmem:[%s9] sm:$0xf]
      %v891 = vld [vmem:[%s9 + $0x4] sm:$0xf]
      %v892 = vld [vmem:[%s9 + $0x8] sm:$0xf]
      %v893 = vld [vmem:[%s9 + $0xc] sm:$0xf]
      %v898 = vunpack.c.l.b16 %v890
      %v899 = vunpack.c.l.b16 %v891
      %v900 = vunpack.c.l.b16 %v892
      %v901 = vunpack.c.l.b16 %v893
      %v902 = vpack.c.b16 %v899, %v898
      %v903 = vpack.c.b16 %v901, %v900
      %v907 = vsel %vm787, %v889, 0
      %909 = vmatprep.subr.bf16.mxu0 0
      %910 = vmatpush1.bf16.msra.mxu0 %v902
      %911 = vmatprep.subr.bf16.mxu0 0
      %912 = vmatpush1.bf16.msra.mxu0 %v903
      %913 = vmatprep.subr.bf16.mxu0 0
      %914 = vmatpush1.bf16.msra.mxu0 0
      %915 = vmatprep.subr.bf16.mxu0 0
      %916 = vmatpush1.bf16.msra.mxu0 0
      %917 = vmatprep.subr.bf16.mxu0 0
      %918 = vmatpush1.bf16.msra.mxu0 0
      %919 = vmatprep.subr.bf16.mxu0 0
      %920 = vmatpush1.bf16.msra.mxu0 0
      %921 = vmatprep.subr.bf16.mxu0 0
      %922 = vmatpush1.bf16.msra.mxu0 0
      %923 = vmatprep.subr.bf16.mxu0 0
      %924 = vmatpush1.bf16.msra.mxu0 0
      %925 = vmatprep.subr.bf16.mxu0 0
      %926 = vmatpush1.bf16.msra.mxu0 0
      %927 = vmatprep.subr.bf16.mxu0 0
      %928 = vmatpush1.bf16.msra.mxu0 0
      %929 = vmatprep.subr.bf16.mxu0 0
      %930 = vmatpush1.bf16.msra.mxu0 0
      %931 = vmatprep.subr.bf16.mxu0 0
      %932 = vmatpush1.bf16.msra.mxu0 0
      %933 = vmatprep.subr.bf16.mxu0 0
      %934 = vmatpush1.bf16.msra.mxu0 0
      %935 = vmatprep.subr.bf16.mxu0 0
      %936 = vmatpush1.bf16.msra.mxu0 0
      %937 = vmatprep.subr.bf16.mxu0 0
      %938 = vmatpush1.bf16.msra.mxu0 0
      %939 = vmatprep.subr.bf16.mxu0 0
      %940 = vmatpush1.bf16.msra.mxu0 0
      %941 = vmatprep.mubr.bf16.mxu0 0
      %942 = vmatmul.mubr.bf16.gmra.mrb[0].mxu0 %v907
      %v943 = vpop.f32.mrb[0].mxu0
      %v944 = vadd.f32 0.0, %v943
      %v945 = vpop.f32.mrb[0].mxu0
      %v946 = vpop.f32.mrb[0].mxu0
      %v947 = vadd.f32 0.0, %v946
      %v948 = vpop.f32.mrb[0].mxu0
      %949 = vdwg.mxu0
      %v950 = vmul.f32 %v944, 0.35355338
      %v951 = vmul.f32 %v947, 0.35355338
      %960 = vrot.lane.b32.xlu0 %v834, 32
      %v961 = vpop.permute.xlu0 %960
      %962 = vrot.lane.b32.xlu0 %v835, 32
      %v963 = vpop.permute.xlu0 %962
      %964 = vrot.lane.b32.xlu0 %v836, 32
      %v965 = vpop.permute.xlu0 %964
      %966 = vrot.lane.b32.xlu0 %v837, 32
      %v967 = vpop.permute.xlu0 %966
      %968 = vrot.lane.b32.xlu0 %v838, 32
      %v969 = vpop.permute.xlu0 %968
      %970 = vrot.lane.b32.xlu0 %v839, 32
      %v971 = vpop.permute.xlu0 %970
      %972 = vrot.lane.b32.xlu0 %v840, 32
      %v973 = vpop.permute.xlu0 %972
      %974 = vrot.lane.b32.xlu0 %v841, 32
      %v975 = vpop.permute.xlu0 %974
      %v984 = vmul.f32 %v944, %v961
      %v985 = vmul.f32 %v947, %v963
      %v986 = vmul.f32 %v944, %v965
      %v987 = vmul.f32 %v947, %v967
      %v988 = vmul.f32 %v944, %v969
      %v989 = vmul.f32 %v947, %v971
      %v990 = vmul.f32 %v944, %v973
      %v991 = vmul.f32 %v947, %v975
      %v992 = vpack.c.bf16 %v985, %v984
      %v993 = vpack.c.bf16 %v987, %v986
      %v994 = vpack.c.bf16 %v989, %v988
      %v995 = vpack.c.bf16 %v991, %v990
      %996 = vrot.lane.b32.xlu0 %v834, 64
      %v997 = vpop.permute.xlu0 %996
      %998 = vrot.lane.b32.xlu0 %v835, 64
      %v999 = vpop.permute.xlu0 %998
      %1000 = vrot.lane.b32.xlu0 %v836, 64
      %v1001 = vpop.permute.xlu0 %1000
      %1002 = vrot.lane.b32.xlu0 %v837, 64
      %v1003 = vpop.permute.xlu0 %1002
      %1004 = vrot.lane.b32.xlu0 %v838, 64
      %v1005 = vpop.permute.xlu0 %1004
      %1006 = vrot.lane.b32.xlu0 %v839, 64
      %v1007 = vpop.permute.xlu0 %1006
      %1008 = vrot.lane.b32.xlu0 %v840, 64
      %v1009 = vpop.permute.xlu0 %1008
      %1010 = vrot.lane.b32.xlu0 %v841, 64
      %v1011 = vpop.permute.xlu0 %1010
      %v1020 = vmul.f32 %v944, %v997
      %v1021 = vmul.f32 %v947, %v999
      %v1022 = vmul.f32 %v944, %v1001
      %v1023 = vmul.f32 %v947, %v1003
      %v1024 = vmul.f32 %v944, %v1005
      %v1025 = vmul.f32 %v947, %v1007
      %v1026 = vmul.f32 %v944, %v1009
      %v1027 = vmul.f32 %v947, %v1011
      %v1028 = vpack.c.bf16 %v1021, %v1020
      %v1029 = vpack.c.bf16 %v1023, %v1022
      %v1030 = vpack.c.bf16 %v1025, %v1024
      %v1031 = vpack.c.bf16 %v1027, %v1026
      %v1032 = vpack.c.bf16 %v951, %v950
      %1037 = vrot.lane.b32.xlu0 %v992, 96
      %v1038 = vpop.permute.xlu0 %1037
      %1039 = vrot.lane.b32.xlu0 %v993, 96
      %v1040 = vpop.permute.xlu0 %1039
      %1041 = vrot.lane.b32.xlu0 %v994, 96
      %v1042 = vpop.permute.xlu0 %1041
      %1043 = vrot.lane.b32.xlu0 %v995, 96
      %v1044 = vpop.permute.xlu0 %1043
      %v1046 = vsel %vm787, %v1032, 0
      %v1049 = vsel %vm787, %v1038, 0
      %v1052 = vsel %vm787, %v1040, 0
      %v1055 = vsel %vm787, %v1042, 0
      %v1058 = vsel %vm787, %v1044, 0
      %1060 = vmatprep.subr.bf16.mxu0 0
      %1061 = vmatpush1.bf16.xpose.msra.mxu0 %v1049
      %1062 = vmatprep.subr.bf16.mxu0 0
      %1063 = vmatpush1.bf16.xpose.msra.mxu0 %v1052
      %1064 = vmatprep.subr.bf16.mxu0 0
      %1065 = vmatpush1.bf16.xpose.msra.mxu0 %v1055
      %1066 = vmatprep.subr.bf16.mxu0 0
      %1067 = vmatpush1.bf16.xpose.msra.mxu0 %v1058
      %1068 = vmatprep.subr.bf16.mxu0 0
      %1069 = vmatpush1.bf16.xpose.msra.mxu0 0
      %1070 = vmatprep.subr.bf16.mxu0 0
      %1071 = vmatpush1.bf16.xpose.msra.mxu0 0
      %1072 = vmatprep.subr.bf16.mxu0 0
      %1073 = vmatpush1.bf16.xpose.msra.mxu0 0
      %1074 = vmatprep.subr.bf16.mxu0 0
      %1075 = vmatpush1.bf16.xpose.msra.mxu0 0
      %1076 = vmatprep.subr.bf16.mxu0 0
      %1077 = vmatpush1.bf16.xpose.msra.mxu0 0
      %1078 = vmatprep.subr.bf16.mxu0 0
      %1079 = vmatpush1.bf16.xpose.msra.mxu0 0
      %1080 = vmatprep.subr.bf16.mxu0 0
      %1081 = vmatpush1.bf16.xpose.msra.mxu0 0
      %1082 = vmatprep.subr.bf16.mxu0 0
      %1083 = vmatpush1.bf16.xpose.msra.mxu0 0
      %1084 = vmatprep.subr.bf16.mxu0 0
      %1085 = vmatpush1.bf16.xpose.msra.mxu0 0
      %1086 = vmatprep.subr.bf16.mxu0 0
      %1087 = vmatpush1.bf16.xpose.msra.mxu0 0
      %1088 = vmatprep.subr.bf16.mxu0 0
      %1089 = vmatpush1.bf16.xpose.msra.mxu0 0
      %1090 = vmatprep.subr.bf16.mxu0 0
      %1091 = vmatpush1.bf16.xpose.msra.mxu0 0
      %1092 = vmatprep.mubr.bf16.mxu0 0
      %1093 = vmatmul.mubr.bf16.gmra.mrb[0].mxu0 %v1046
      %v1094 = vpop.f32.mrb[0].mxu0
      %v1095 = vadd.f32 %v886, %v1094
      %v1096 = vpop.f32.mrb[0].mxu0
      %v1097 = vpop.f32.mrb[0].mxu0
      %v1098 = vadd.f32 %v887, %v1097
      %v1099 = vpop.f32.mrb[0].mxu0
      %1100 = vdwg.mxu0
      %vm1101 = vcmask 523264
      %v1102 = vsel %vm1101, %v1095, -inf
      %1103 = vmax.xlane.f32.xlu0 %v1102
      %v1104 = vpop.xlane.xlu0 %1103
      %v1105 = vsel %vm1101, %v1098, -inf
      %1106 = vmax.xlane.f32.xlu0 %v1105
      %v1107 = vpop.xlane.xlu0 %1106
      %v1108 = vsub.f32 %v1095, %v1104
      %v1109 = vsub.f32 %v1098, %v1107
      %v1110 = vmul.f32 %v1108, 1.442695
      %v1111 = vpow.pop %v1110
      %v1112 = vmul.f32 %v1109, 1.442695
      %v1113 = vpow.pop %v1112
      %v1114 = vpack.c.bf16 %v1113, %v1111
      %1119 = vrot.lane.b32.xlu0 %v1028, 64
      %v1120 = vpop.permute.xlu0 %1119
      %1121 = vrot.lane.b32.xlu0 %v1029, 64
      %v1122 = vpop.permute.xlu0 %1121
      %1123 = vrot.lane.b32.xlu0 %v1030, 64
      %v1124 = vpop.permute.xlu0 %1123
      %1125 = vrot.lane.b32.xlu0 %v1031, 64
      %v1126 = vpop.permute.xlu0 %1125
      %v1132 = vsel %vm1101, %v1114, 0
      %1134 = vmatprep.subr.bf16.mxu0 0
      %1135 = vmatpush1.bf16.msra.mxu0 %v1120
      %1136 = vmatprep.subr.bf16.mxu0 0
      %1137 = vmatpush1.bf16.msra.mxu0 %v1122
      %1138 = vmatprep.subr.bf16.mxu0 0
      %1139 = vmatpush1.bf16.msra.mxu0 %v1124
      %1140 = vmatprep.subr.bf16.mxu0 0
      %1141 = vmatpush1.bf16.msra.mxu0 %v1126
      %1142 = vmatprep.subr.bf16.mxu0 0
      %1143 = vmatpush1.bf16.msra.mxu0 0
      %1144 = vmatprep.subr.bf16.mxu0 0
      %1145 = vmatpush1.bf16.msra.mxu0 0
      %1146 = vmatprep.subr.bf16.mxu0 0
      %1147 = vmatpush1.bf16.msra.mxu0 0
      %1148 = vmatprep.subr.bf16.mxu0 0
      %1149 = vmatpush1.bf16.msra.mxu0 0
      %1150 = vmatprep.subr.bf16.mxu0 0
      %1151 = vmatpush1.bf16.msra.mxu0 0
      %1152 = vmatprep.subr.bf16.mxu0 0
      %1153 = vmatpush1.bf16.msra.mxu0 0
      %1154 = vmatprep.subr.bf16.mxu0 0
      %1155 = vmatpush1.bf16.msra.mxu0 0
      %1156 = vmatprep.subr.bf16.mxu0 0
      %1157 = vmatpush1.bf16.msra.mxu0 0
      %1158 = vmatprep.subr.bf16.mxu0 0
      %1159 = vmatpush1.bf16.msra.mxu0 0
      %1160 = vmatprep.subr.bf16.mxu0 0
      %1161 = vmatpush1.bf16.msra.mxu0 0
      %1162 = vmatprep.subr.bf16.mxu0 0
      %1163 = vmatpush1.bf16.msra.mxu0 0
      %1164 = vmatprep.subr.bf16.mxu0 0
      %1165 = vmatpush1.bf16.msra.mxu0 0
      %1166 = vmatprep.mubr.bf16.mxu0 0
      %1167 = vmatmul.mubr.bf16.gmra.mrb[0].mxu0 %v1132
      %v1168 = vpop.f32.mrb[0].mxu0
      %v1169 = vadd.f32 0.0, %v1168
      %v1170 = vpop.f32.mrb[0].mxu0
      %v1171 = vpop.f32.mrb[0].mxu0
      %v1172 = vadd.f32 0.0, %v1171
      %v1173 = vpop.f32.mrb[0].mxu0
      %1174 = vdwg.mxu0
      %1175 = vmatprep.subr.bf16.mxu0 0
      %1176 = vmatpush1.bf16.msra.mxu0 %v850
      %1177 = vmatprep.subr.bf16.mxu0 0
      %1178 = vmatpush1.bf16.msra.mxu0 %v851
      %1179 = vmatprep.subr.bf16.mxu0 0
      %1180 = vmatpush1.bf16.msra.mxu0 %v852
      %1181 = vmatprep.subr.bf16.mxu0 0
      %1182 = vmatpush1.bf16.msra.mxu0 %v853
      %1183 = vmatprep.subr.bf16.mxu0 0
      %1184 = vmatpush1.bf16.msra.mxu0 0
      %1185 = vmatprep.subr.bf16.mxu0 0
      %1186 = vmatpush1.bf16.msra.mxu0 0
      %1187 = vmatprep.subr.bf16.mxu0 0
      %1188 = vmatpush1.bf16.msra.mxu0 0
      %1189 = vmatprep.subr.bf16.mxu0 0
      %1190 = vmatpush1.bf16.msra.mxu0 0
      %1191 = vmatprep.subr.bf16.mxu0 0
      %1192 = vmatpush1.bf16.msra.mxu0 0
      %1193 = vmatprep.subr.bf16.mxu0 0
      %1194 = vmatpush1.bf16.msra.mxu0 0
      %1195 = vmatprep.subr.bf16.mxu0 0
      %1196 = vmatpush1.bf16.msra.mxu0 0
      %1197 = vmatprep.subr.bf16.mxu0 0
      %1198 = vmatpush1.bf16.msra.mxu0 0
      %1199 = vmatprep.subr.bf16.mxu0 0
      %1200 = vmatpush1.bf16.msra.mxu0 0
      %1201 = vmatprep.subr.bf16.mxu0 0
      %1202 = vmatpush1.bf16.msra.mxu0 0
      %1203 = vmatprep.subr.bf16.mxu0 0
      %1204 = vmatpush1.bf16.msra.mxu0 0
      %1205 = vmatprep.subr.bf16.mxu0 0
      %1206 = vmatpush1.bf16.msra.mxu0 0
      %1207 = vmatprep.mubr.bf16.mxu0 0
      %1208 = vmatmul.mubr.bf16.gmra.mrb[0].mxu0 %v1132
      %v1209 = vpop.f32.mrb[0].mxu0
      %v1210 = vadd.f32 0.0, %v1209
      %v1211 = vpop.f32.mrb[0].mxu0
      %v1212 = vpop.f32.mrb[0].mxu0
      %v1213 = vadd.f32 0.0, %v1212
      %v1214 = vpop.f32.mrb[0].mxu0
      %1215 = vdwg.mxu0
      %v1216 = vmax.f32 %v1210, 1e-20
      %v1217 = vmax.f32 %v1213, 1e-20
      %v1218 = vrcp.pop %v1216
      %v1219 = vrcp.pop %v1217
      %v1220 = vmul.f32 %v1169, %v1218
      %v1221 = vmul.f32 %v1172, %v1219
      %v1222 = vpack.c.bf16 %v1221, %v1220
      %v1223 = vld [vmem:[%s10] sm:$0xf]
      %v1224 = vld [vmem:[%s10 + $0x4] sm:$0xf]
      %v1225 = vld [vmem:[%s10 + $0x8] sm:$0xf]
      %v1226 = vld [vmem:[%s10 + $0xc] sm:$0xf]
      %v1231 = vunpack.c.l.b16 %v1223
      %v1232 = vunpack.c.l.b16 %v1224
      %v1233 = vunpack.c.l.b16 %v1225
      %v1234 = vunpack.c.l.b16 %v1226
      %v1235 = vpack.c.b16 %v1232, %v1231
      %v1236 = vpack.c.b16 %v1234, %v1233
      %v1240 = vsel %vm787, %v1222, 0
      %1242 = vmatprep.subr.bf16.mxu0 0
      %1243 = vmatpush1.bf16.msra.mxu0 %v1235
      %1244 = vmatprep.subr.bf16.mxu0 0
      %1245 = vmatpush1.bf16.msra.mxu0 %v1236
      %1246 = vmatprep.subr.bf16.mxu0 0
      %1247 = vmatpush1.bf16.msra.mxu0 0
      %1248 = vmatprep.subr.bf16.mxu0 0
      %1249 = vmatpush1.bf16.msra.mxu0 0
      %1250 = vmatprep.subr.bf16.mxu0 0
      %1251 = vmatpush1.bf16.msra.mxu0 0
      %1252 = vmatprep.subr.bf16.mxu0 0
      %1253 = vmatpush1.bf16.msra.mxu0 0
      %1254 = vmatprep.subr.bf16.mxu0 0
      %1255 = vmatpush1.bf16.msra.mxu0 0
      %1256 = vmatprep.subr.bf16.mxu0 0
      %1257 = vmatpush1.bf16.msra.mxu0 0
      %1258 = vmatprep.subr.bf16.mxu0 0
      %1259 = vmatpush1.bf16.msra.mxu0 0
      %1260 = vmatprep.subr.bf16.mxu0 0
      %1261 = vmatpush1.bf16.msra.mxu0 0
      %1262 = vmatprep.subr.bf16.mxu0 0
      %1263 = vmatpush1.bf16.msra.mxu0 0
      %1264 = vmatprep.subr.bf16.mxu0 0
      %1265 = vmatpush1.bf16.msra.mxu0 0
      %1266 = vmatprep.subr.bf16.mxu0 0
      %1267 = vmatpush1.bf16.msra.mxu0 0
      %1268 = vmatprep.subr.bf16.mxu0 0
      %1269 = vmatpush1.bf16.msra.mxu0 0
      %1270 = vmatprep.subr.bf16.mxu0 0
      %1271 = vmatpush1.bf16.msra.mxu0 0
      %1272 = vmatprep.subr.bf16.mxu0 0
      %1273 = vmatpush1.bf16.msra.mxu0 0
      %1274 = vmatprep.mubr.bf16.mxu0 0
      %1275 = vmatmul.mubr.bf16.gmra.mrb[0].mxu0 %v1240
      %v1276 = vpop.f32.mrb[0].mxu0
      %v1277 = vadd.f32 %v829, %v1276
      %v1278 = vpop.f32.mrb[0].mxu0
      %v1279 = vpop.f32.mrb[0].mxu0
      %v1280 = vadd.f32 %v830, %v1279
      %v1281 = vpop.f32.mrb[0].mxu0
      %1282 = vdwg.mxu0
      %v1283 = vld [vmem:[%s11] sm:$0x1]
      %v1284 = vld [vmem:[%s12] sm:$0x1]
      %v1285 = vsel %vm787, %v1277, 0.0
      %1286 = vadd.xlane.f32.xlu0 %v1285
      %v1287 = vpop.xlane.xlu0 %1286
      %v1288 = vsel %vm787, %v1280, 0.0
      %1289 = vadd.xlane.f32.xlu0 %v1288
      %v1290 = vpop.xlane.xlu0 %1289
      %v1291 = vmul.f32 %v1287, %v794
      %v1292 = vmul.f32 %v1290, %v794
      %v1293 = vsub.f32 %v1277, %v1291
      %v1294 = vsub.f32 %v1280, %v1292
      %v1295 = vmul.f32 %v1293, %v1293
      %v1296 = vmul.f32 %v1294, %v1294
      %v1297 = vsel %vm787, %v1295, 0.0
      %1298 = vadd.xlane.f32.xlu0 %v1297
      %v1299 = vpop.xlane.xlu0 %1298
      %v1300 = vsel %vm787, %v1296, 0.0
      %1301 = vadd.xlane.f32.xlu0 %v1300
      %v1302 = vpop.xlane.xlu0 %1301
      %v1303 = vmul.f32 %v1299, %v794
      %v1304 = vmul.f32 %v1302, %v794
      %v1305 = vadd.f32 %v1303, 1e-06
      %v1306 = vadd.f32 %v1304, 1e-06
      %v1307 = vrsqrt.pop %v1305
      %v1308 = vrsqrt.pop %v1306
      %v1309 = vmul.f32 %v1293, %v1307
      %v1310 = vmul.f32 %v1294, %v1308
      %v1312 = vlaneseq
      %v1313 = vshrl.u32 %v1312, 7
      %v1314 = vsub.s32 0, %v1313
      %v1315 = vrot.slane %v1283, %v1314
      %v1317 = vmul.f32 %v1309, %v1315
      %v1318 = vmul.f32 %v1310, %v1315
      %v1320 = vlaneseq
      %v1321 = vshrl.u32 %v1320, 7
      %v1322 = vsub.s32 0, %v1321
      %v1323 = vrot.slane %v1284, %v1322
      %v1325 = vadd.f32 %v1317, %v1323
      %v1326 = vadd.f32 %v1318, %v1323
      %v1327 = vpack.c.bf16 %v1326, %v1325
      %v1328 = vld [vmem:[%s13] sm:$0xf]
      %v1329 = vld [vmem:[%s13 + $0x4] sm:$0xf]
      %v1330 = vld [vmem:[%s13 + $0x8] sm:$0xf]
      %v1331 = vld [vmem:[%s13 + $0xc] sm:$0xf]
      %v1336 = vunpack.c.l.b16 %v1328
      %v1337 = vunpack.c.l.b16 %v1329
      %v1338 = vunpack.c.l.b16 %v1330
      %v1339 = vunpack.c.l.b16 %v1331
      %v1340 = vpack.c.b16 %v1337, %v1336
      %v1341 = vpack.c.b16 %v1339, %v1338
      %v1345 = vsel %vm787, %v1327, 0
      %1347 = vmatprep.subr.bf16.mxu0 0
      %1348 = vmatpush1.bf16.msra.mxu0 %v1340
      %1349 = vmatprep.subr.bf16.mxu0 0
      %1350 = vmatpush1.bf16.msra.mxu0 %v1341
      %1351 = vmatprep.subr.bf16.mxu0 0
      %1352 = vmatpush1.bf16.msra.mxu0 0
      %1353 = vmatprep.subr.bf16.mxu0 0
      %1354 = vmatpush1.bf16.msra.mxu0 0
      %1355 = vmatprep.subr.bf16.mxu0 0
      %1356 = vmatpush1.bf16.msra.mxu0 0
      %1357 = vmatprep.subr.bf16.mxu0 0
      %1358 = vmatpush1.bf16.msra.mxu0 0
      %1359 = vmatprep.subr.bf16.mxu0 0
      %1360 = vmatpush1.bf16.msra.mxu0 0
      %1361 = vmatprep.subr.bf16.mxu0 0
      %1362 = vmatpush1.bf16.msra.mxu0 0
      %1363 = vmatprep.subr.bf16.mxu0 0
      %1364 = vmatpush1.bf16.msra.mxu0 0
      %1365 = vmatprep.subr.bf16.mxu0 0
      %1366 = vmatpush1.bf16.msra.mxu0 0
      %1367 = vmatprep.subr.bf16.mxu0 0
      %1368 = vmatpush1.bf16.msra.mxu0 0
      %1369 = vmatprep.subr.bf16.mxu0 0
      %1370 = vmatpush1.bf16.msra.mxu0 0
      %1371 = vmatprep.subr.bf16.mxu0 0
      %1372 = vmatpush1.bf16.msra.mxu0 0
      %1373 = vmatprep.subr.bf16.mxu0 0
      %1374 = vmatpush1.bf16.msra.mxu0 0
      %1375 = vmatprep.subr.bf16.mxu0 0
      %1376 = vmatpush1.bf16.msra.mxu0 0
      %1377 = vmatprep.subr.bf16.mxu0 0
      %1378 = vmatpush1.bf16.msra.mxu0 0
      %1379 = vmatprep.mubr.bf16.mxu0 0
      %1380 = vmatmul.mubr.bf16.gmra.mrb[0].mxu0 %v1345
      %v1381 = vpop.f32.mrb[0].mxu0
      %v1382 = vadd.f32 0.0, %v1381
      %v1383 = vpop.f32.mrb[0].mxu0
      %v1384 = vpop.f32.mrb[0].mxu0
      %v1385 = vadd.f32 0.0, %v1384
      %v1386 = vpop.f32.mrb[0].mxu0
      %1387 = vdwg.mxu0
      %v1388 = vmul.f32 %v1382, 0.35355338
      %v1389 = vmul.f32 %v1385, 0.35355338
      %v1390 = vld [vmem:[%s14] sm:$0xf]
      %v1391 = vld [vmem:[%s14 + $0x4] sm:$0xf]
      %v1392 = vld [vmem:[%s14 + $0x8] sm:$0xf]
      %v1393 = vld [vmem:[%s14 + $0xc] sm:$0xf]
      %v1398 = vunpack.c.l.b16 %v1390
      %v1399 = vunpack.c.l.b16 %v1391
      %v1400 = vunpack.c.l.b16 %v1392
      %v1401 = vunpack.c.l.b16 %v1393
      %v1402 = vpack.c.b16 %v1399, %v1398
      %v1403 = vpack.c.b16 %v1401, %v1400
      %v1407 = vsel %vm787, %v833, 0
      %1409 = vmatprep.subr.bf16.mxu0 0
      %1410 = vmatpush1.bf16.msra.mxu0 %v1402
      %1411 = vmatprep.subr.bf16.mxu0 0
      %1412 = vmatpush1.bf16.msra.mxu0 %v1403
      %1413 = vmatprep.subr.bf16.mxu0 0
      %1414 = vmatpush1.bf16.msra.mxu0 0
      %1415 = vmatprep.subr.bf16.mxu0 0
      %1416 = vmatpush1.bf16.msra.mxu0 0
      %1417 = vmatprep.subr.bf16.mxu0 0
      %1418 = vmatpush1.bf16.msra.mxu0 0
      %1419 = vmatprep.subr.bf16.mxu0 0
      %1420 = vmatpush1.bf16.msra.mxu0 0
      %1421 = vmatprep.subr.bf16.mxu0 0
      %1422 = vmatpush1.bf16.msra.mxu0 0
      %1423 = vmatprep.subr.bf16.mxu0 0
      %1424 = vmatpush1.bf16.msra.mxu0 0
      %1425 = vmatprep.subr.bf16.mxu0 0
      %1426 = vmatpush1.bf16.msra.mxu0 0
      %1427 = vmatprep.subr.bf16.mxu0 0
      %1428 = vmatpush1.bf16.msra.mxu0 0
      %1429 = vmatprep.subr.bf16.mxu0 0
      %1430 = vmatpush1.bf16.msra.mxu0 0
      %1431 = vmatprep.subr.bf16.mxu0 0
      %1432 = vmatpush1.bf16.msra.mxu0 0
      %1433 = vmatprep.subr.bf16.mxu0 0
      %1434 = vmatpush1.bf16.msra.mxu0 0
      %1435 = vmatprep.subr.bf16.mxu0 0
      %1436 = vmatpush1.bf16.msra.mxu0 0
      %1437 = vmatprep.subr.bf16.mxu0 0
      %1438 = vmatpush1.bf16.msra.mxu0 0
      %1439 = vmatprep.subr.bf16.mxu0 0
      %1440 = vmatpush1.bf16.msra.mxu0 0
      %1441 = vmatprep.mubr.bf16.mxu0 0
      %1442 = vmatmul.mubr.bf16.gmra.mrb[0].mxu0 %v1407
      %v1443 = vpop.f32.mrb[0].mxu0
      %v1444 = vadd.f32 0.0, %v1443
      %v1445 = vpop.f32.mrb[0].mxu0
      %v1446 = vpop.f32.mrb[0].mxu0
      %v1447 = vadd.f32 0.0, %v1446
      %v1448 = vpop.f32.mrb[0].mxu0
      %1449 = vdwg.mxu0
      %v1450 = vmul.f32 %v1444, %v842
      %v1451 = vmul.f32 %v1447, %v843
      %v1452 = vmul.f32 %v1444, %v844
      %v1453 = vmul.f32 %v1447, %v845
      %v1454 = vmul.f32 %v1444, %v846
      %v1455 = vmul.f32 %v1447, %v847
      %v1456 = vmul.f32 %v1444, %v848
      %v1457 = vmul.f32 %v1447, %v849
      %v1458 = vpack.c.bf16 %v1451, %v1450
      %v1459 = vpack.c.bf16 %v1453, %v1452
      %v1460 = vpack.c.bf16 %v1455, %v1454
      %v1461 = vpack.c.bf16 %v1457, %v1456
      %1470 = vrot.lane.b32.xlu0 %v842, 32
      %v1471 = vpop.permute.xlu0 %1470
      %1472 = vrot.lane.b32.xlu0 %v843, 32
      %v1473 = vpop.permute.xlu0 %1472
      %1474 = vrot.lane.b32.xlu0 %v844, 32
      %v1475 = vpop.permute.xlu0 %1474
      %1476 = vrot.lane.b32.xlu0 %v845, 32
      %v1477 = vpop.permute.xlu0 %1476
      %1478 = vrot.lane.b32.xlu0 %v846, 32
      %v1479 = vpop.permute.xlu0 %1478
      %1480 = vrot.lane.b32.xlu0 %v847, 32
      %v1481 = vpop.permute.xlu0 %1480
      %1482 = vrot.lane.b32.xlu0 %v848, 32
      %v1483 = vpop.permute.xlu0 %1482
      %1484 = vrot.lane.b32.xlu0 %v849, 32
      %v1485 = vpop.permute.xlu0 %1484
      %v1494 = vmul.f32 %v1444, %v1471
      %v1495 = vmul.f32 %v1447, %v1473
      %v1496 = vmul.f32 %v1444, %v1475
      %v1497 = vmul.f32 %v1447, %v1477
      %v1498 = vmul.f32 %v1444, %v1479
      %v1499 = vmul.f32 %v1447, %v1481
      %v1500 = vmul.f32 %v1444, %v1483
      %v1501 = vmul.f32 %v1447, %v1485
      %v1502 = vpack.c.bf16 %v1495, %v1494
      %v1503 = vpack.c.bf16 %v1497, %v1496
      %v1504 = vpack.c.bf16 %v1499, %v1498
      %v1505 = vpack.c.bf16 %v1501, %v1500
      %v1506 = vpack.c.bf16 %v1389, %v1388
      %v1508 = vlaneseq
      %v1509 = vshrl.u32 %v1508, 7
      %v1510 = vsub.s32 0, %v1509
      %v1511 = vrot.slane %v888, %v1510
      %v1514 = vsel %vm787, %v1506, 0
      %v1517 = vsel %vm787, %v1458, 0
      %v1520 = vsel %vm787, %v1459, 0
      %v1523 = vsel %vm787, %v1460, 0
      %v1526 = vsel %vm787, %v1461, 0
      %1528 = vmatprep.subr.bf16.mxu0 0
      %1529 = vmatpush1.bf16.xpose.msra.mxu0 %v1517
      %1530 = vmatprep.subr.bf16.mxu0 0
      %1531 = vmatpush1.bf16.xpose.msra.mxu0 %v1520
      %1532 = vmatprep.subr.bf16.mxu0 0
      %1533 = vmatpush1.bf16.xpose.msra.mxu0 %v1523
      %1534 = vmatprep.subr.bf16.mxu0 0
      %1535 = vmatpush1.bf16.xpose.msra.mxu0 %v1526
      %1536 = vmatprep.subr.bf16.mxu0 0
      %1537 = vmatpush1.bf16.xpose.msra.mxu0 0
      %1538 = vmatprep.subr.bf16.mxu0 0
      %1539 = vmatpush1.bf16.xpose.msra.mxu0 0
      %1540 = vmatprep.subr.bf16.mxu0 0
      %1541 = vmatpush1.bf16.xpose.msra.mxu0 0
      %1542 = vmatprep.subr.bf16.mxu0 0
      %1543 = vmatpush1.bf16.xpose.msra.mxu0 0
      %1544 = vmatprep.subr.bf16.mxu0 0
      %1545 = vmatpush1.bf16.xpose.msra.mxu0 0
      %1546 = vmatprep.subr.bf16.mxu0 0
      %1547 = vmatpush1.bf16.xpose.msra.mxu0 0
      %1548 = vmatprep.subr.bf16.mxu0 0
      %1549 = vmatpush1.bf16.xpose.msra.mxu0 0
      %1550 = vmatprep.subr.bf16.mxu0 0
      %1551 = vmatpush1.bf16.xpose.msra.mxu0 0
      %1552 = vmatprep.subr.bf16.mxu0 0
      %1553 = vmatpush1.bf16.xpose.msra.mxu0 0
      %1554 = vmatprep.subr.bf16.mxu0 0
      %1555 = vmatpush1.bf16.xpose.msra.mxu0 0
      %1556 = vmatprep.subr.bf16.mxu0 0
      %1557 = vmatpush1.bf16.xpose.msra.mxu0 0
      %1558 = vmatprep.subr.bf16.mxu0 0
      %1559 = vmatpush1.bf16.xpose.msra.mxu0 0
      %1560 = vmatprep.mubr.bf16.mxu0 0
      %1561 = vmatmul.mubr.bf16.gmra.mrb[0].mxu0 %v1514
      %v1562 = vpop.f32.mrb[0].mxu0
      %v1563 = vadd.f32 %v1511, %v1562
      %v1564 = vpop.f32.mrb[0].mxu0
      %v1565 = vpop.f32.mrb[0].mxu0
      %v1566 = vadd.f32 %v1511, %v1565
      %v1567 = vpop.f32.mrb[0].mxu0
      %1568 = vdwg.mxu0
      %v1569 = vsel %vm1101, %v1563, -inf
      %1570 = vmax.xlane.f32.xlu0 %v1569
      %v1571 = vpop.xlane.xlu0 %1570
      %v1572 = vsel %vm1101, %v1566, -inf
      %1573 = vmax.xlane.f32.xlu0 %v1572
      %v1574 = vpop.xlane.xlu0 %1573
      %v1575 = vsub.f32 %v1563, %v1571
      %v1576 = vsub.f32 %v1566, %v1574
      %v1577 = vmul.f32 %v1575, 1.442695
      %v1578 = vpow.pop %v1577
      %v1579 = vmul.f32 %v1576, 1.442695
      %v1580 = vpow.pop %v1579
      %v1581 = vpack.c.bf16 %v1580, %v1578
      %1586 = vrot.lane.b32.xlu0 %v1502, 96
      %v1587 = vpop.permute.xlu0 %1586
      %1588 = vrot.lane.b32.xlu0 %v1503, 96
      %v1589 = vpop.permute.xlu0 %1588
      %1590 = vrot.lane.b32.xlu0 %v1504, 96
      %v1591 = vpop.permute.xlu0 %1590
      %1592 = vrot.lane.b32.xlu0 %v1505, 96
      %v1593 = vpop.permute.xlu0 %1592
      %v1599 = vsel %vm1101, %v1581, 0
      %1601 = vmatprep.subr.bf16.mxu0 0
      %1602 = vmatpush1.bf16.msra.mxu0 %v1587
      %1603 = vmatprep.subr.bf16.mxu0 0
      %1604 = vmatpush1.bf16.msra.mxu0 %v1589
      %1605 = vmatprep.subr.bf16.mxu0 0
      %1606 = vmatpush1.bf16.msra.mxu0 %v1591
      %1607 = vmatprep.subr.bf16.mxu0 0
      %1608 = vmatpush1.bf16.msra.mxu0 %v1593
      %1609 = vmatprep.subr.bf16.mxu0 0
      %1610 = vmatpush1.bf16.msra.mxu0 0
      %1611 = vmatprep.subr.bf16.mxu0 0
      %1612 = vmatpush1.bf16.msra.mxu0 0
      %1613 = vmatprep.subr.bf16.mxu0 0
      %1614 = vmatpush1.bf16.msra.mxu0 0
      %1615 = vmatprep.subr.bf16.mxu0 0
      %1616 = vmatpush1.bf16.msra.mxu0 0
      %1617 = vmatprep.subr.bf16.mxu0 0
      %1618 = vmatpush1.bf16.msra.mxu0 0
      %1619 = vmatprep.subr.bf16.mxu0 0
      %1620 = vmatpush1.bf16.msra.mxu0 0
      %1621 = vmatprep.subr.bf16.mxu0 0
      %1622 = vmatpush1.bf16.msra.mxu0 0
      %1623 = vmatprep.subr.bf16.mxu0 0
      %1624 = vmatpush1.bf16.msra.mxu0 0
      %1625 = vmatprep.subr.bf16.mxu0 0
      %1626 = vmatpush1.bf16.msra.mxu0 0
      %1627 = vmatprep.subr.bf16.mxu0 0
      %1628 = vmatpush1.bf16.msra.mxu0 0
      %1629 = vmatprep.subr.bf16.mxu0 0
      %1630 = vmatpush1.bf16.msra.mxu0 0
      %1631 = vmatprep.subr.bf16.mxu0 0
      %1632 = vmatpush1.bf16.msra.mxu0 0
      %1633 = vmatprep.mubr.bf16.mxu0 0
      %1634 = vmatmul.mubr.bf16.gmra.mrb[0].mxu0 %v1599
      %v1635 = vpop.f32.mrb[0].mxu0
      %v1636 = vadd.f32 0.0, %v1635
      %v1637 = vpop.f32.mrb[0].mxu0
      %v1638 = vpop.f32.mrb[0].mxu0
      %v1639 = vadd.f32 0.0, %v1638
      %v1640 = vpop.f32.mrb[0].mxu0
      %1641 = vdwg.mxu0
      %1642 = vmatprep.subr.bf16.mxu0 0
      %1643 = vmatpush1.bf16.msra.mxu0 %v854
      %1644 = vmatprep.subr.bf16.mxu0 0
      %1645 = vmatpush1.bf16.msra.mxu0 %v855
      %1646 = vmatprep.subr.bf16.mxu0 0
      %1647 = vmatpush1.bf16.msra.mxu0 %v856
      %1648 = vmatprep.subr.bf16.mxu0 0
      %1649 = vmatpush1.bf16.msra.mxu0 %v857
      %1650 = vmatprep.subr.bf16.mxu0 0
      %1651 = vmatpush1.bf16.msra.mxu0 0
      %1652 = vmatprep.subr.bf16.mxu0 0
      %1653 = vmatpush1.bf16.msra.mxu0 0
      %1654 = vmatprep.subr.bf16.mxu0 0
      %1655 = vmatpush1.bf16.msra.mxu0 0
      %1656 = vmatprep.subr.bf16.mxu0 0
      %1657 = vmatpush1.bf16.msra.mxu0 0
      %1658 = vmatprep.subr.bf16.mxu0 0
      %1659 = vmatpush1.bf16.msra.mxu0 0
      %1660 = vmatprep.subr.bf16.mxu0 0
      %1661 = vmatpush1.bf16.msra.mxu0 0
      %1662 = vmatprep.subr.bf16.mxu0 0
      %1663 = vmatpush1.bf16.msra.mxu0 0
      %1664 = vmatprep.subr.bf16.mxu0 0
      %1665 = vmatpush1.bf16.msra.mxu0 0
      %1666 = vmatprep.subr.bf16.mxu0 0
      %1667 = vmatpush1.bf16.msra.mxu0 0
      %1668 = vmatprep.subr.bf16.mxu0 0
      %1669 = vmatpush1.bf16.msra.mxu0 0
      %1670 = vmatprep.subr.bf16.mxu0 0
      %1671 = vmatpush1.bf16.msra.mxu0 0
      %1672 = vmatprep.subr.bf16.mxu0 0
      %1673 = vmatpush1.bf16.msra.mxu0 0
      %1674 = vmatprep.mubr.bf16.mxu0 0
      %1675 = vmatmul.mubr.bf16.gmra.mrb[0].mxu0 %v1599
      %v1676 = vpop.f32.mrb[0].mxu0
      %v1677 = vadd.f32 0.0, %v1676
      %v1678 = vpop.f32.mrb[0].mxu0
      %v1679 = vpop.f32.mrb[0].mxu0
      %v1680 = vadd.f32 0.0, %v1679
      %v1681 = vpop.f32.mrb[0].mxu0
      %1682 = vdwg.mxu0
      %v1683 = vmax.f32 %v1677, 1e-20
      %v1684 = vmax.f32 %v1680, 1e-20
      %v1685 = vrcp.pop %v1683
      %v1686 = vrcp.pop %v1684
      %v1687 = vmul.f32 %v1636, %v1685
      %v1688 = vmul.f32 %v1639, %v1686
      %v1689 = vpack.c.bf16 %v1688, %v1687
      %v1690 = vld [vmem:[%s15] sm:$0xf]
      %v1691 = vld [vmem:[%s15 + $0x4] sm:$0xf]
      %v1692 = vld [vmem:[%s15 + $0x8] sm:$0xf]
      %v1693 = vld [vmem:[%s15 + $0xc] sm:$0xf]
      %v1698 = vunpack.c.l.b16 %v1690
      %v1699 = vunpack.c.l.b16 %v1691
      %v1700 = vunpack.c.l.b16 %v1692
      %v1701 = vunpack.c.l.b16 %v1693
      %v1702 = vpack.c.b16 %v1699, %v1698
      %v1703 = vpack.c.b16 %v1701, %v1700
      %v1707 = vsel %vm787, %v1689, 0
      %1709 = vmatprep.subr.bf16.mxu0 0
      %1710 = vmatpush1.bf16.msra.mxu0 %v1702
      %1711 = vmatprep.subr.bf16.mxu0 0
      %1712 = vmatpush1.bf16.msra.mxu0 %v1703
      %1713 = vmatprep.subr.bf16.mxu0 0
      %1714 = vmatpush1.bf16.msra.mxu0 0
      %1715 = vmatprep.subr.bf16.mxu0 0
      %1716 = vmatpush1.bf16.msra.mxu0 0
      %1717 = vmatprep.subr.bf16.mxu0 0
      %1718 = vmatpush1.bf16.msra.mxu0 0
      %1719 = vmatprep.subr.bf16.mxu0 0
      %1720 = vmatpush1.bf16.msra.mxu0 0
      %1721 = vmatprep.subr.bf16.mxu0 0
      %1722 = vmatpush1.bf16.msra.mxu0 0
      %1723 = vmatprep.subr.bf16.mxu0 0
      %1724 = vmatpush1.bf16.msra.mxu0 0
      %1725 = vmatprep.subr.bf16.mxu0 0
      %1726 = vmatpush1.bf16.msra.mxu0 0
      %1727 = vmatprep.subr.bf16.mxu0 0
      %1728 = vmatpush1.bf16.msra.mxu0 0
      %1729 = vmatprep.subr.bf16.mxu0 0
      %1730 = vmatpush1.bf16.msra.mxu0 0
      %1731 = vmatprep.subr.bf16.mxu0 0
      %1732 = vmatpush1.bf16.msra.mxu0 0
      %1733 = vmatprep.subr.bf16.mxu0 0
      %1734 = vmatpush1.bf16.msra.mxu0 0
      %1735 = vmatprep.subr.bf16.mxu0 0
      %1736 = vmatpush1.bf16.msra.mxu0 0
      %1737 = vmatprep.subr.bf16.mxu0 0
      %1738 = vmatpush1.bf16.msra.mxu0 0
      %1739 = vmatprep.subr.bf16.mxu0 0
      %1740 = vmatpush1.bf16.msra.mxu0 0
      %1741 = vmatprep.mubr.bf16.mxu0 0
      %1742 = vmatmul.mubr.bf16.gmra.mrb[0].mxu0 %v1707
      %v1743 = vpop.f32.mrb[0].mxu0
      %v1744 = vadd.f32 %v1325, %v1743
      %v1745 = vpop.f32.mrb[0].mxu0
      %v1746 = vpop.f32.mrb[0].mxu0
      %v1747 = vadd.f32 %v1326, %v1746
      %v1748 = vpop.f32.mrb[0].mxu0
      %1749 = vdwg.mxu0
      %v1750 = vld [vmem:[%s16] sm:$0x1]
      %v1751 = vld [vmem:[%s17] sm:$0x1]
      %v1752 = vsel %vm787, %v1744, 0.0
      %1753 = vadd.xlane.f32.xlu0 %v1752
      %v1754 = vpop.xlane.xlu0 %1753
      %v1755 = vsel %vm787, %v1747, 0.0
      %1756 = vadd.xlane.f32.xlu0 %v1755
      %v1757 = vpop.xlane.xlu0 %1756
      %v1758 = vmul.f32 %v1754, %v794
      %v1759 = vmul.f32 %v1757, %v794
      %v1760 = vsub.f32 %v1744, %v1758
      %v1761 = vsub.f32 %v1747, %v1759
      %v1762 = vmul.f32 %v1760, %v1760
      %v1763 = vmul.f32 %v1761, %v1761
      %v1764 = vsel %vm787, %v1762, 0.0
      %1765 = vadd.xlane.f32.xlu0 %v1764
      %v1766 = vpop.xlane.xlu0 %1765
      %v1767 = vsel %vm787, %v1763, 0.0
      %1768 = vadd.xlane.f32.xlu0 %v1767
      %v1769 = vpop.xlane.xlu0 %1768
      %v1770 = vmul.f32 %v1766, %v794
      %v1771 = vmul.f32 %v1769, %v794
      %v1772 = vadd.f32 %v1770, 1e-06
      %v1773 = vadd.f32 %v1771, 1e-06
      %v1774 = vrsqrt.pop %v1772
      %v1775 = vrsqrt.pop %v1773
      %v1776 = vmul.f32 %v1760, %v1774
      %v1777 = vmul.f32 %v1761, %v1775
      %v1779 = vlaneseq
      %v1780 = vshrl.u32 %v1779, 7
      %v1781 = vsub.s32 0, %v1780
      %v1782 = vrot.slane %v1750, %v1781
      %v1784 = vmul.f32 %v1776, %v1782
      %v1785 = vmul.f32 %v1777, %v1782
      %v1787 = vlaneseq
      %v1788 = vshrl.u32 %v1787, 7
      %v1789 = vsub.s32 0, %v1788
      %v1790 = vrot.slane %v1751, %v1789
      %v1792 = vadd.f32 %v1784, %v1790
      %v1793 = vadd.f32 %v1785, %v1790
      %v1794 = vpack.c.bf16 %v1793, %v1792
      %v1795 = vld [vmem:[%s18] sm:$0xf]
      %v1796 = vld [vmem:[%s18 + $0x4] sm:$0xf]
      %v1797 = vld [vmem:[%s18 + $0x8] sm:$0xf]
      %v1798 = vld [vmem:[%s18 + $0xc] sm:$0xf]
      %v1799 = vld [vmem:[%s19] sm:$0x1]
      %v1801 = vlaneseq
      %v1802 = vshrl.u32 %v1801, 7
      %v1803 = vsub.s32 0, %v1802
      %v1804 = vrot.slane %v1799, %v1803
      %v1810 = vunpack.c.l.b16 %v1795
      %v1811 = vunpack.c.l.b16 %v1796
      %v1812 = vunpack.c.l.b16 %v1797
      %v1813 = vunpack.c.l.b16 %v1798
      %v1814 = vpack.c.b16 %v1811, %v1810
      %v1815 = vpack.c.b16 %v1813, %v1812
      %v1819 = vsel %vm787, %v1794, 0
      %1821 = vmatprep.subr.bf16.mxu0 0
      %1822 = vmatpush1.bf16.msra.mxu0 %v1814
      %1823 = vmatprep.subr.bf16.mxu0 0
      %1824 = vmatpush1.bf16.msra.mxu0 %v1815
      %1825 = vmatprep.subr.bf16.mxu0 0
      %1826 = vmatpush1.bf16.msra.mxu0 0
      %1827 = vmatprep.subr.bf16.mxu0 0
      %1828 = vmatpush1.bf16.msra.mxu0 0
      %1829 = vmatprep.subr.bf16.mxu0 0
      %1830 = vmatpush1.bf16.msra.mxu0 0
      %1831 = vmatprep.subr.bf16.mxu0 0
      %1832 = vmatpush1.bf16.msra.mxu0 0
      %1833 = vmatprep.subr.bf16.mxu0 0
      %1834 = vmatpush1.bf16.msra.mxu0 0
      %1835 = vmatprep.subr.bf16.mxu0 0
      %1836 = vmatpush1.bf16.msra.mxu0 0
      %1837 = vmatprep.subr.bf16.mxu0 0
      %1838 = vmatpush1.bf16.msra.mxu0 0
      %1839 = vmatprep.subr.bf16.mxu0 0
      %1840 = vmatpush1.bf16.msra.mxu0 0
      %1841 = vmatprep.subr.bf16.mxu0 0
      %1842 = vmatpush1.bf16.msra.mxu0 0
      %1843 = vmatprep.subr.bf16.mxu0 0
      %1844 = vmatpush1.bf16.msra.mxu0 0
      %1845 = vmatprep.subr.bf16.mxu0 0
      %1846 = vmatpush1.bf16.msra.mxu0 0
      %1847 = vmatprep.subr.bf16.mxu0 0
      %1848 = vmatpush1.bf16.msra.mxu0 0
      %1849 = vmatprep.subr.bf16.mxu0 0
      %1850 = vmatpush1.bf16.msra.mxu0 0
      %1851 = vmatprep.subr.bf16.mxu0 0
      %1852 = vmatpush1.bf16.msra.mxu0 0
      %1853 = vmatprep.mubr.bf16.mxu0 0
      %1854 = vmatmul.mubr.bf16.gmra.mrb[0].mxu0 %v1819
      %v1855 = vpop.f32.mrb[0].mxu0
      %v1856 = vadd.f32 %v1804, %v1855
      %v1857 = vpop.f32.mrb[0].mxu0
      %v1858 = vpop.f32.mrb[0].mxu0
      %v1859 = vadd.f32 %v1804, %v1858
      %v1860 = vpop.f32.mrb[0].mxu0
      %1861 = vdwg.mxu0
      %v1862 = vmax.f32 %v1856, 0.0
      %v1863 = vmax.f32 %v1859, 0.0
      %v1864 = vpack.c.bf16 %v1863, %v1862
      %v1865 = vld [vmem:[%s20] sm:$0xf]
      %v1866 = vld [vmem:[%s20 + $0x4] sm:$0xf]
      %v1867 = vld [vmem:[%s20 + $0x8] sm:$0xf]
      %v1868 = vld [vmem:[%s20 + $0xc] sm:$0xf]
      %v1869 = vld [vmem:[%s20 + $0x10] sm:$0xf]
      %v1870 = vld [vmem:[%s20 + $0x14] sm:$0xf]
      %v1871 = vld [vmem:[%s20 + $0x18] sm:$0xf]
      %v1872 = vld [vmem:[%s20 + $0x1c] sm:$0xf]
      %v1873 = vld [vmem:[%s21] sm:$0x1]
      %v1875 = vlaneseq
      %v1876 = vshrl.u32 %v1875, 7
      %v1877 = vsub.s32 0, %v1876
      %v1878 = vrot.slane %v1873, %v1877
      %v1888 = vunpack.c.l.b16 %v1865
      %v1889 = vunpack.c.l.b16 %v1866
      %v1890 = vunpack.c.l.b16 %v1867
      %v1891 = vunpack.c.l.b16 %v1868
      %v1892 = vunpack.c.l.b16 %v1869
      %v1893 = vunpack.c.l.b16 %v1870
      %v1894 = vunpack.c.l.b16 %v1871
      %v1895 = vunpack.c.l.b16 %v1872
      %v1896 = vpack.c.b16 %v1889, %v1888
      %v1897 = vpack.c.b16 %v1891, %v1890
      %v1898 = vpack.c.b16 %v1893, %v1892
      %v1899 = vpack.c.b16 %v1895, %v1894
      %v1905 = vsel %vm1101, %v1864, 0
      %1907 = vmatprep.subr.bf16.mxu0 0
      %1908 = vmatpush1.bf16.msra.mxu0 %v1896
      %1909 = vmatprep.subr.bf16.mxu0 0
      %1910 = vmatpush1.bf16.msra.mxu0 %v1897
      %1911 = vmatprep.subr.bf16.mxu0 0
      %1912 = vmatpush1.bf16.msra.mxu0 %v1898
      %1913 = vmatprep.subr.bf16.mxu0 0
      %1914 = vmatpush1.bf16.msra.mxu0 %v1899
      %1915 = vmatprep.subr.bf16.mxu0 0
      %1916 = vmatpush1.bf16.msra.mxu0 0
      %1917 = vmatprep.subr.bf16.mxu0 0
      %1918 = vmatpush1.bf16.msra.mxu0 0
      %1919 = vmatprep.subr.bf16.mxu0 0
      %1920 = vmatpush1.bf16.msra.mxu0 0
      %1921 = vmatprep.subr.bf16.mxu0 0
      %1922 = vmatpush1.bf16.msra.mxu0 0
      %1923 = vmatprep.subr.bf16.mxu0 0
      %1924 = vmatpush1.bf16.msra.mxu0 0
      %1925 = vmatprep.subr.bf16.mxu0 0
      %1926 = vmatpush1.bf16.msra.mxu0 0
      %1927 = vmatprep.subr.bf16.mxu0 0
      %1928 = vmatpush1.bf16.msra.mxu0 0
      %1929 = vmatprep.subr.bf16.mxu0 0
      %1930 = vmatpush1.bf16.msra.mxu0 0
      %1931 = vmatprep.subr.bf16.mxu0 0
      %1932 = vmatpush1.bf16.msra.mxu0 0
      %1933 = vmatprep.subr.bf16.mxu0 0
      %1934 = vmatpush1.bf16.msra.mxu0 0
      %1935 = vmatprep.subr.bf16.mxu0 0
      %1936 = vmatpush1.bf16.msra.mxu0 0
      %1937 = vmatprep.subr.bf16.mxu0 0
      %1938 = vmatpush1.bf16.msra.mxu0 0
      %1939 = vmatprep.mubr.bf16.mxu0 0
      %1940 = vmatmul.mubr.bf16.gmra.mrb[0].mxu0 %v1905
      %v1941 = vpop.f32.mrb[0].mxu0
      %v1942 = vadd.f32 %v1878, %v1941
      %v1943 = vpop.f32.mrb[0].mxu0
      %v1944 = vpop.f32.mrb[0].mxu0
      %v1945 = vadd.f32 %v1878, %v1944
      %v1946 = vpop.f32.mrb[0].mxu0
      %1947 = vdwg.mxu0
      %v1948 = vadd.f32 %v1942, %v1792
      %v1949 = vadd.f32 %v1945, %v1793
      %v1950 = vld [vmem:[%s22] sm:$0x1]
      %v1951 = vld [vmem:[%s23] sm:$0x1]
      %v1952 = vsel %vm787, %v1948, 0.0
      %1953 = vadd.xlane.f32.xlu0 %v1952
      %v1954 = vpop.xlane.xlu0 %1953
      %v1955 = vsel %vm787, %v1949, 0.0
      %1956 = vadd.xlane.f32.xlu0 %v1955
      %v1957 = vpop.xlane.xlu0 %1956
      %v1958 = vmul.f32 %v1954, %v794
      %v1959 = vmul.f32 %v1957, %v794
      %v1960 = vsub.f32 %v1948, %v1958
      %v1961 = vsub.f32 %v1949, %v1959
      %v1962 = vmul.f32 %v1960, %v1960
      %v1963 = vmul.f32 %v1961, %v1961
      %v1964 = vsel %vm787, %v1962, 0.0
      %1965 = vadd.xlane.f32.xlu0 %v1964
      %v1966 = vpop.xlane.xlu0 %1965
      %v1967 = vsel %vm787, %v1963, 0.0
      %1968 = vadd.xlane.f32.xlu0 %v1967
      %v1969 = vpop.xlane.xlu0 %1968
      %v1970 = vmul.f32 %v1966, %v794
      %v1971 = vmul.f32 %v1969, %v794
      %v1972 = vadd.f32 %v1970, 1e-06
      %v1973 = vadd.f32 %v1971, 1e-06
      %v1974 = vrsqrt.pop %v1972
      %v1975 = vrsqrt.pop %v1973
      %v1976 = vmul.f32 %v1960, %v1974
      %v1977 = vmul.f32 %v1961, %v1975
      %v1979 = vlaneseq
      %v1980 = vshrl.u32 %v1979, 7
      %v1981 = vsub.s32 0, %v1980
      %v1982 = vrot.slane %v1950, %v1981
      %v1984 = vmul.f32 %v1976, %v1982
      %v1985 = vmul.f32 %v1977, %v1982
      %v1987 = vlaneseq
      %v1988 = vshrl.u32 %v1987, 7
      %v1989 = vsub.s32 0, %v1988
      %v1990 = vrot.slane %v1951, %v1989
      %v1992 = vadd.f32 %v1984, %v1990
      %v1993 = vadd.f32 %v1985, %v1990
      %v1994 = vpack.c.bf16 %v1993, %v1992
      %s1995 = scalar_lea.vmem %s9, 16
      %v1996 = vld [vmem:[%s1995] sm:$0xf]
      %v1997 = vld [vmem:[%s1995 + $0x4] sm:$0xf]
      %v1998 = vld [vmem:[%s1995 + $0x8] sm:$0xf]
      %v1999 = vld [vmem:[%s1995 + $0xc] sm:$0xf]
      %v2004 = vunpack.c.l.b16 %v1996
      %v2005 = vunpack.c.l.b16 %v1997
      %v2006 = vunpack.c.l.b16 %v1998
      %v2007 = vunpack.c.l.b16 %v1999
      %v2008 = vpack.c.b16 %v2005, %v2004
      %v2009 = vpack.c.b16 %v2007, %v2006
      %v2013 = vsel %vm787, %v1994, 0
      %2015 = vmatprep.subr.bf16.mxu0 0
      %2016 = vmatpush1.bf16.msra.mxu0 %v2008
      %2017 = vmatprep.subr.bf16.mxu0 0
      %2018 = vmatpush1.bf16.msra.mxu0 %v2009
      %2019 = vmatprep.subr.bf16.mxu0 0
      %2020 = vmatpush1.bf16.msra.mxu0 0
      %2021 = vmatprep.subr.bf16.mxu0 0
      %2022 = vmatpush1.bf16.msra.mxu0 0
      %2023 = vmatprep.subr.bf16.mxu0 0
      %2024 = vmatpush1.bf16.msra.mxu0 0
      %2025 = vmatprep.subr.bf16.mxu0 0
      %2026 = vmatpush1.bf16.msra.mxu0 0
      %2027 = vmatprep.subr.bf16.mxu0 0
      %2028 = vmatpush1.bf16.msra.mxu0 0
      %2029 = vmatprep.subr.bf16.mxu0 0
      %2030 = vmatpush1.bf16.msra.mxu0 0
      %2031 = vmatprep.subr.bf16.mxu0 0
      %2032 = vmatpush1.bf16.msra.mxu0 0
      %2033 = vmatprep.subr.bf16.mxu0 0
      %2034 = vmatpush1.bf16.msra.mxu0 0
      %2035 = vmatprep.subr.bf16.mxu0 0
      %2036 = vmatpush1.bf16.msra.mxu0 0
      %2037 = vmatprep.subr.bf16.mxu0 0
      %2038 = vmatpush1.bf16.msra.mxu0 0
      %2039 = vmatprep.subr.bf16.mxu0 0
      %2040 = vmatpush1.bf16.msra.mxu0 0
      %2041 = vmatprep.subr.bf16.mxu0 0
      %2042 = vmatpush1.bf16.msra.mxu0 0
      %2043 = vmatprep.subr.bf16.mxu0 0
      %2044 = vmatpush1.bf16.msra.mxu0 0
      %2045 = vmatprep.subr.bf16.mxu0 0
      %2046 = vmatpush1.bf16.msra.mxu0 0
      %2047 = vmatprep.mubr.bf16.mxu0 0
      %2048 = vmatmul.mubr.bf16.gmra.mrb[0].mxu0 %v2013
      %v2049 = vpop.f32.mrb[0].mxu0
      %v2050 = vadd.f32 0.0, %v2049
      %v2051 = vpop.f32.mrb[0].mxu0
      %v2052 = vpop.f32.mrb[0].mxu0
      %v2053 = vadd.f32 0.0, %v2052
      %v2054 = vpop.f32.mrb[0].mxu0
      %2055 = vdwg.mxu0
      %v2056 = vmul.f32 %v2050, 0.35355338
      %v2057 = vmul.f32 %v2053, 0.35355338
      %v2058 = vmul.f32 %v2050, %v961
      %v2059 = vmul.f32 %v2053, %v963
      %v2060 = vmul.f32 %v2050, %v965
      %v2061 = vmul.f32 %v2053, %v967
      %v2062 = vmul.f32 %v2050, %v969
      %v2063 = vmul.f32 %v2053, %v971
      %v2064 = vmul.f32 %v2050, %v973
      %v2065 = vmul.f32 %v2053, %v975
      %v2066 = vpack.c.bf16 %v2059, %v2058
      %v2067 = vpack.c.bf16 %v2061, %v2060
      %v2068 = vpack.c.bf16 %v2063, %v2062
      %v2069 = vpack.c.bf16 %v2065, %v2064
      %v2070 = vmul.f32 %v2050, %v997
      %v2071 = vmul.f32 %v2053, %v999
      %v2072 = vmul.f32 %v2050, %v1001
      %v2073 = vmul.f32 %v2053, %v1003
      %v2074 = vmul.f32 %v2050, %v1005
      %v2075 = vmul.f32 %v2053, %v1007
      %v2076 = vmul.f32 %v2050, %v1009
      %v2077 = vmul.f32 %v2053, %v1011
      %v2078 = vpack.c.bf16 %v2071, %v2070
      %v2079 = vpack.c.bf16 %v2073, %v2072
      %v2080 = vpack.c.bf16 %v2075, %v2074
      %v2081 = vpack.c.bf16 %v2077, %v2076
      %v2082 = vpack.c.bf16 %v2057, %v2056
      %2087 = vrot.lane.b32.xlu0 %v2066, 96
      %v2088 = vpop.permute.xlu0 %2087
      %2089 = vrot.lane.b32.xlu0 %v2067, 96
      %v2090 = vpop.permute.xlu0 %2089
      %2091 = vrot.lane.b32.xlu0 %v2068, 96
      %v2092 = vpop.permute.xlu0 %2091
      %2093 = vrot.lane.b32.xlu0 %v2069, 96
      %v2094 = vpop.permute.xlu0 %2093
      %v2096 = vsel %vm787, %v2082, 0
      %v2099 = vsel %vm787, %v2088, 0
      %v2102 = vsel %vm787, %v2090, 0
      %v2105 = vsel %vm787, %v2092, 0
      %v2108 = vsel %vm787, %v2094, 0
      %2110 = vmatprep.subr.bf16.mxu0 0
      %2111 = vmatpush1.bf16.xpose.msra.mxu0 %v2099
      %2112 = vmatprep.subr.bf16.mxu0 0
      %2113 = vmatpush1.bf16.xpose.msra.mxu0 %v2102
      %2114 = vmatprep.subr.bf16.mxu0 0
      %2115 = vmatpush1.bf16.xpose.msra.mxu0 %v2105
      %2116 = vmatprep.subr.bf16.mxu0 0
      %2117 = vmatpush1.bf16.xpose.msra.mxu0 %v2108
      %2118 = vmatprep.subr.bf16.mxu0 0
      %2119 = vmatpush1.bf16.xpose.msra.mxu0 0
      %2120 = vmatprep.subr.bf16.mxu0 0
      %2121 = vmatpush1.bf16.xpose.msra.mxu0 0
      %2122 = vmatprep.subr.bf16.mxu0 0
      %2123 = vmatpush1.bf16.xpose.msra.mxu0 0
      %2124 = vmatprep.subr.bf16.mxu0 0
      %2125 = vmatpush1.bf16.xpose.msra.mxu0 0
      %2126 = vmatprep.subr.bf16.mxu0 0
      %2127 = vmatpush1.bf16.xpose.msra.mxu0 0
      %2128 = vmatprep.subr.bf16.mxu0 0
      %2129 = vmatpush1.bf16.xpose.msra.mxu0 0
      %2130 = vmatprep.subr.bf16.mxu0 0
      %2131 = vmatpush1.bf16.xpose.msra.mxu0 0
      %2132 = vmatprep.subr.bf16.mxu0 0
      %2133 = vmatpush1.bf16.xpose.msra.mxu0 0
      %2134 = vmatprep.subr.bf16.mxu0 0
      %2135 = vmatpush1.bf16.xpose.msra.mxu0 0
      %2136 = vmatprep.subr.bf16.mxu0 0
      %2137 = vmatpush1.bf16.xpose.msra.mxu0 0
      %2138 = vmatprep.subr.bf16.mxu0 0
      %2139 = vmatpush1.bf16.xpose.msra.mxu0 0
      %2140 = vmatprep.subr.bf16.mxu0 0
      %2141 = vmatpush1.bf16.xpose.msra.mxu0 0
      %2142 = vmatprep.mubr.bf16.mxu0 0
      %2143 = vmatmul.mubr.bf16.gmra.mrb[0].mxu0 %v2096
      %v2144 = vpop.f32.mrb[0].mxu0
      %v2145 = vadd.f32 %v886, %v2144
      %v2146 = vpop.f32.mrb[0].mxu0
      %v2147 = vpop.f32.mrb[0].mxu0
      %v2148 = vadd.f32 %v887, %v2147
      %v2149 = vpop.f32.mrb[0].mxu0
      %2150 = vdwg.mxu0
      %v2151 = vsel %vm1101, %v2145, -inf
      %2152 = vmax.xlane.f32.xlu0 %v2151
      %v2153 = vpop.xlane.xlu0 %2152
      %v2154 = vsel %vm1101, %v2148, -inf
      %2155 = vmax.xlane.f32.xlu0 %v2154
      %v2156 = vpop.xlane.xlu0 %2155
      %v2157 = vsub.f32 %v2145, %v2153
      %v2158 = vsub.f32 %v2148, %v2156
      %v2159 = vmul.f32 %v2157, 1.442695
      %v2160 = vpow.pop %v2159
      %v2161 = vmul.f32 %v2158, 1.442695
      %v2162 = vpow.pop %v2161
      %v2163 = vpack.c.bf16 %v2162, %v2160
      %2168 = vrot.lane.b32.xlu0 %v2078, 64
      %v2169 = vpop.permute.xlu0 %2168
      %2170 = vrot.lane.b32.xlu0 %v2079, 64
      %v2171 = vpop.permute.xlu0 %2170
      %2172 = vrot.lane.b32.xlu0 %v2080, 64
      %v2173 = vpop.permute.xlu0 %2172
      %2174 = vrot.lane.b32.xlu0 %v2081, 64
      %v2175 = vpop.permute.xlu0 %2174
      %v2181 = vsel %vm1101, %v2163, 0
      %2183 = vmatprep.subr.bf16.mxu0 0
      %2184 = vmatpush1.bf16.msra.mxu0 %v2169
      %2185 = vmatprep.subr.bf16.mxu0 0
      %2186 = vmatpush1.bf16.msra.mxu0 %v2171
      %2187 = vmatprep.subr.bf16.mxu0 0
      %2188 = vmatpush1.bf16.msra.mxu0 %v2173
      %2189 = vmatprep.subr.bf16.mxu0 0
      %2190 = vmatpush1.bf16.msra.mxu0 %v2175
      %2191 = vmatprep.subr.bf16.mxu0 0
      %2192 = vmatpush1.bf16.msra.mxu0 0
      %2193 = vmatprep.subr.bf16.mxu0 0
      %2194 = vmatpush1.bf16.msra.mxu0 0
      %2195 = vmatprep.subr.bf16.mxu0 0
      %2196 = vmatpush1.bf16.msra.mxu0 0
      %2197 = vmatprep.subr.bf16.mxu0 0
      %2198 = vmatpush1.bf16.msra.mxu0 0
      %2199 = vmatprep.subr.bf16.mxu0 0
      %2200 = vmatpush1.bf16.msra.mxu0 0
      %2201 = vmatprep.subr.bf16.mxu0 0
      %2202 = vmatpush1.bf16.msra.mxu0 0
      %2203 = vmatprep.subr.bf16.mxu0 0
      %2204 = vmatpush1.bf16.msra.mxu0 0
      %2205 = vmatprep.subr.bf16.mxu0 0
      %2206 = vmatpush1.bf16.msra.mxu0 0
      %2207 = vmatprep.subr.bf16.mxu0 0
      %2208 = vmatpush1.bf16.msra.mxu0 0
      %2209 = vmatprep.subr.bf16.mxu0 0
      %2210 = vmatpush1.bf16.msra.mxu0 0
      %2211 = vmatprep.subr.bf16.mxu0 0
      %2212 = vmatpush1.bf16.msra.mxu0 0
      %2213 = vmatprep.subr.bf16.mxu0 0
      %2214 = vmatpush1.bf16.msra.mxu0 0
      %2215 = vmatprep.mubr.bf16.mxu0 0
      %2216 = vmatmul.mubr.bf16.gmra.mrb[0].mxu0 %v2181
      %v2217 = vpop.f32.mrb[0].mxu0
      %v2218 = vadd.f32 0.0, %v2217
      %v2219 = vpop.f32.mrb[0].mxu0
      %v2220 = vpop.f32.mrb[0].mxu0
      %v2221 = vadd.f32 0.0, %v2220
      %v2222 = vpop.f32.mrb[0].mxu0
      %2223 = vdwg.mxu0
      %2224 = vmatprep.subr.bf16.mxu0 0
      %2225 = vmatpush1.bf16.msra.mxu0 %v850
      %2226 = vmatprep.subr.bf16.mxu0 0
      %2227 = vmatpush1.bf16.msra.mxu0 %v851
      %2228 = vmatprep.subr.bf16.mxu0 0
      %2229 = vmatpush1.bf16.msra.mxu0 %v852
      %2230 = vmatprep.subr.bf16.mxu0 0
      %2231 = vmatpush1.bf16.msra.mxu0 %v853
      %2232 = vmatprep.subr.bf16.mxu0 0
      %2233 = vmatpush1.bf16.msra.mxu0 0
      %2234 = vmatprep.subr.bf16.mxu0 0
      %2235 = vmatpush1.bf16.msra.mxu0 0
      %2236 = vmatprep.subr.bf16.mxu0 0
      %2237 = vmatpush1.bf16.msra.mxu0 0
      %2238 = vmatprep.subr.bf16.mxu0 0
      %2239 = vmatpush1.bf16.msra.mxu0 0
      %2240 = vmatprep.subr.bf16.mxu0 0
      %2241 = vmatpush1.bf16.msra.mxu0 0
      %2242 = vmatprep.subr.bf16.mxu0 0
      %2243 = vmatpush1.bf16.msra.mxu0 0
      %2244 = vmatprep.subr.bf16.mxu0 0
      %2245 = vmatpush1.bf16.msra.mxu0 0
      %2246 = vmatprep.subr.bf16.mxu0 0
      %2247 = vmatpush1.bf16.msra.mxu0 0
      %2248 = vmatprep.subr.bf16.mxu0 0
      %2249 = vmatpush1.bf16.msra.mxu0 0
      %2250 = vmatprep.subr.bf16.mxu0 0
      %2251 = vmatpush1.bf16.msra.mxu0 0
      %2252 = vmatprep.subr.bf16.mxu0 0
      %2253 = vmatpush1.bf16.msra.mxu0 0
      %2254 = vmatprep.subr.bf16.mxu0 0
      %2255 = vmatpush1.bf16.msra.mxu0 0
      %2256 = vmatprep.mubr.bf16.mxu0 0
      %2257 = vmatmul.mubr.bf16.gmra.mrb[0].mxu0 %v2181
      %v2258 = vpop.f32.mrb[0].mxu0
      %v2259 = vadd.f32 0.0, %v2258
      %v2260 = vpop.f32.mrb[0].mxu0
      %v2261 = vpop.f32.mrb[0].mxu0
      %v2262 = vadd.f32 0.0, %v2261
      %v2263 = vpop.f32.mrb[0].mxu0
      %2264 = vdwg.mxu0
      %v2265 = vmax.f32 %v2259, 1e-20
      %v2266 = vmax.f32 %v2262, 1e-20
      %v2267 = vrcp.pop %v2265
      %v2268 = vrcp.pop %v2266
      %v2269 = vmul.f32 %v2218, %v2267
      %v2270 = vmul.f32 %v2221, %v2268
      %v2271 = vpack.c.bf16 %v2270, %v2269
      %s2272 = scalar_lea.vmem %s10, 16
      %v2273 = vld [vmem:[%s2272] sm:$0xf]
      %v2274 = vld [vmem:[%s2272 + $0x4] sm:$0xf]
      %v2275 = vld [vmem:[%s2272 + $0x8] sm:$0xf]
      %v2276 = vld [vmem:[%s2272 + $0xc] sm:$0xf]
      %v2281 = vunpack.c.l.b16 %v2273
      %v2282 = vunpack.c.l.b16 %v2274
      %v2283 = vunpack.c.l.b16 %v2275
      %v2284 = vunpack.c.l.b16 %v2276
      %v2285 = vpack.c.b16 %v2282, %v2281
      %v2286 = vpack.c.b16 %v2284, %v2283
      %v2290 = vsel %vm787, %v2271, 0
      %2292 = vmatprep.subr.bf16.mxu0 0
      %2293 = vmatpush1.bf16.msra.mxu0 %v2285
      %2294 = vmatprep.subr.bf16.mxu0 0
      %2295 = vmatpush1.bf16.msra.mxu0 %v2286
      %2296 = vmatprep.subr.bf16.mxu0 0
      %2297 = vmatpush1.bf16.msra.mxu0 0
      %2298 = vmatprep.subr.bf16.mxu0 0
      %2299 = vmatpush1.bf16.msra.mxu0 0
      %2300 = vmatprep.subr.bf16.mxu0 0
      %2301 = vmatpush1.bf16.msra.mxu0 0
      %2302 = vmatprep.subr.bf16.mxu0 0
      %2303 = vmatpush1.bf16.msra.mxu0 0
      %2304 = vmatprep.subr.bf16.mxu0 0
      %2305 = vmatpush1.bf16.msra.mxu0 0
      %2306 = vmatprep.subr.bf16.mxu0 0
      %2307 = vmatpush1.bf16.msra.mxu0 0
      %2308 = vmatprep.subr.bf16.mxu0 0
      %2309 = vmatpush1.bf16.msra.mxu0 0
      %2310 = vmatprep.subr.bf16.mxu0 0
      %2311 = vmatpush1.bf16.msra.mxu0 0
      %2312 = vmatprep.subr.bf16.mxu0 0
      %2313 = vmatpush1.bf16.msra.mxu0 0
      %2314 = vmatprep.subr.bf16.mxu0 0
      %2315 = vmatpush1.bf16.msra.mxu0 0
      %2316 = vmatprep.subr.bf16.mxu0 0
      %2317 = vmatpush1.bf16.msra.mxu0 0
      %2318 = vmatprep.subr.bf16.mxu0 0
      %2319 = vmatpush1.bf16.msra.mxu0 0
      %2320 = vmatprep.subr.bf16.mxu0 0
      %2321 = vmatpush1.bf16.msra.mxu0 0
      %2322 = vmatprep.subr.bf16.mxu0 0
      %2323 = vmatpush1.bf16.msra.mxu0 0
      %2324 = vmatprep.mubr.bf16.mxu0 0
      %2325 = vmatmul.mubr.bf16.gmra.mrb[0].mxu0 %v2290
      %v2326 = vpop.f32.mrb[0].mxu0
      %v2327 = vadd.f32 %v1992, %v2326
      %v2328 = vpop.f32.mrb[0].mxu0
      %v2329 = vpop.f32.mrb[0].mxu0
      %v2330 = vadd.f32 %v1993, %v2329
      %v2331 = vpop.f32.mrb[0].mxu0
      %2332 = vdwg.mxu0
      %s2333 = scalar_lea.vmem %s11, 1
      %v2334 = vld [vmem:[%s2333] sm:$0x1]
      %s2335 = scalar_lea.vmem %s12, 1
      %v2336 = vld [vmem:[%s2335] sm:$0x1]
      %v2337 = vsel %vm787, %v2327, 0.0
      %2338 = vadd.xlane.f32.xlu0 %v2337
      %v2339 = vpop.xlane.xlu0 %2338
      %v2340 = vsel %vm787, %v2330, 0.0
      %2341 = vadd.xlane.f32.xlu0 %v2340
      %v2342 = vpop.xlane.xlu0 %2341
      %v2343 = vmul.f32 %v2339, %v794
      %v2344 = vmul.f32 %v2342, %v794
      %v2345 = vsub.f32 %v2327, %v2343
      %v2346 = vsub.f32 %v2330, %v2344
      %v2347 = vmul.f32 %v2345, %v2345
      %v2348 = vmul.f32 %v2346, %v2346
      %v2349 = vsel %vm787, %v2347, 0.0
      %2350 = vadd.xlane.f32.xlu0 %v2349
      %v2351 = vpop.xlane.xlu0 %2350
      %v2352 = vsel %vm787, %v2348, 0.0
      %2353 = vadd.xlane.f32.xlu0 %v2352
      %v2354 = vpop.xlane.xlu0 %2353
      %v2355 = vmul.f32 %v2351, %v794
      %v2356 = vmul.f32 %v2354, %v794
      %v2357 = vadd.f32 %v2355, 1e-06
      %v2358 = vadd.f32 %v2356, 1e-06
      %v2359 = vrsqrt.pop %v2357
      %v2360 = vrsqrt.pop %v2358
      %v2361 = vmul.f32 %v2345, %v2359
      %v2362 = vmul.f32 %v2346, %v2360
      %v2364 = vlaneseq
      %v2365 = vshrl.u32 %v2364, 7
      %v2366 = vsub.s32 0, %v2365
      %v2367 = vrot.slane %v2334, %v2366
      %v2369 = vmul.f32 %v2361, %v2367
      %v2370 = vmul.f32 %v2362, %v2367
      %v2372 = vlaneseq
      %v2373 = vshrl.u32 %v2372, 7
      %v2374 = vsub.s32 0, %v2373
      %v2375 = vrot.slane %v2336, %v2374
      %v2377 = vadd.f32 %v2369, %v2375
      %v2378 = vadd.f32 %v2370, %v2375
      %v2379 = vpack.c.bf16 %v2378, %v2377
      %s2380 = scalar_lea.vmem %s13, 16
      %v2381 = vld [vmem:[%s2380] sm:$0xf]
      %v2382 = vld [vmem:[%s2380 + $0x4] sm:$0xf]
      %v2383 = vld [vmem:[%s2380 + $0x8] sm:$0xf]
      %v2384 = vld [vmem:[%s2380 + $0xc] sm:$0xf]
      %v2389 = vunpack.c.l.b16 %v2381
      %v2390 = vunpack.c.l.b16 %v2382
      %v2391 = vunpack.c.l.b16 %v2383
      %v2392 = vunpack.c.l.b16 %v2384
      %v2393 = vpack.c.b16 %v2390, %v2389
      %v2394 = vpack.c.b16 %v2392, %v2391
      %v2398 = vsel %vm787, %v2379, 0
      %2400 = vmatprep.subr.bf16.mxu0 0
      %2401 = vmatpush1.bf16.msra.mxu0 %v2393
      %2402 = vmatprep.subr.bf16.mxu0 0
      %2403 = vmatpush1.bf16.msra.mxu0 %v2394
      %2404 = vmatprep.subr.bf16.mxu0 0
      %2405 = vmatpush1.bf16.msra.mxu0 0
      %2406 = vmatprep.subr.bf16.mxu0 0
      %2407 = vmatpush1.bf16.msra.mxu0 0
      %2408 = vmatprep.subr.bf16.mxu0 0
      %2409 = vmatpush1.bf16.msra.mxu0 0
      %2410 = vmatprep.subr.bf16.mxu0 0
      %2411 = vmatpush1.bf16.msra.mxu0 0
      %2412 = vmatprep.subr.bf16.mxu0 0
      %2413 = vmatpush1.bf16.msra.mxu0 0
      %2414 = vmatprep.subr.bf16.mxu0 0
      %2415 = vmatpush1.bf16.msra.mxu0 0
      %2416 = vmatprep.subr.bf16.mxu0 0
      %2417 = vmatpush1.bf16.msra.mxu0 0
      %2418 = vmatprep.subr.bf16.mxu0 0
      %2419 = vmatpush1.bf16.msra.mxu0 0
      %2420 = vmatprep.subr.bf16.mxu0 0
      %2421 = vmatpush1.bf16.msra.mxu0 0
      %2422 = vmatprep.subr.bf16.mxu0 0
      %2423 = vmatpush1.bf16.msra.mxu0 0
      %2424 = vmatprep.subr.bf16.mxu0 0
      %2425 = vmatpush1.bf16.msra.mxu0 0
      %2426 = vmatprep.subr.bf16.mxu0 0
      %2427 = vmatpush1.bf16.msra.mxu0 0
      %2428 = vmatprep.subr.bf16.mxu0 0
      %2429 = vmatpush1.bf16.msra.mxu0 0
      %2430 = vmatprep.subr.bf16.mxu0 0
      %2431 = vmatpush1.bf16.msra.mxu0 0
      %2432 = vmatprep.mubr.bf16.mxu0 0
      %2433 = vmatmul.mubr.bf16.gmra.mrb[0].mxu0 %v2398
      %v2434 = vpop.f32.mrb[0].mxu0
      %v2435 = vadd.f32 0.0, %v2434
      %v2436 = vpop.f32.mrb[0].mxu0
      %v2437 = vpop.f32.mrb[0].mxu0
      %v2438 = vadd.f32 0.0, %v2437
      %v2439 = vpop.f32.mrb[0].mxu0
      %2440 = vdwg.mxu0
      %v2441 = vmul.f32 %v2435, 0.35355338
      %v2442 = vmul.f32 %v2438, 0.35355338
      %s2443 = scalar_lea.vmem %s14, 16
      %v2444 = vld [vmem:[%s2443] sm:$0xf]
      %v2445 = vld [vmem:[%s2443 + $0x4] sm:$0xf]
      %v2446 = vld [vmem:[%s2443 + $0x8] sm:$0xf]
      %v2447 = vld [vmem:[%s2443 + $0xc] sm:$0xf]
      %v2452 = vunpack.c.l.b16 %v2444
      %v2453 = vunpack.c.l.b16 %v2445
      %v2454 = vunpack.c.l.b16 %v2446
      %v2455 = vunpack.c.l.b16 %v2447
      %v2456 = vpack.c.b16 %v2453, %v2452
      %v2457 = vpack.c.b16 %v2455, %v2454
      %2460 = vmatprep.subr.bf16.mxu0 0
      %2461 = vmatpush1.bf16.msra.mxu0 %v2456
      %2462 = vmatprep.subr.bf16.mxu0 0
      %2463 = vmatpush1.bf16.msra.mxu0 %v2457
      %2464 = vmatprep.subr.bf16.mxu0 0
      %2465 = vmatpush1.bf16.msra.mxu0 0
      %2466 = vmatprep.subr.bf16.mxu0 0
      %2467 = vmatpush1.bf16.msra.mxu0 0
      %2468 = vmatprep.subr.bf16.mxu0 0
      %2469 = vmatpush1.bf16.msra.mxu0 0
      %2470 = vmatprep.subr.bf16.mxu0 0
      %2471 = vmatpush1.bf16.msra.mxu0 0
      %2472 = vmatprep.subr.bf16.mxu0 0
      %2473 = vmatpush1.bf16.msra.mxu0 0
      %2474 = vmatprep.subr.bf16.mxu0 0
      %2475 = vmatpush1.bf16.msra.mxu0 0
      %2476 = vmatprep.subr.bf16.mxu0 0
      %2477 = vmatpush1.bf16.msra.mxu0 0
      %2478 = vmatprep.subr.bf16.mxu0 0
      %2479 = vmatpush1.bf16.msra.mxu0 0
      %2480 = vmatprep.subr.bf16.mxu0 0
      %2481 = vmatpush1.bf16.msra.mxu0 0
      %2482 = vmatprep.subr.bf16.mxu0 0
      %2483 = vmatpush1.bf16.msra.mxu0 0
      %2484 = vmatprep.subr.bf16.mxu0 0
      %2485 = vmatpush1.bf16.msra.mxu0 0
      %2486 = vmatprep.subr.bf16.mxu0 0
      %2487 = vmatpush1.bf16.msra.mxu0 0
      %2488 = vmatprep.subr.bf16.mxu0 0
      %2489 = vmatpush1.bf16.msra.mxu0 0
      %2490 = vmatprep.subr.bf16.mxu0 0
      %2491 = vmatpush1.bf16.msra.mxu0 0
      %2492 = vmatprep.mubr.bf16.mxu0 0
      %2493 = vmatmul.mubr.bf16.gmra.mrb[0].mxu0 %v1407
      %v2494 = vpop.f32.mrb[0].mxu0
      %v2495 = vadd.f32 0.0, %v2494
      %v2496 = vpop.f32.mrb[0].mxu0
      %v2497 = vpop.f32.mrb[0].mxu0
      %v2498 = vadd.f32 0.0, %v2497
      %v2499 = vpop.f32.mrb[0].mxu0
      %2500 = vdwg.mxu0
      %v2501 = vmul.f32 %v2495, %v842
      %v2502 = vmul.f32 %v2498, %v843
      %v2503 = vmul.f32 %v2495, %v844
      %v2504 = vmul.f32 %v2498, %v845
      %v2505 = vmul.f32 %v2495, %v846
      %v2506 = vmul.f32 %v2498, %v847
      %v2507 = vmul.f32 %v2495, %v848
      %v2508 = vmul.f32 %v2498, %v849
      %v2509 = vpack.c.bf16 %v2502, %v2501
      %v2510 = vpack.c.bf16 %v2504, %v2503
      %v2511 = vpack.c.bf16 %v2506, %v2505
      %v2512 = vpack.c.bf16 %v2508, %v2507
      %v2513 = vmul.f32 %v2495, %v1471
      %v2514 = vmul.f32 %v2498, %v1473
      %v2515 = vmul.f32 %v2495, %v1475
      %v2516 = vmul.f32 %v2498, %v1477
      %v2517 = vmul.f32 %v2495, %v1479
      %v2518 = vmul.f32 %v2498, %v1481
      %v2519 = vmul.f32 %v2495, %v1483
      %v2520 = vmul.f32 %v2498, %v1485
      %v2521 = vpack.c.bf16 %v2514, %v2513
      %v2522 = vpack.c.bf16 %v2516, %v2515
      %v2523 = vpack.c.bf16 %v2518, %v2517
      %v2524 = vpack.c.bf16 %v2520, %v2519
      %v2525 = vpack.c.bf16 %v2442, %v2441
      %v2527 = vsel %vm787, %v2525, 0
      %v2530 = vsel %vm787, %v2509, 0
      %v2533 = vsel %vm787, %v2510, 0
      %v2536 = vsel %vm787, %v2511, 0
      %v2539 = vsel %vm787, %v2512, 0
      %2541 = vmatprep.subr.bf16.mxu0 0
      %2542 = vmatpush1.bf16.xpose.msra.mxu0 %v2530
      %2543 = vmatprep.subr.bf16.mxu0 0
      %2544 = vmatpush1.bf16.xpose.msra.mxu0 %v2533
      %2545 = vmatprep.subr.bf16.mxu0 0
      %2546 = vmatpush1.bf16.xpose.msra.mxu0 %v2536
      %2547 = vmatprep.subr.bf16.mxu0 0
      %2548 = vmatpush1.bf16.xpose.msra.mxu0 %v2539
      %2549 = vmatprep.subr.bf16.mxu0 0
      %2550 = vmatpush1.bf16.xpose.msra.mxu0 0
      %2551 = vmatprep.subr.bf16.mxu0 0
      %2552 = vmatpush1.bf16.xpose.msra.mxu0 0
      %2553 = vmatprep.subr.bf16.mxu0 0
      %2554 = vmatpush1.bf16.xpose.msra.mxu0 0
      %2555 = vmatprep.subr.bf16.mxu0 0
      %2556 = vmatpush1.bf16.xpose.msra.mxu0 0
      %2557 = vmatprep.subr.bf16.mxu0 0
      %2558 = vmatpush1.bf16.xpose.msra.mxu0 0
      %2559 = vmatprep.subr.bf16.mxu0 0
      %2560 = vmatpush1.bf16.xpose.msra.mxu0 0
      %2561 = vmatprep.subr.bf16.mxu0 0
      %2562 = vmatpush1.bf16.xpose.msra.mxu0 0
      %2563 = vmatprep.subr.bf16.mxu0 0
      %2564 = vmatpush1.bf16.xpose.msra.mxu0 0
      %2565 = vmatprep.subr.bf16.mxu0 0
      %2566 = vmatpush1.bf16.xpose.msra.mxu0 0
      %2567 = vmatprep.subr.bf16.mxu0 0
      %2568 = vmatpush1.bf16.xpose.msra.mxu0 0
      %2569 = vmatprep.subr.bf16.mxu0 0
      %2570 = vmatpush1.bf16.xpose.msra.mxu0 0
      %2571 = vmatprep.subr.bf16.mxu0 0
      %2572 = vmatpush1.bf16.xpose.msra.mxu0 0
      %2573 = vmatprep.mubr.bf16.mxu0 0
      %2574 = vmatmul.mubr.bf16.gmra.mrb[0].mxu0 %v2527
      %v2575 = vpop.f32.mrb[0].mxu0
      %v2576 = vadd.f32 %v1511, %v2575
      %v2577 = vpop.f32.mrb[0].mxu0
      %v2578 = vpop.f32.mrb[0].mxu0
      %v2579 = vadd.f32 %v1511, %v2578
      %v2580 = vpop.f32.mrb[0].mxu0
      %2581 = vdwg.mxu0
      %v2582 = vsel %vm1101, %v2576, -inf
      %2583 = vmax.xlane.f32.xlu0 %v2582
      %v2584 = vpop.xlane.xlu0 %2583
      %v2585 = vsel %vm1101, %v2579, -inf
      %2586 = vmax.xlane.f32.xlu0 %v2585
      %v2587 = vpop.xlane.xlu0 %2586
      %v2588 = vsub.f32 %v2576, %v2584
      %v2589 = vsub.f32 %v2579, %v2587
      %v2590 = vmul.f32 %v2588, 1.442695
      %v2591 = vpow.pop %v2590
      %v2592 = vmul.f32 %v2589, 1.442695
      %v2593 = vpow.pop %v2592
      %v2594 = vpack.c.bf16 %v2593, %v2591
      %2599 = vrot.lane.b32.xlu0 %v2521, 96
      %v2600 = vpop.permute.xlu0 %2599
      %2601 = vrot.lane.b32.xlu0 %v2522, 96
      %v2602 = vpop.permute.xlu0 %2601
      %2603 = vrot.lane.b32.xlu0 %v2523, 96
      %v2604 = vpop.permute.xlu0 %2603
      %2605 = vrot.lane.b32.xlu0 %v2524, 96
      %v2606 = vpop.permute.xlu0 %2605
      %v2612 = vsel %vm1101, %v2594, 0
      %2614 = vmatprep.subr.bf16.mxu0 0
      %2615 = vmatpush1.bf16.msra.mxu0 %v2600
      %2616 = vmatprep.subr.bf16.mxu0 0
      %2617 = vmatpush1.bf16.msra.mxu0 %v2602
      %2618 = vmatprep.subr.bf16.mxu0 0
      %2619 = vmatpush1.bf16.msra.mxu0 %v2604
      %2620 = vmatprep.subr.bf16.mxu0 0
      %2621 = vmatpush1.bf16.msra.mxu0 %v2606
      %2622 = vmatprep.subr.bf16.mxu0 0
      %2623 = vmatpush1.bf16.msra.mxu0 0
      %2624 = vmatprep.subr.bf16.mxu0 0
      %2625 = vmatpush1.bf16.msra.mxu0 0
      %2626 = vmatprep.subr.bf16.mxu0 0
      %2627 = vmatpush1.bf16.msra.mxu0 0
      %2628 = vmatprep.subr.bf16.mxu0 0
      %2629 = vmatpush1.bf16.msra.mxu0 0
      %2630 = vmatprep.subr.bf16.mxu0 0
      %2631 = vmatpush1.bf16.msra.mxu0 0
      %2632 = vmatprep.subr.bf16.mxu0 0
      %2633 = vmatpush1.bf16.msra.mxu0 0
      %2634 = vmatprep.subr.bf16.mxu0 0
      %2635 = vmatpush1.bf16.msra.mxu0 0
      %2636 = vmatprep.subr.bf16.mxu0 0
      %2637 = vmatpush1.bf16.msra.mxu0 0
      %2638 = vmatprep.subr.bf16.mxu0 0
      %2639 = vmatpush1.bf16.msra.mxu0 0
      %2640 = vmatprep.subr.bf16.mxu0 0
      %2641 = vmatpush1.bf16.msra.mxu0 0
      %2642 = vmatprep.subr.bf16.mxu0 0
      %2643 = vmatpush1.bf16.msra.mxu0 0
      %2644 = vmatprep.subr.bf16.mxu0 0
      %2645 = vmatpush1.bf16.msra.mxu0 0
      %2646 = vmatprep.mubr.bf16.mxu0 0
      %2647 = vmatmul.mubr.bf16.gmra.mrb[0].mxu0 %v2612
      %v2648 = vpop.f32.mrb[0].mxu0
      %v2649 = vadd.f32 0.0, %v2648
      %v2650 = vpop.f32.mrb[0].mxu0
      %v2651 = vpop.f32.mrb[0].mxu0
      %v2652 = vadd.f32 0.0, %v2651
      %v2653 = vpop.f32.mrb[0].mxu0
      %2654 = vdwg.mxu0
      %2655 = vmatprep.subr.bf16.mxu0 0
      %2656 = vmatpush1.bf16.msra.mxu0 %v854
      %2657 = vmatprep.subr.bf16.mxu0 0
      %2658 = vmatpush1.bf16.msra.mxu0 %v855
      %2659 = vmatprep.subr.bf16.mxu0 0
      %2660 = vmatpush1.bf16.msra.mxu0 %v856
      %2661 = vmatprep.subr.bf16.mxu0 0
      %2662 = vmatpush1.bf16.msra.mxu0 %v857
      %2663 = vmatprep.subr.bf16.mxu0 0
      %2664 = vmatpush1.bf16.msra.mxu0 0
      %2665 = vmatprep.subr.bf16.mxu0 0
      %2666 = vmatpush1.bf16.msra.mxu0 0
      %2667 = vmatprep.subr.bf16.mxu0 0
      %2668 = vmatpush1.bf16.msra.mxu0 0
      %2669 = vmatprep.subr.bf16.mxu0 0
      %2670 = vmatpush1.bf16.msra.mxu0 0
      %2671 = vmatprep.subr.bf16.mxu0 0
      %2672 = vmatpush1.bf16.msra.mxu0 0
      %2673 = vmatprep.subr.bf16.mxu0 0
      %2674 = vmatpush1.bf16.msra.mxu0 0
      %2675 = vmatprep.subr.bf16.mxu0 0
      %2676 = vmatpush1.bf16.msra.mxu0 0
      %2677 = vmatprep.subr.bf16.mxu0 0
      %2678 = vmatpush1.bf16.msra.mxu0 0
      %2679 = vmatprep.subr.bf16.mxu0 0
      %2680 = vmatpush1.bf16.msra.mxu0 0
      %2681 = vmatprep.subr.bf16.mxu0 0
      %2682 = vmatpush1.bf16.msra.mxu0 0
      %2683 = vmatprep.subr.bf16.mxu0 0
      %2684 = vmatpush1.bf16.msra.mxu0 0
      %2685 = vmatprep.subr.bf16.mxu0 0
      %2686 = vmatpush1.bf16.msra.mxu0 0
      %2687 = vmatprep.mubr.bf16.mxu0 0
      %2688 = vmatmul.mubr.bf16.gmra.mrb[0].mxu0 %v2612
      %v2689 = vpop.f32.mrb[0].mxu0
      %v2690 = vadd.f32 0.0, %v2689
      %v2691 = vpop.f32.mrb[0].mxu0
      %v2692 = vpop.f32.mrb[0].mxu0
      %v2693 = vadd.f32 0.0, %v2692
      %v2694 = vpop.f32.mrb[0].mxu0
      %2695 = vdwg.mxu0
      %v2696 = vmax.f32 %v2690, 1e-20
      %v2697 = vmax.f32 %v2693, 1e-20
      %v2698 = vrcp.pop %v2696
      %v2699 = vrcp.pop %v2697
      %v2700 = vmul.f32 %v2649, %v2698
      %v2701 = vmul.f32 %v2652, %v2699
      %v2702 = vpack.c.bf16 %v2701, %v2700
      %s2703 = scalar_lea.vmem %s15, 16
      %v2704 = vld [vmem:[%s2703] sm:$0xf]
      %v2705 = vld [vmem:[%s2703 + $0x4] sm:$0xf]
      %v2706 = vld [vmem:[%s2703 + $0x8] sm:$0xf]
      %v2707 = vld [vmem:[%s2703 + $0xc] sm:$0xf]
      %v2712 = vunpack.c.l.b16 %v2704
      %v2713 = vunpack.c.l.b16 %v2705
      %v2714 = vunpack.c.l.b16 %v2706
      %v2715 = vunpack.c.l.b16 %v2707
      %v2716 = vpack.c.b16 %v2713, %v2712
      %v2717 = vpack.c.b16 %v2715, %v2714
      %v2721 = vsel %vm787, %v2702, 0
      %2723 = vmatprep.subr.bf16.mxu0 0
      %2724 = vmatpush1.bf16.msra.mxu0 %v2716
      %2725 = vmatprep.subr.bf16.mxu0 0
      %2726 = vmatpush1.bf16.msra.mxu0 %v2717
      %2727 = vmatprep.subr.bf16.mxu0 0
      %2728 = vmatpush1.bf16.msra.mxu0 0
      %2729 = vmatprep.subr.bf16.mxu0 0
      %2730 = vmatpush1.bf16.msra.mxu0 0
      %2731 = vmatprep.subr.bf16.mxu0 0
      %2732 = vmatpush1.bf16.msra.mxu0 0
      %2733 = vmatprep.subr.bf16.mxu0 0
      %2734 = vmatpush1.bf16.msra.mxu0 0
      %2735 = vmatprep.subr.bf16.mxu0 0
      %2736 = vmatpush1.bf16.msra.mxu0 0
      %2737 = vmatprep.subr.bf16.mxu0 0
      %2738 = vmatpush1.bf16.msra.mxu0 0
      %2739 = vmatprep.subr.bf16.mxu0 0
      %2740 = vmatpush1.bf16.msra.mxu0 0
      %2741 = vmatprep.subr.bf16.mxu0 0
      %2742 = vmatpush1.bf16.msra.mxu0 0
      %2743 = vmatprep.subr.bf16.mxu0 0
      %2744 = vmatpush1.bf16.msra.mxu0 0
      %2745 = vmatprep.subr.bf16.mxu0 0
      %2746 = vmatpush1.bf16.msra.mxu0 0
      %2747 = vmatprep.subr.bf16.mxu0 0
      %2748 = vmatpush1.bf16.msra.mxu0 0
      %2749 = vmatprep.subr.bf16.mxu0 0
      %2750 = vmatpush1.bf16.msra.mxu0 0
      %2751 = vmatprep.subr.bf16.mxu0 0
      %2752 = vmatpush1.bf16.msra.mxu0 0
      %2753 = vmatprep.subr.bf16.mxu0 0
      %2754 = vmatpush1.bf16.msra.mxu0 0
      %2755 = vmatprep.mubr.bf16.mxu0 0
      %2756 = vmatmul.mubr.bf16.gmra.mrb[0].mxu0 %v2721
      %v2757 = vpop.f32.mrb[0].mxu0
      %v2758 = vadd.f32 %v2377, %v2757
      %v2759 = vpop.f32.mrb[0].mxu0
      %v2760 = vpop.f32.mrb[0].mxu0
      %v2761 = vadd.f32 %v2378, %v2760
      %v2762 = vpop.f32.mrb[0].mxu0
      %2763 = vdwg.mxu0
      %s2764 = scalar_lea.vmem %s16, 1
      %v2765 = vld [vmem:[%s2764] sm:$0x1]
      %s2766 = scalar_lea.vmem %s17, 1
      %v2767 = vld [vmem:[%s2766] sm:$0x1]
      %v2768 = vsel %vm787, %v2758, 0.0
      %2769 = vadd.xlane.f32.xlu0 %v2768
      %v2770 = vpop.xlane.xlu0 %2769
      %v2771 = vsel %vm787, %v2761, 0.0
      %2772 = vadd.xlane.f32.xlu0 %v2771
      %v2773 = vpop.xlane.xlu0 %2772
      %v2774 = vmul.f32 %v2770, %v794
      %v2775 = vmul.f32 %v2773, %v794
      %v2776 = vsub.f32 %v2758, %v2774
      %v2777 = vsub.f32 %v2761, %v2775
      %v2778 = vmul.f32 %v2776, %v2776
      %v2779 = vmul.f32 %v2777, %v2777
      %v2780 = vsel %vm787, %v2778, 0.0
      %2781 = vadd.xlane.f32.xlu0 %v2780
      %v2782 = vpop.xlane.xlu0 %2781
      %v2783 = vsel %vm787, %v2779, 0.0
      %2784 = vadd.xlane.f32.xlu0 %v2783
      %v2785 = vpop.xlane.xlu0 %2784
      %v2786 = vmul.f32 %v2782, %v794
      %v2787 = vmul.f32 %v2785, %v794
      %v2788 = vadd.f32 %v2786, 1e-06
      %v2789 = vadd.f32 %v2787, 1e-06
      %v2790 = vrsqrt.pop %v2788
      %v2791 = vrsqrt.pop %v2789
      %v2792 = vmul.f32 %v2776, %v2790
      %v2793 = vmul.f32 %v2777, %v2791
      %v2795 = vlaneseq
      %v2796 = vshrl.u32 %v2795, 7
      %v2797 = vsub.s32 0, %v2796
      %v2798 = vrot.slane %v2765, %v2797
      %v2800 = vmul.f32 %v2792, %v2798
      %v2801 = vmul.f32 %v2793, %v2798
      %v2803 = vlaneseq
      %v2804 = vshrl.u32 %v2803, 7
      %v2805 = vsub.s32 0, %v2804
      %v2806 = vrot.slane %v2767, %v2805
      %v2808 = vadd.f32 %v2800, %v2806
      %v2809 = vadd.f32 %v2801, %v2806
      %v2810 = vpack.c.bf16 %v2809, %v2808
      %s2811 = scalar_lea.vmem %s18, 16
      %v2812 = vld [vmem:[%s2811] sm:$0xf]
      %v2813 = vld [vmem:[%s2811 + $0x4] sm:$0xf]
      %v2814 = vld [vmem:[%s2811 + $0x8] sm:$0xf]
      %v2815 = vld [vmem:[%s2811 + $0xc] sm:$0xf]
      %s2816 = scalar_lea.vmem %s19, 1
      %v2817 = vld [vmem:[%s2816] sm:$0x1]
      %v2819 = vlaneseq
      %v2820 = vshrl.u32 %v2819, 7
      %v2821 = vsub.s32 0, %v2820
      %v2822 = vrot.slane %v2817, %v2821
      %v2828 = vunpack.c.l.b16 %v2812
      %v2829 = vunpack.c.l.b16 %v2813
      %v2830 = vunpack.c.l.b16 %v2814
      %v2831 = vunpack.c.l.b16 %v2815
      %v2832 = vpack.c.b16 %v2829, %v2828
      %v2833 = vpack.c.b16 %v2831, %v2830
      %v2837 = vsel %vm787, %v2810, 0
      %2839 = vmatprep.subr.bf16.mxu0 0
      %2840 = vmatpush1.bf16.msra.mxu0 %v2832
      %2841 = vmatprep.subr.bf16.mxu0 0
      %2842 = vmatpush1.bf16.msra.mxu0 %v2833
      %2843 = vmatprep.subr.bf16.mxu0 0
      %2844 = vmatpush1.bf16.msra.mxu0 0
      %2845 = vmatprep.subr.bf16.mxu0 0
      %2846 = vmatpush1.bf16.msra.mxu0 0
      %2847 = vmatprep.subr.bf16.mxu0 0
      %2848 = vmatpush1.bf16.msra.mxu0 0
      %2849 = vmatprep.subr.bf16.mxu0 0
      %2850 = vmatpush1.bf16.msra.mxu0 0
      %2851 = vmatprep.subr.bf16.mxu0 0
      %2852 = vmatpush1.bf16.msra.mxu0 0
      %2853 = vmatprep.subr.bf16.mxu0 0
      %2854 = vmatpush1.bf16.msra.mxu0 0
      %2855 = vmatprep.subr.bf16.mxu0 0
      %2856 = vmatpush1.bf16.msra.mxu0 0
      %2857 = vmatprep.subr.bf16.mxu0 0
      %2858 = vmatpush1.bf16.msra.mxu0 0
      %2859 = vmatprep.subr.bf16.mxu0 0
      %2860 = vmatpush1.bf16.msra.mxu0 0
      %2861 = vmatprep.subr.bf16.mxu0 0
      %2862 = vmatpush1.bf16.msra.mxu0 0
      %2863 = vmatprep.subr.bf16.mxu0 0
      %2864 = vmatpush1.bf16.msra.mxu0 0
      %2865 = vmatprep.subr.bf16.mxu0 0
      %2866 = vmatpush1.bf16.msra.mxu0 0
      %2867 = vmatprep.subr.bf16.mxu0 0
      %2868 = vmatpush1.bf16.msra.mxu0 0
      %2869 = vmatprep.subr.bf16.mxu0 0
      %2870 = vmatpush1.bf16.msra.mxu0 0
      %2871 = vmatprep.mubr.bf16.mxu0 0
      %2872 = vmatmul.mubr.bf16.gmra.mrb[0].mxu0 %v2837
      %v2873 = vpop.f32.mrb[0].mxu0
      %v2874 = vadd.f32 %v2822, %v2873
      %v2875 = vpop.f32.mrb[0].mxu0
      %v2876 = vpop.f32.mrb[0].mxu0
      %v2877 = vadd.f32 %v2822, %v2876
      %v2878 = vpop.f32.mrb[0].mxu0
      %2879 = vdwg.mxu0
      %v2880 = vmax.f32 %v2874, 0.0
      %v2881 = vmax.f32 %v2877, 0.0
      %v2882 = vpack.c.bf16 %v2881, %v2880
      %s2883 = scalar_lea.vmem %s20, 32
      %v2884 = vld [vmem:[%s2883] sm:$0xf]
      %v2885 = vld [vmem:[%s2883 + $0x4] sm:$0xf]
      %v2886 = vld [vmem:[%s2883 + $0x8] sm:$0xf]
      %v2887 = vld [vmem:[%s2883 + $0xc] sm:$0xf]
      %v2888 = vld [vmem:[%s2883 + $0x10] sm:$0xf]
      %v2889 = vld [vmem:[%s2883 + $0x14] sm:$0xf]
      %v2890 = vld [vmem:[%s2883 + $0x18] sm:$0xf]
      %v2891 = vld [vmem:[%s2883 + $0x1c] sm:$0xf]
      %s2892 = scalar_lea.vmem %s21, 1
      %v2893 = vld [vmem:[%s2892] sm:$0x1]
      %v2895 = vlaneseq
      %v2896 = vshrl.u32 %v2895, 7
      %v2897 = vsub.s32 0, %v2896
      %v2898 = vrot.slane %v2893, %v2897
      %v2908 = vunpack.c.l.b16 %v2884
      %v2909 = vunpack.c.l.b16 %v2885
      %v2910 = vunpack.c.l.b16 %v2886
      %v2911 = vunpack.c.l.b16 %v2887
      %v2912 = vunpack.c.l.b16 %v2888
      %v2913 = vunpack.c.l.b16 %v2889
      %v2914 = vunpack.c.l.b16 %v2890
      %v2915 = vunpack.c.l.b16 %v2891
      %v2916 = vpack.c.b16 %v2909, %v2908
      %v2917 = vpack.c.b16 %v2911, %v2910
      %v2918 = vpack.c.b16 %v2913, %v2912
      %v2919 = vpack.c.b16 %v2915, %v2914
      %v2925 = vsel %vm1101, %v2882, 0
      %2927 = vmatprep.subr.bf16.mxu0 0
      %2928 = vmatpush1.bf16.msra.mxu0 %v2916
      %2929 = vmatprep.subr.bf16.mxu0 0
      %2930 = vmatpush1.bf16.msra.mxu0 %v2917
      %2931 = vmatprep.subr.bf16.mxu0 0
      %2932 = vmatpush1.bf16.msra.mxu0 %v2918
      %2933 = vmatprep.subr.bf16.mxu0 0
      %2934 = vmatpush1.bf16.msra.mxu0 %v2919
      %2935 = vmatprep.subr.bf16.mxu0 0
      %2936 = vmatpush1.bf16.msra.mxu0 0
      %2937 = vmatprep.subr.bf16.mxu0 0
      %2938 = vmatpush1.bf16.msra.mxu0 0
      %2939 = vmatprep.subr.bf16.mxu0 0
      %2940 = vmatpush1.bf16.msra.mxu0 0
      %2941 = vmatprep.subr.bf16.mxu0 0
      %2942 = vmatpush1.bf16.msra.mxu0 0
      %2943 = vmatprep.subr.bf16.mxu0 0
      %2944 = vmatpush1.bf16.msra.mxu0 0
      %2945 = vmatprep.subr.bf16.mxu0 0
      %2946 = vmatpush1.bf16.msra.mxu0 0
      %2947 = vmatprep.subr.bf16.mxu0 0
      %2948 = vmatpush1.bf16.msra.mxu0 0
      %2949 = vmatprep.subr.bf16.mxu0 0
      %2950 = vmatpush1.bf16.msra.mxu0 0
      %2951 = vmatprep.subr.bf16.mxu0 0
      %2952 = vmatpush1.bf16.msra.mxu0 0
      %2953 = vmatprep.subr.bf16.mxu0 0
      %2954 = vmatpush1.bf16.msra.mxu0 0
      %2955 = vmatprep.subr.bf16.mxu0 0
      %2956 = vmatpush1.bf16.msra.mxu0 0
      %2957 = vmatprep.subr.bf16.mxu0 0
      %2958 = vmatpush1.bf16.msra.mxu0 0
      %2959 = vmatprep.mubr.bf16.mxu0 0
      %2960 = vmatmul.mubr.bf16.gmra.mrb[0].mxu0 %v2925
      %v2961 = vpop.f32.mrb[0].mxu0
      %v2962 = vadd.f32 %v2898, %v2961
      %v2963 = vpop.f32.mrb[0].mxu0
      %v2964 = vpop.f32.mrb[0].mxu0
      %v2965 = vadd.f32 %v2898, %v2964
      %v2966 = vpop.f32.mrb[0].mxu0
      %2967 = vdwg.mxu0
      %v2968 = vadd.f32 %v2962, %v2808
      %v2969 = vadd.f32 %v2965, %v2809
      %s2970 = scalar_lea.vmem %s22, 1
      %v2971 = vld [vmem:[%s2970] sm:$0x1]
      %s2972 = scalar_lea.vmem %s23, 1
      %v2973 = vld [vmem:[%s2972] sm:$0x1]
      %v2974 = vsel %vm787, %v2968, 0.0
      %2975 = vadd.xlane.f32.xlu0 %v2974
      %v2976 = vpop.xlane.xlu0 %2975
      %v2977 = vsel %vm787, %v2969, 0.0
      %2978 = vadd.xlane.f32.xlu0 %v2977
      %v2979 = vpop.xlane.xlu0 %2978
      %v2980 = vmul.f32 %v2976, %v794
      %v2981 = vmul.f32 %v2979, %v794
      %v2982 = vsub.f32 %v2968, %v2980
      %v2983 = vsub.f32 %v2969, %v2981
      %v2984 = vmul.f32 %v2982, %v2982
      %v2985 = vmul.f32 %v2983, %v2983
      %v2986 = vsel %vm787, %v2984, 0.0
      %2987 = vadd.xlane.f32.xlu0 %v2986
      %v2988 = vpop.xlane.xlu0 %2987
      %v2989 = vsel %vm787, %v2985, 0.0
      %2990 = vadd.xlane.f32.xlu0 %v2989
      %v2991 = vpop.xlane.xlu0 %2990
      %v2992 = vmul.f32 %v2988, %v794
      %v2993 = vmul.f32 %v2991, %v794
      %v2994 = vadd.f32 %v2992, 1e-06
      %v2995 = vadd.f32 %v2993, 1e-06
      %v2996 = vrsqrt.pop %v2994
      %v2997 = vrsqrt.pop %v2995
      %v2998 = vmul.f32 %v2982, %v2996
      %v2999 = vmul.f32 %v2983, %v2997
      %v3001 = vlaneseq
      %v3002 = vshrl.u32 %v3001, 7
      %v3003 = vsub.s32 0, %v3002
      %v3004 = vrot.slane %v2971, %v3003
      %v3006 = vmul.f32 %v2998, %v3004
      %v3007 = vmul.f32 %v2999, %v3004
      %v3009 = vlaneseq
      %v3010 = vshrl.u32 %v3009, 7
      %v3011 = vsub.s32 0, %v3010
      %v3012 = vrot.slane %v2973, %v3011
      %v3014 = vadd.f32 %v3006, %v3012
      %v3015 = vadd.f32 %v3007, %v3012
      %3016 = vst.msk [vmem:[%s777] sm:$0xff] %vm787, %v3014
      %3017 = vst.msk [vmem:[%s777 + $0x8] sm:$0xff] %vm787, %v3015
      %p3018 = scmp.lt.s32.totalorder %s35, 1
      %s3019 = scalar_select %p3018, %s35, 1
      %s3020 = smul.addr %s3019, 2
      %s3021 = smul.addr %s3020, 8
      %s3022 = scalar_lea.vmem %s24, %s3021
      // Predicated region
      $region117: #{_decoder_forward_impl.1} parent=115 // pred_check
        %p3023 = pneg %p572
      $region118: #{_decoder_forward_impl.1} parent=115 // pred_check_branch
        %3025 = sbr.rel (%p3023) target = $region120
      $region119: #{_decoder_forward_impl.1} parent=115 // pred_region
        _
      $region120: #{_decoder_forward_impl.1} parent=115 // pred_fallthru
        _
    $region116: #{_decoder_forward_impl.1} parent=5 // pred_fallthru
      _
    %p3026 = scmp.le.s32.totalorder 2, %s30
    // Predicated region
    $region121: #{_decoder_forward_impl.1} parent=5 // pred_check
      %p3027 = pneg %p3026
    $region122: #{_decoder_forward_impl.1} parent=5 // pred_check_branch
      %3029 = sbr.rel (%p3027) target = $region124
    $region123: #{_decoder_forward_impl.1} parent=5 // pred_region
      %s3030 = ssub.s32 %s30, 2
      // Predicated region
      $region125: #{_decoder_forward_impl.1} parent=123 // pred_check
        %p3031 = pneg %p578
      $region126: #{_decoder_forward_impl.1} parent=123 // pred_check_branch
        %3033 = sbr.rel (%p3031) target = $region128
      $region127: #{_decoder_forward_impl.1} parent=123 // pred_region
        %p3034 = scmp.lt.s32.totalorder %s36, 1
        %s3035 = scalar_select %p3034, %s36, 1
        %s3036 = smul.addr %s3035, 2
        %s3037 = smul.addr %s3036, 8
        %s3038 = scalar_lea.vmem %s24, %s3037
      $region128: #{_decoder_forward_impl.1} parent=123 // pred_fallthru
        _
    $region124: #{_decoder_forward_impl.1} parent=5 // pred_fallthru
      _
  $region6: #{_decoder_forward_impl.1} parent=0 // loop_footer
    %s34 = sadd.s32 1, %s30
  $region7: #{_decoder_forward_impl.1} parent=0 // loop_footer_branch
    %29 = sbr.rel target = $region3
  $region8: #{_decoder_forward_impl.1} parent=0 // loop_exit
    _

</llo_original>
